<compile_context>
chip_gen: v6e
topology: v6e:2x2x1
jax: 0.10.0
libtpu: 0.0.40
codegen_flags: <defaults>
</compile_context>

<pallas_src>
import functools

import numpy as np
import jax
import jax.numpy as jnp
from jax.experimental import pallas as pl
from jax.experimental.pallas import tpu as pltpu

C_IN = 4          # UpDS.forward only type-checks when in_channels == 4
C_MID = 2         # in_channels // 2
C_OUT = 8
BN_EPS = 1e-5


# ----------------------------------------------------------------------------
# constant (shape-derived) matrices: bilinear-upsample + centre-crop
# ----------------------------------------------------------------------------
def _align_corners_matrix(n_in, n_out):
    """M (n_out, n_in) so that M @ x is 1-D bilinear resize with align_corners=True."""
    m = np.zeros((n_out, n_in), dtype=np.float64)
    if n_in == 1 or n_out == 1:
        m[:, 0] = 1.0
        return m
    for i in range(n_out):
        src = i * (n_in - 1) / (n_out - 1)
        lo = int(np.floor(src))
        hi = min(lo + 1, n_in - 1)
        f = src - lo
        m[i, lo] += 1.0 - f
        m[i, hi] += f
    return m


def _make_constants(H, W):
    # bilinear x2 upsample followed by the negative-pad (crop) of UpDS.forward,
    # folded into one (H, H) row matrix and one (W, W) column matrix.
    Ry = _align_corners_matrix(H, 2 * H)
    Rx = _align_corners_matrix(W, 2 * W)
    diffY, diffX = H - 2 * H, W - 2 * W
    pad_t, pad_b = diffY // 2, diffY - diffY // 2     # negative => crop
    pad_l, pad_r = diffX // 2, diffX - diffX // 2
    Ry_c = Ry[-pad_t: 2 * H + pad_b, :]               # (H, H)
    Rx_c = Rx[-pad_l: 2 * W + pad_r, :]               # (W, W)
    # both upsampled channels are packed along lanes -> block-diagonal column matrix
    RxT2 = np.kron(np.eye(2), Rx_c.T)                 # (2W, 2W)
    return jnp.asarray(Ry_c, jnp.float32), jnp.asarray(RxT2, jnp.float32)


# ----------------------------------------------------------------------------
# kernel helpers (operate on channel-packed (N*H, C*W) float32 tiles)
# ----------------------------------------------------------------------------
def _mm(a, b):
    # remaining matmuls are tiny (interp + 1x1 conv); HIGHEST keeps f32 accuracy
    # at negligible MXU cost.
    return jax.lax.dot(a, b, precision=jax.lax.Precision.HIGHEST,
                       preferred_element_type=jnp.float32)


def _depthwise3x3(x, wl, bl, not_top, not_bot):
    """3x3 depthwise conv, padding=1, on a channel-packed (R, C*W) tile.

    Taps are pltpu.roll shifts (XLU).  Left/right (lane) boundary zeros are already
    folded into the per-lane tap weights `wl` on the host; only the top/bottom (R,1)
    row masks (shared across layers, built once by the caller) are applied here.
    wl: (9, C*W) per-lane tap weights (row k = tap ky*3+kx);  bl: (1, C*W) bias."""
    R, L = x.shape
    rows = (
        not_top * pltpu.roll(x, 1, axis=0),           # ky=0: reads row r-1
        x,                                            # ky=1: reads row r
        not_bot * pltpu.roll(x, R - 1, axis=0),       # ky=2: reads row r+1
    )
    acc = wl[4:5, :] * x + bl                         # centre tap + bias (no zero init)
    for ky in range(3):
        r = rows[ky]
        acc = acc + wl[3 * ky + 0:3 * ky + 1, :] * pltpu.roll(r, 1, axis=1)       # kx=0
        if ky != 1:                                   # centre tap already accumulated
            acc = acc + wl[3 * ky + 1:3 * ky + 2, :] * r                          # kx=1
        acc = acc + wl[3 * ky + 2:3 * ky + 3, :] * pltpu.roll(r, L - 1, axis=1)   # kx=2
    return acc


def _bn_relu(x, gamma, beta, *, W, inv_n):
    """Train-mode BatchNorm (biased batch stats over N,H,W) + ReLU, fused.

    One sum / sum-of-squares pass, per-channel stats folded into a per-lane
    scale & shift, then a single FMA + ReLU pass over the packed tile."""
    R, L = x.shape
    C = L // W
    colsum = jnp.sum(x, axis=0, keepdims=True)        # (1, L)
    colsq = jnp.sum(x * x, axis=0, keepdims=True)     # (1, L)
    scales, shifts = [], []
    for c in range(C):
        s = jnp.sum(colsum[:, c * W:(c + 1) * W], axis=1, keepdims=True)    # (1, 1)
        ss = jnp.sum(colsq[:, c * W:(c + 1) * W], axis=1, keepdims=True)    # (1, 1)
        mu = s * inv_n
        var = ss * inv_n - mu * mu
        sc = gamma[:, c:c + 1] * jax.lax.rsqrt(var + BN_EPS)
        sh = beta[:, c:c + 1] - mu * sc
        scales.append(jnp.broadcast_to(sc, (1, W)))
        shifts.append(jnp.broadcast_to(sh, (1, W)))
    scale = jnp.concatenate(scales, axis=1)           # (1, L)
    shift = jnp.concatenate(shifts, axis=1)           # (1, L)
    return jnp.maximum(x * scale + shift, 0.0)


# ----------------------------------------------------------------------------
# Pallas kernel: whole UpDS forward for the (small) batch in one invocation
# ----------------------------------------------------------------------------
def upds_kernel(xk_ref, ry_ref, rxt2_ref,
                dw1w_ref, dw1b_ref, pw1_ref, pw1b_ref, bn1g_ref, bn1b_ref,
                dw2w_ref, dw2b_ref, pw2_ref, pw2b_ref, bn2g_ref, bn2b_ref,
                out_ref, *, N, H, W):
    xk = xk_ref[...]                        # (N*H, 4W), packed [x2_0, x2_1, x1_0, x1_1]
    x2p = xk[:, :2 * W]                     # pass-through channels (orig 2, 3)
    x1p = xk[:, 2 * W:]                     # channels to upsample  (orig 0, 1)

    # bilinear x2 upsample + centre crop: per-image (H,H) row matmul, then a
    # (2W,2W) block-diagonal column matmul (both packed channels at once).
    ry = ry_ref[...]
    rxt2 = rxt2_ref[...]
    ups = [_mm(_mm(ry, x1p[n * H:(n + 1) * H, :]), rxt2) for n in range(N)]
    x1u = jnp.concatenate(ups, axis=0) if N > 1 else ups[0]      # (N*H, 2W)

    h = jnp.concatenate([x2p, x1u], axis=1)                      # (N*H, 4W)

    # row (top/bottom) boundary masks: built once, shared by both depthwise layers
    R = N * H
    h_id = jax.lax.broadcasted_iota(jnp.int32, (R, 1), 0) % H    # row inside image
    not_top = jnp.where(h_id == 0, 0.0, 1.0)                     # tap r-1 invalid at h==0
    not_bot = jnp.where(h_id == H - 1, 0.0, 1.0)                 # tap r+1 invalid at h==H-1

    inv_n = 1.0 / float(N * H * W)
    # DS-conv block 1: depthwise 3x3 (groups=4) -> pointwise 4->2 -> BN -> ReLU
    h = _depthwise3x3(h, dw1w_ref[...], dw1b_ref[...], not_top, not_bot)
    h = _mm(h, pw1_ref[...]) + pw1b_ref[...]                     # (N*H, 2W)
    h = _bn_relu(h, bn1g_ref[...], bn1b_ref[...], W=W, inv_n=inv_n)
    # DS-conv block 2: depthwise 3x3 (groups=2) -> pointwise 2->8 -> BN -> ReLU
    h = _depthwise3x3(h, dw2w_ref[...], dw2b_ref[...], not_top, not_bot)
    h = _mm(h, pw2_ref[...]) + pw2b_ref[...]                     # (N*H, 8W)
    h = _bn_relu(h, bn2g_ref[...], bn2b_ref[...], W=W, inv_n=inv_n)

    out_ref[...] = h                        # single lane-dense store (8W >= 128 lanes)


def upds_forward(x, params):
    """x: (N, 4, H, W) float32 NCHW  ->  (N, 8, H, W) float32 NCHW."""
    N, C, H, W = x.shape
    assert C == C_IN
    Ry, RxT2 = _make_constants(H, W)

    # channel-packed kernel layout: rows = n*H + h (sublanes), lanes = c*W + w, with
    # the packed channel order already matching cat([x2, upsample(x1)], dim=1).
    x_perm = jnp.concatenate([x[:, 2:4], x[:, 0:2]], axis=1)     # (N, 4, H, W)
    xk = jnp.transpose(x_perm, (0, 2, 1, 3)).reshape(N * H, C_IN * W).astype(jnp.float32)

    f32 = jnp.float32
    eye_w = jnp.eye(W, dtype=f32)

    # left/right boundary zeros folded into the depthwise tap weights (host-side, free)
    w_idx = np.arange(W)
    lane_mask_np = np.ones((9, W), np.float32)
    lane_mask_np[[0, 3, 6], :] *= (w_idx != 0).astype(np.float32)       # kx=0 taps read w-1
    lane_mask_np[[2, 5, 8], :] *= (w_idx != W - 1).astype(np.float32)   # kx=2 taps read w+1

    def dw_lane_w(w, c):    # (c,1,3,3) -> (9, c*W): per-lane masked depthwise tap weights
        taps = jnp.repeat(w.reshape(c, 9).T.astype(f32), W, axis=1)     # (9, c*W)
        mask = jnp.asarray(np.tile(lane_mask_np, (1, c)), f32)          # (9, c*W)
        return taps * mask

    def lane_b(b):          # (c,) -> (1, c*W)
        return jnp.repeat(b.astype(f32), W)[None, :]

    def pw_mat(w):          # (m,c,1,1) -> (c*W, m*W): block (kron) matrix for 1x1 conv
        m, c = w.shape[:2]
        return jnp.kron(w.reshape(m, c).T.astype(f32), eye_w)

    args = (
        xk, Ry, RxT2,
        dw_lane_w(params["dw1_w"], C_IN), lane_b(params["dw1_b"]),
        pw_mat(params["pw1_w"]), lane_b(params["pw1_b"]),
        params["bn1_g"].astype(f32)[None, :], params["bn1_b"].astype(f32)[None, :],
        dw_lane_w(params["dw2_w"], C_MID), lane_b(params["dw2_b"]),
        pw_mat(params["pw2_w"]), lane_b(params["pw2_b"]),
        params["bn2_g"].astype(f32)[None, :], params["bn2_b"].astype(f32)[None, :],
    )

    vmem = pl.BlockSpec(memory_space=pltpu.MemorySpace.VMEM)
    out = pl.pallas_call(
        functools.partial(upds_kernel, N=N, H=H, W=W),
        out_shape=jax.ShapeDtypeStruct((N * H, C_OUT * W), jnp.float32),
        in_specs=[vmem] * len(args),
        out_specs=vmem,
    )(*args)

    return jnp.transpose(out.reshape(N, H, C_OUT, W), (0, 2, 1, 3))


# ----------------------------------------------------------------------------
# plain-JAX reference (mirrors the PyTorch forward) for a correctness check
# ----------------------------------------------------------------------------
def _conv2d(x, w, b, padding, groups):
    y = jax.lax.conv_general_dilated(
        x, w, window_strides=(1, 1),
        padding=[(padding, padding), (padding, padding)],
        dimension_numbers=("NCHW", "OIHW", "NCHW"),
        feature_group_count=groups,
        precision=jax.lax.Precision.HIGHEST)
    return y + b[None, :, None, None]


def _bn_relu_ref(x, g, b):
    mu = jnp.mean(x, axis=(0, 2, 3), keepdims=True)
    var = jnp.mean((x - mu) ** 2, axis=(0, 2, 3), keepdims=True)
    y = (x - mu) * jax.lax.rsqrt(var + BN_EPS)
    y = y * g[None, :, None, None] + b[None, :, None, None]
    return jnp.maximum(y, 0.0)


def _upsample_bilinear_align_corners_x2(x):
    N, C, H, W = x.shape

    def coords(n_in, n_out):
        i = np.arange(n_out)
        src = i * (n_in - 1) / (n_out - 1)
        lo = np.floor(src).astype(np.int32)
        hi = np.minimum(lo + 1, n_in - 1)
        f = (src - lo).astype(np.float32)
        return jnp.asarray(lo), jnp.asarray(hi), jnp.asarray(f)

    ylo, yhi, fy = coords(H, 2 * H)
    xlo, xhi, fx = coords(W, 2 * W)
    r = (x[:, :, ylo, :] * (1 - fy)[None, None, :, None]
         + x[:, :, yhi, :] * fy[None, None, :, None])
    return (r[:, :, :, xlo] * (1 - fx)[None, None, None, :]
            + r[:, :, :, xhi] * fx[None, None, None, :])


def upds_reference(x, params):
    x1, x2 = x[:, 0:2], x[:, 2:4]
    x1 = _upsample_bilinear_align_corners_x2(x1)
    diffY = x2.shape[2] - x1.shape[2]
    diffX = x2.shape[3] - x1.shape[3]
    pad_t, pad_b = diffY // 2, diffY - diffY // 2
    pad_l, pad_r = diffX // 2, diffX - diffX // 2
    x1 = x1[:, :, -pad_t: x1.shape[2] + pad_b, -pad_l: x1.shape[3] + pad_r]  # negative pads crop
    h = jnp.concatenate([x2, x1], axis=1)
    h = _conv2d(h, params["dw1_w"], params["dw1_b"], 1, C_IN)
    h = _conv2d(h, params["pw1_w"], params["pw1_b"], 0, 1)
    h = _bn_relu_ref(h, params["bn1_g"], params["bn1_b"])
    h = _conv2d(h, params["dw2_w"], params["dw2_b"], 1, C_MID)
    h = _conv2d(h, params["pw2_w"], params["pw2_b"], 0, 1)
    h = _bn_relu_ref(h, params["bn2_g"], params["bn2_b"])
    return h


if __name__ == "__main__":
    N, H, W = 2, 16, 16
    key = jax.random.PRNGKey(0)
    ks = jax.random.split(key, 16)
    x = jax.random.normal(ks[0], (N, C_IN, H, W), jnp.float32)

    # deterministic synthetic parameters (PyTorch shapes):
    params = {
        "dw1_w": 0.4 * jax.random.normal(ks[1], (C_IN, 1, 3, 3), jnp.float32),
        "dw1_b": 0.1 * jax.random.normal(ks[2], (C_IN,), jnp.float32),
        "pw1_w": 0.4 * jax.random.normal(ks[3], (C_MID, C_IN, 1, 1), jnp.float32),
        "pw1_b": 0.1 * jax.random.normal(ks[4], (C_MID,), jnp.float32),
        "bn1_g": 1.0 + 0.1 * jax.random.normal(ks[5], (C_MID,), jnp.float32),
        "bn1_b": 0.1 * jax.random.normal(ks[6], (C_MID,), jnp.float32),
        "dw2_w": 0.4 * jax.random.normal(ks[7], (C_MID, 1, 3, 3), jnp.float32),
        "dw2_b": 0.1 * jax.random.normal(ks[8], (C_MID,), jnp.float32),
        "pw2_w": 0.4 * jax.random.normal(ks[9], (C_OUT, C_MID, 1, 1), jnp.float32),
        "pw2_b": 0.1 * jax.random.normal(ks[10], (C_OUT,), jnp.float32),
        "bn2_g": 1.0 + 0.1 * jax.random.normal(ks[11], (C_OUT,), jnp.float32),
        "bn2_b": 0.1 * jax.random.normal(ks[12], (C_OUT,), jnp.float32),
    }

    out = jax.block_until_ready(upds_forward(x, params))
    ref = jax.block_until_ready(upds_reference(x, params))

    assert out.shape == (N, C_OUT, H, W), out.shape
    max_err = float(jnp.max(jnp.abs(out - ref)))
    assert max_err < 1e-3, f"max abs error vs reference: {max_err}"
    print("KERNEL_OK")
</pallas_src>

<mosaic_0001>
module attributes {stable_mosaic.version = 11 : i64} {
  func.func @upds_kernel(%arg0: memref<32x64xf32, #tpu.memory_space<vmem>>, %arg1: memref<16x16xf32, #tpu.memory_space<vmem>>, %arg2: memref<32x32xf32, #tpu.memory_space<vmem>>, %arg3: memref<9x64xf32, #tpu.memory_space<vmem>>, %arg4: memref<1x64xf32, #tpu.memory_space<vmem>>, %arg5: memref<64x32xf32, #tpu.memory_space<vmem>>, %arg6: memref<1x32xf32, #tpu.memory_space<vmem>>, %arg7: memref<1x2xf32, #tpu.memory_space<vmem>>, %arg8: memref<1x2xf32, #tpu.memory_space<vmem>>, %arg9: memref<9x32xf32, #tpu.memory_space<vmem>>, %arg10: memref<1x32xf32, #tpu.memory_space<vmem>>, %arg11: memref<32x128xf32, #tpu.memory_space<vmem>>, %arg12: memref<1x128xf32, #tpu.memory_space<vmem>>, %arg13: memref<1x8xf32, #tpu.memory_space<vmem>>, %arg14: memref<1x8xf32, #tpu.memory_space<vmem>>, %arg15: memref<32x128xf32, #tpu.memory_space<vmem>>) attributes {dimension_semantics = [], scalar_prefetch = 0 : i64, scratch_operands = 0 : i64, tpu.core_type = #tpu.core_type<tc>} {
    %c0 = arith.constant 0 : index
    %c0_0 = arith.constant 0 : index
    %0 = vector.load %arg0[%c0, %c0_0] : memref<32x64xf32, #tpu.memory_space<vmem>>, vector<32x64xf32>
    %1 = vector.extract_strided_slice %0 {offsets = [0, 0], sizes = [32, 32], strides = [1, 1]} : vector<32x64xf32> to vector<32x32xf32>
    %2 = vector.extract_strided_slice %0 {offsets = [0, 32], sizes = [32, 32], strides = [1, 1]} : vector<32x64xf32> to vector<32x32xf32>
    %c0_1 = arith.constant 0 : index
    %c0_2 = arith.constant 0 : index
    %3 = vector.load %arg1[%c0_1, %c0_2] : memref<16x16xf32, #tpu.memory_space<vmem>>, vector<16x16xf32>
    %c0_3 = arith.constant 0 : index
    %c0_4 = arith.constant 0 : index
    %4 = vector.load %arg2[%c0_3, %c0_4] : memref<32x32xf32, #tpu.memory_space<vmem>>, vector<32x32xf32>
    %5 = vector.extract_strided_slice %2 {offsets = [0, 0], sizes = [16, 32], strides = [1, 1]} : vector<32x32xf32> to vector<16x32xf32>
    %cst = arith.constant dense<0.000000e+00> : vector<16x32xf32>
    %6 = tpu.matmul %3, %5, %cst {dimension_numbers = #tpu.dot_dimension_numbers<[1], [0], [0], [1], [0, 0, 1, 1], [], []>, precision = #tpu.contract_precision<fp32>} : vector<16x16xf32>, vector<16x32xf32>, vector<16x32xf32> -> vector<16x32xf32>
    %cst_5 = arith.constant dense<0.000000e+00> : vector<16x32xf32>
    %7 = tpu.matmul %6, %4, %cst_5 {dimension_numbers = #tpu.dot_dimension_numbers<[1], [0], [0], [1], [0, 0, 1, 1], [], []>, precision = #tpu.contract_precision<fp32>} : vector<16x32xf32>, vector<32x32xf32>, vector<16x32xf32> -> vector<16x32xf32>
    %8 = vector.extract_strided_slice %2 {offsets = [16, 0], sizes = [16, 32], strides = [1, 1]} : vector<32x32xf32> to vector<16x32xf32>
    %cst_6 = arith.constant dense<0.000000e+00> : vector<16x32xf32>
    %9 = tpu.matmul %3, %8, %cst_6 {dimension_numbers = #tpu.dot_dimension_numbers<[1], [0], [0], [1], [0, 0, 1, 1], [], []>, precision = #tpu.contract_precision<fp32>} : vector<16x16xf32>, vector<16x32xf32>, vector<16x32xf32> -> vector<16x32xf32>
    %cst_7 = arith.constant dense<0.000000e+00> : vector<16x32xf32>
    %10 = tpu.matmul %9, %4, %cst_7 {dimension_numbers = #tpu.dot_dimension_numbers<[1], [0], [0], [1], [0, 0, 1, 1], [], []>, precision = #tpu.contract_precision<fp32>} : vector<16x32xf32>, vector<32x32xf32>, vector<16x32xf32> -> vector<16x32xf32>
    %11 = tpu.concatenate %7, %10 in 0 : vector<16x32xf32>, vector<16x32xf32> -> vector<32x32xf32>
    %12 = tpu.concatenate %1, %11 in 1 : vector<32x32xf32>, vector<32x32xf32> -> vector<32x64xf32>
    %13 = tpu.iota {dimensions = array<i32: 0>} : vector<32x1xi32>
    %c16_i32 = arith.constant 16 : i32
    %c0_i32 = arith.constant 0 : i32
    %14 = arith.cmpi eq, %c16_i32, %c0_i32 : i32
    %c1_i32 = arith.constant 1 : i32
    %15 = arith.select %14, %c1_i32, %c16_i32 : i32
    %16 = vector.broadcast %15 : i32 to vector<32x1xi32>
    %17 = arith.remsi %13, %16 : vector<32x1xi32>
    %c0_i32_8 = arith.constant 0 : i32
    %18 = vector.broadcast %c0_i32_8 : i32 to vector<32x1xi32>
    %19 = arith.cmpi ne, %17, %18 : vector<32x1xi32>
    %c0_i32_9 = arith.constant 0 : i32
    %20 = vector.broadcast %c0_i32_9 : i32 to vector<32x1xi32>
    %21 = arith.cmpi slt, %17, %20 : vector<32x1xi32>
    %c0_i32_10 = arith.constant 0 : i32
    %22 = arith.cmpi slt, %15, %c0_i32_10 : i32
    %23 = vector.broadcast %22 : i1 to vector<32x1xi1>
    %24 = vector.broadcast %23 : vector<32x1xi1> to vector<32x1xi1>
    %25 = arith.xori %21, %24 : vector<32x1xi1>
    %26 = arith.andi %25, %19 : vector<32x1xi1>
    %27 = vector.broadcast %15 : i32 to vector<32x1xi32>
    %28 = arith.addi %17, %27 : vector<32x1xi32>
    %29 = arith.select %26, %28, %17 : vector<32x1xi1>, vector<32x1xi32>
    %c0_i32_11 = arith.constant 0 : i32
    %30 = vector.broadcast %c0_i32_11 : i32 to vector<32x1xi32>
    %31 = arith.cmpi eq, %29, %30 : vector<32x1xi32>
    %cst_12 = arith.constant 0.000000e+00 : f32
    %cst_13 = arith.constant 1.000000e+00 : f32
    %32 = vector.broadcast %cst_12 : f32 to vector<32x1xf32>
    %33 = vector.broadcast %cst_13 : f32 to vector<32x1xf32>
    %34 = arith.select %31, %32, %33 : vector<32x1xi1>, vector<32x1xf32>
    %c15_i32 = arith.constant 15 : i32
    %35 = vector.broadcast %c15_i32 : i32 to vector<32x1xi32>
    %36 = arith.cmpi eq, %29, %35 : vector<32x1xi32>
    %cst_14 = arith.constant 0.000000e+00 : f32
    %cst_15 = arith.constant 1.000000e+00 : f32
    %37 = vector.broadcast %cst_14 : f32 to vector<32x1xf32>
    %38 = vector.broadcast %cst_15 : f32 to vector<32x1xf32>
    %39 = arith.select %36, %37, %38 : vector<32x1xi1>, vector<32x1xf32>
    %c0_16 = arith.constant 0 : index
    %c0_17 = arith.constant 0 : index
    %40 = vector.load %arg3[%c0_16, %c0_17] : memref<9x64xf32, #tpu.memory_space<vmem>>, vector<9x64xf32>
    %c0_18 = arith.constant 0 : index
    %c0_19 = arith.constant 0 : index
    %41 = vector.load %arg4[%c0_18, %c0_19] : memref<1x64xf32, #tpu.memory_space<vmem>>, vector<1x64xf32>
    %c1_i32_20 = arith.constant 1 : i32
    %42 = tpu.dynamic_rotate %12 by %c1_i32_20 dim 0 : vector<32x64xf32>, i32 -> vector<32x64xf32>
    %43 = vector.broadcast %34 : vector<32x1xf32> to vector<32x64xf32>
    %44 = arith.mulf %43, %42 : vector<32x64xf32>
    %c31_i32 = arith.constant 31 : i32
    %45 = tpu.dynamic_rotate %12 by %c31_i32 dim 0 : vector<32x64xf32>, i32 -> vector<32x64xf32>
    %46 = vector.broadcast %39 : vector<32x1xf32> to vector<32x64xf32>
    %47 = arith.mulf %46, %45 : vector<32x64xf32>
    %48 = vector.extract_strided_slice %40 {offsets = [4, 0], sizes = [1, 64], strides = [1, 1]} : vector<9x64xf32> to vector<1x64xf32>
    %49 = vector.broadcast %48 : vector<1x64xf32> to vector<32x64xf32>
    %50 = arith.mulf %49, %12 : vector<32x64xf32>
    %51 = vector.broadcast %41 : vector<1x64xf32> to vector<32x64xf32>
    %52 = arith.addf %50, %51 : vector<32x64xf32>
    %53 = vector.extract_strided_slice %40 {offsets = [0, 0], sizes = [1, 64], strides = [1, 1]} : vector<9x64xf32> to vector<1x64xf32>
    %c1_i32_21 = arith.constant 1 : i32
    %54 = tpu.dynamic_rotate %44 by %c1_i32_21 dim 1 : vector<32x64xf32>, i32 -> vector<32x64xf32>
    %55 = vector.broadcast %53 : vector<1x64xf32> to vector<32x64xf32>
    %56 = arith.mulf %55, %54 : vector<32x64xf32>
    %57 = arith.addf %52, %56 : vector<32x64xf32>
    %58 = vector.extract_strided_slice %40 {offsets = [1, 0], sizes = [1, 64], strides = [1, 1]} : vector<9x64xf32> to vector<1x64xf32>
    %59 = vector.broadcast %58 : vector<1x64xf32> to vector<32x64xf32>
    %60 = arith.mulf %59, %44 : vector<32x64xf32>
    %61 = arith.addf %57, %60 : vector<32x64xf32>
    %62 = vector.extract_strided_slice %40 {offsets = [2, 0], sizes = [1, 64], strides = [1, 1]} : vector<9x64xf32> to vector<1x64xf32>
    %c63_i32 = arith.constant 63 : i32
    %63 = tpu.dynamic_rotate %44 by %c63_i32 dim 1 : vector<32x64xf32>, i32 -> vector<32x64xf32>
    %64 = vector.broadcast %62 : vector<1x64xf32> to vector<32x64xf32>
    %65 = arith.mulf %64, %63 : vector<32x64xf32>
    %66 = arith.addf %61, %65 : vector<32x64xf32>
    %67 = vector.extract_strided_slice %40 {offsets = [3, 0], sizes = [1, 64], strides = [1, 1]} : vector<9x64xf32> to vector<1x64xf32>
    %c1_i32_22 = arith.constant 1 : i32
    %68 = tpu.dynamic_rotate %12 by %c1_i32_22 dim 1 : vector<32x64xf32>, i32 -> vector<32x64xf32>
    %69 = vector.broadcast %67 : vector<1x64xf32> to vector<32x64xf32>
    %70 = arith.mulf %69, %68 : vector<32x64xf32>
    %71 = arith.addf %66, %70 : vector<32x64xf32>
    %72 = vector.extract_strided_slice %40 {offsets = [5, 0], sizes = [1, 64], strides = [1, 1]} : vector<9x64xf32> to vector<1x64xf32>
    %c63_i32_23 = arith.constant 63 : i32
    %73 = tpu.dynamic_rotate %12 by %c63_i32_23 dim 1 : vector<32x64xf32>, i32 -> vector<32x64xf32>
    %74 = vector.broadcast %72 : vector<1x64xf32> to vector<32x64xf32>
    %75 = arith.mulf %74, %73 : vector<32x64xf32>
    %76 = arith.addf %71, %75 : vector<32x64xf32>
    %77 = vector.extract_strided_slice %40 {offsets = [6, 0], sizes = [1, 64], strides = [1, 1]} : vector<9x64xf32> to vector<1x64xf32>
    %c1_i32_24 = arith.constant 1 : i32
    %78 = tpu.dynamic_rotate %47 by %c1_i32_24 dim 1 : vector<32x64xf32>, i32 -> vector<32x64xf32>
    %79 = vector.broadcast %77 : vector<1x64xf32> to vector<32x64xf32>
    %80 = arith.mulf %79, %78 : vector<32x64xf32>
    %81 = arith.addf %76, %80 : vector<32x64xf32>
    %82 = vector.extract_strided_slice %40 {offsets = [7, 0], sizes = [1, 64], strides = [1, 1]} : vector<9x64xf32> to vector<1x64xf32>
    %83 = vector.broadcast %82 : vector<1x64xf32> to vector<32x64xf32>
    %84 = arith.mulf %83, %47 : vector<32x64xf32>
    %85 = arith.addf %81, %84 : vector<32x64xf32>
    %86 = vector.extract_strided_slice %40 {offsets = [8, 0], sizes = [1, 64], strides = [1, 1]} : vector<9x64xf32> to vector<1x64xf32>
    %c63_i32_25 = arith.constant 63 : i32
    %87 = tpu.dynamic_rotate %47 by %c63_i32_25 dim 1 : vector<32x64xf32>, i32 -> vector<32x64xf32>
    %88 = vector.broadcast %86 : vector<1x64xf32> to vector<32x64xf32>
    %89 = arith.mulf %88, %87 : vector<32x64xf32>
    %90 = arith.addf %85, %89 : vector<32x64xf32>
    %c0_26 = arith.constant 0 : index
    %c0_27 = arith.constant 0 : index
    %91 = vector.load %arg5[%c0_26, %c0_27] : memref<64x32xf32, #tpu.memory_space<vmem>>, vector<64x32xf32>
    %cst_28 = arith.constant dense<0.000000e+00> : vector<32x32xf32>
    %92 = tpu.matmul %90, %91, %cst_28 {dimension_numbers = #tpu.dot_dimension_numbers<[1], [0], [0], [1], [0, 0, 1, 1], [], []>, precision = #tpu.contract_precision<fp32>} : vector<32x64xf32>, vector<64x32xf32>, vector<32x32xf32> -> vector<32x32xf32>
    %c0_29 = arith.constant 0 : index
    %c0_30 = arith.constant 0 : index
    %93 = vector.load %arg6[%c0_29, %c0_30] : memref<1x32xf32, #tpu.memory_space<vmem>>, vector<1x32xf32>
    %94 = vector.broadcast %93 : vector<1x32xf32> to vector<32x32xf32>
    %95 = arith.addf %92, %94 : vector<32x32xf32>
    %c0_31 = arith.constant 0 : index
    %c0_32 = arith.constant 0 : index
    %96 = vector.load %arg7[%c0_31, %c0_32] : memref<1x2xf32, #tpu.memory_space<vmem>>, vector<1x2xf32>
    %c0_33 = arith.constant 0 : index
    %c0_34 = arith.constant 0 : index
    %97 = vector.load %arg8[%c0_33, %c0_34] : memref<1x2xf32, #tpu.memory_space<vmem>>, vector<1x2xf32>
    %cst_35 = arith.constant dense<0.000000e+00> : vector<32xf32>
    %98 = vector.multi_reduction <add>, %95, %cst_35 [0] : vector<32x32xf32> to vector<32xf32>
    %99 = vector.shape_cast %98 : vector<32xf32> to vector<1x32xf32>
    %100 = arith.mulf %95, %95 : vector<32x32xf32>
    %cst_36 = arith.constant dense<0.000000e+00> : vector<32xf32>
    %101 = vector.multi_reduction <add>, %100, %cst_36 [0] : vector<32x32xf32> to vector<32xf32>
    %102 = vector.shape_cast %101 : vector<32xf32> to vector<1x32xf32>
    %103 = vector.extract_strided_slice %99 {offsets = [0, 0], sizes = [1, 16], strides = [1, 1]} : vector<1x32xf32> to vector<1x16xf32>
    %cst_37 = arith.constant dense<0.000000e+00> : vector<1xf32>
    %104 = vector.multi_reduction <add>, %103, %cst_37 [1] : vector<1x16xf32> to vector<1xf32>
    %105 = vector.shape_cast %104 : vector<1xf32> to vector<1x1xf32>
    %106 = vector.extract_strided_slice %102 {offsets = [0, 0], sizes = [1, 16], strides = [1, 1]} : vector<1x32xf32> to vector<1x16xf32>
    %cst_38 = arith.constant dense<0.000000e+00> : vector<1xf32>
    %107 = vector.multi_reduction <add>, %106, %cst_38 [1] : vector<1x16xf32> to vector<1xf32>
    %108 = vector.shape_cast %107 : vector<1xf32> to vector<1x1xf32>
    %cst_39 = arith.constant 0.001953125 : f32
    %109 = vector.broadcast %cst_39 : f32 to vector<1x1xf32>
    %110 = arith.mulf %105, %109 : vector<1x1xf32>
    %cst_40 = arith.constant 0.001953125 : f32
    %111 = vector.broadcast %cst_40 : f32 to vector<1x1xf32>
    %112 = arith.mulf %108, %111 : vector<1x1xf32>
    %113 = arith.mulf %110, %110 : vector<1x1xf32>
    %114 = arith.subf %112, %113 : vector<1x1xf32>
    %115 = vector.extract_strided_slice %96 {offsets = [0, 0], sizes = [1, 1], strides = [1, 1]} : vector<1x2xf32> to vector<1x1xf32>
    %cst_41 = arith.constant 9.99999974E-6 : f32
    %116 = vector.broadcast %cst_41 : f32 to vector<1x1xf32>
    %117 = arith.addf %114, %116 : vector<1x1xf32>
    %118 = math.rsqrt %117 : vector<1x1xf32>
    %119 = arith.mulf %115, %118 : vector<1x1xf32>
    %120 = vector.extract_strided_slice %97 {offsets = [0, 0], sizes = [1, 1], strides = [1, 1]} : vector<1x2xf32> to vector<1x1xf32>
    %121 = arith.mulf %110, %119 : vector<1x1xf32>
    %122 = arith.subf %120, %121 : vector<1x1xf32>
    %123 = vector.shape_cast %119 : vector<1x1xf32> to vector<1x1xf32>
    %124 = vector.broadcast %123 : vector<1x1xf32> to vector<1x16xf32>
    %125 = vector.shape_cast %122 : vector<1x1xf32> to vector<1x1xf32>
    %126 = vector.broadcast %125 : vector<1x1xf32> to vector<1x16xf32>
    %127 = vector.extract_strided_slice %99 {offsets = [0, 16], sizes = [1, 16], strides = [1, 1]} : vector<1x32xf32> to vector<1x16xf32>
    %cst_42 = arith.constant dense<0.000000e+00> : vector<1xf32>
    %128 = vector.multi_reduction <add>, %127, %cst_42 [1] : vector<1x16xf32> to vector<1xf32>
    %129 = vector.shape_cast %128 : vector<1xf32> to vector<1x1xf32>
    %130 = vector.extract_strided_slice %102 {offsets = [0, 16], sizes = [1, 16], strides = [1, 1]} : vector<1x32xf32> to vector<1x16xf32>
    %cst_43 = arith.constant dense<0.000000e+00> : vector<1xf32>
    %131 = vector.multi_reduction <add>, %130, %cst_43 [1] : vector<1x16xf32> to vector<1xf32>
    %132 = vector.shape_cast %131 : vector<1xf32> to vector<1x1xf32>
    %cst_44 = arith.constant 0.001953125 : f32
    %133 = vector.broadcast %cst_44 : f32 to vector<1x1xf32>
    %134 = arith.mulf %129, %133 : vector<1x1xf32>
    %cst_45 = arith.constant 0.001953125 : f32
    %135 = vector.broadcast %cst_45 : f32 to vector<1x1xf32>
    %136 = arith.mulf %132, %135 : vector<1x1xf32>
    %137 = arith.mulf %134, %134 : vector<1x1xf32>
    %138 = arith.subf %136, %137 : vector<1x1xf32>
    %139 = vector.extract_strided_slice %96 {offsets = [0, 1], sizes = [1, 1], strides = [1, 1]} : vector<1x2xf32> to vector<1x1xf32>
    %cst_46 = arith.constant 9.99999974E-6 : f32
    %140 = vector.broadcast %cst_46 : f32 to vector<1x1xf32>
    %141 = arith.addf %138, %140 : vector<1x1xf32>
    %142 = math.rsqrt %141 : vector<1x1xf32>
    %143 = arith.mulf %139, %142 : vector<1x1xf32>
    %144 = vector.extract_strided_slice %97 {offsets = [0, 1], sizes = [1, 1], strides = [1, 1]} : vector<1x2xf32> to vector<1x1xf32>
    %145 = arith.mulf %134, %143 : vector<1x1xf32>
    %146 = arith.subf %144, %145 : vector<1x1xf32>
    %147 = vector.shape_cast %143 : vector<1x1xf32> to vector<1x1xf32>
    %148 = vector.broadcast %147 : vector<1x1xf32> to vector<1x16xf32>
    %149 = vector.shape_cast %146 : vector<1x1xf32> to vector<1x1xf32>
    %150 = vector.broadcast %149 : vector<1x1xf32> to vector<1x16xf32>
    %151 = tpu.concatenate %124, %148 in 1 : vector<1x16xf32>, vector<1x16xf32> -> vector<1x32xf32>
    %152 = tpu.concatenate %126, %150 in 1 : vector<1x16xf32>, vector<1x16xf32> -> vector<1x32xf32>
    %153 = vector.broadcast %151 : vector<1x32xf32> to vector<32x32xf32>
    %154 = arith.mulf %95, %153 : vector<32x32xf32>
    %155 = vector.broadcast %152 : vector<1x32xf32> to vector<32x32xf32>
    %156 = arith.addf %154, %155 : vector<32x32xf32>
    %cst_47 = arith.constant 0.000000e+00 : f32
    %157 = vector.broadcast %cst_47 : f32 to vector<32x32xf32>
    %158 = arith.maximumf %156, %157 : vector<32x32xf32>
    %c0_48 = arith.constant 0 : index
    %c0_49 = arith.constant 0 : index
    %159 = vector.load %arg9[%c0_48, %c0_49] : memref<9x32xf32, #tpu.memory_space<vmem>>, vector<9x32xf32>
    %c0_50 = arith.constant 0 : index
    %c0_51 = arith.constant 0 : index
    %160 = vector.load %arg10[%c0_50, %c0_51] : memref<1x32xf32, #tpu.memory_space<vmem>>, vector<1x32xf32>
    %c1_i32_52 = arith.constant 1 : i32
    %161 = tpu.dynamic_rotate %158 by %c1_i32_52 dim 0 : vector<32x32xf32>, i32 -> vector<32x32xf32>
    %162 = vector.broadcast %34 : vector<32x1xf32> to vector<32x32xf32>
    %163 = arith.mulf %162, %161 : vector<32x32xf32>
    %c31_i32_53 = arith.constant 31 : i32
    %164 = tpu.dynamic_rotate %158 by %c31_i32_53 dim 0 : vector<32x32xf32>, i32 -> vector<32x32xf32>
    %165 = vector.broadcast %39 : vector<32x1xf32> to vector<32x32xf32>
    %166 = arith.mulf %165, %164 : vector<32x32xf32>
    %167 = vector.extract_strided_slice %159 {offsets = [4, 0], sizes = [1, 32], strides = [1, 1]} : vector<9x32xf32> to vector<1x32xf32>
    %168 = vector.broadcast %167 : vector<1x32xf32> to vector<32x32xf32>
    %169 = arith.mulf %168, %158 : vector<32x32xf32>
    %170 = vector.broadcast %160 : vector<1x32xf32> to vector<32x32xf32>
    %171 = arith.addf %169, %170 : vector<32x32xf32>
    %172 = vector.extract_strided_slice %159 {offsets = [0, 0], sizes = [1, 32], strides = [1, 1]} : vector<9x32xf32> to vector<1x32xf32>
    %c1_i32_54 = arith.constant 1 : i32
    %173 = tpu.dynamic_rotate %163 by %c1_i32_54 dim 1 : vector<32x32xf32>, i32 -> vector<32x32xf32>
    %174 = vector.broadcast %172 : vector<1x32xf32> to vector<32x32xf32>
    %175 = arith.mulf %174, %173 : vector<32x32xf32>
    %176 = arith.addf %171, %175 : vector<32x32xf32>
    %177 = vector.extract_strided_slice %159 {offsets = [1, 0], sizes = [1, 32], strides = [1, 1]} : vector<9x32xf32> to vector<1x32xf32>
    %178 = vector.broadcast %177 : vector<1x32xf32> to vector<32x32xf32>
    %179 = arith.mulf %178, %163 : vector<32x32xf32>
    %180 = arith.addf %176, %179 : vector<32x32xf32>
    %181 = vector.extract_strided_slice %159 {offsets = [2, 0], sizes = [1, 32], strides = [1, 1]} : vector<9x32xf32> to vector<1x32xf32>
    %c31_i32_55 = arith.constant 31 : i32
    %182 = tpu.dynamic_rotate %163 by %c31_i32_55 dim 1 : vector<32x32xf32>, i32 -> vector<32x32xf32>
    %183 = vector.broadcast %181 : vector<1x32xf32> to vector<32x32xf32>
    %184 = arith.mulf %183, %182 : vector<32x32xf32>
    %185 = arith.addf %180, %184 : vector<32x32xf32>
    %186 = vector.extract_strided_slice %159 {offsets = [3, 0], sizes = [1, 32], strides = [1, 1]} : vector<9x32xf32> to vector<1x32xf32>
    %c1_i32_56 = arith.constant 1 : i32
    %187 = tpu.dynamic_rotate %158 by %c1_i32_56 dim 1 : vector<32x32xf32>, i32 -> vector<32x32xf32>
    %188 = vector.broadcast %186 : vector<1x32xf32> to vector<32x32xf32>
    %189 = arith.mulf %188, %187 : vector<32x32xf32>
    %190 = arith.addf %185, %189 : vector<32x32xf32>
    %191 = vector.extract_strided_slice %159 {offsets = [5, 0], sizes = [1, 32], strides = [1, 1]} : vector<9x32xf32> to vector<1x32xf32>
    %c31_i32_57 = arith.constant 31 : i32
    %192 = tpu.dynamic_rotate %158 by %c31_i32_57 dim 1 : vector<32x32xf32>, i32 -> vector<32x32xf32>
    %193 = vector.broadcast %191 : vector<1x32xf32> to vector<32x32xf32>
    %194 = arith.mulf %193, %192 : vector<32x32xf32>
    %195 = arith.addf %190, %194 : vector<32x32xf32>
    %196 = vector.extract_strided_slice %159 {offsets = [6, 0], sizes = [1, 32], strides = [1, 1]} : vector<9x32xf32> to vector<1x32xf32>
    %c1_i32_58 = arith.constant 1 : i32
    %197 = tpu.dynamic_rotate %166 by %c1_i32_58 dim 1 : vector<32x32xf32>, i32 -> vector<32x32xf32>
    %198 = vector.broadcast %196 : vector<1x32xf32> to vector<32x32xf32>
    %199 = arith.mulf %198, %197 : vector<32x32xf32>
    %200 = arith.addf %195, %199 : vector<32x32xf32>
    %201 = vector.extract_strided_slice %159 {offsets = [7, 0], sizes = [1, 32], strides = [1, 1]} : vector<9x32xf32> to vector<1x32xf32>
    %202 = vector.broadcast %201 : vector<1x32xf32> to vector<32x32xf32>
    %203 = arith.mulf %202, %166 : vector<32x32xf32>
    %204 = arith.addf %200, %203 : vector<32x32xf32>
    %205 = vector.extract_strided_slice %159 {offsets = [8, 0], sizes = [1, 32], strides = [1, 1]} : vector<9x32xf32> to vector<1x32xf32>
    %c31_i32_59 = arith.constant 31 : i32
    %206 = tpu.dynamic_rotate %166 by %c31_i32_59 dim 1 : vector<32x32xf32>, i32 -> vector<32x32xf32>
    %207 = vector.broadcast %205 : vector<1x32xf32> to vector<32x32xf32>
    %208 = arith.mulf %207, %206 : vector<32x32xf32>
    %209 = arith.addf %204, %208 : vector<32x32xf32>
    %c0_60 = arith.constant 0 : index
    %c0_61 = arith.constant 0 : index
    %210 = vector.load %arg11[%c0_60, %c0_61] : memref<32x128xf32, #tpu.memory_space<vmem>>, vector<32x128xf32>
    %cst_62 = arith.constant dense<0.000000e+00> : vector<32x128xf32>
    %211 = tpu.matmul %209, %210, %cst_62 {dimension_numbers = #tpu.dot_dimension_numbers<[1], [0], [0], [1], [0, 0, 1, 1], [], []>, precision = #tpu.contract_precision<fp32>} : vector<32x32xf32>, vector<32x128xf32>, vector<32x128xf32> -> vector<32x128xf32>
    %c0_63 = arith.constant 0 : index
    %c0_64 = arith.constant 0 : index
    %212 = vector.load %arg12[%c0_63, %c0_64] : memref<1x128xf32, #tpu.memory_space<vmem>>, vector<1x128xf32>
    %213 = vector.broadcast %212 : vector<1x128xf32> to vector<32x128xf32>
    %214 = arith.addf %211, %213 : vector<32x128xf32>
    %c0_65 = arith.constant 0 : index
    %c0_66 = arith.constant 0 : index
    %215 = vector.load %arg13[%c0_65, %c0_66] : memref<1x8xf32, #tpu.memory_space<vmem>>, vector<1x8xf32>
    %c0_67 = arith.constant 0 : index
    %c0_68 = arith.constant 0 : index
    %216 = vector.load %arg14[%c0_67, %c0_68] : memref<1x8xf32, #tpu.memory_space<vmem>>, vector<1x8xf32>
    %cst_69 = arith.constant dense<0.000000e+00> : vector<128xf32>
    %217 = vector.multi_reduction <add>, %214, %cst_69 [0] : vector<32x128xf32> to vector<128xf32>
    %218 = vector.shape_cast %217 : vector<128xf32> to vector<1x128xf32>
    %219 = arith.mulf %214, %214 : vector<32x128xf32>
    %cst_70 = arith.constant dense<0.000000e+00> : vector<128xf32>
    %220 = vector.multi_reduction <add>, %219, %cst_70 [0] : vector<32x128xf32> to vector<128xf32>
    %221 = vector.shape_cast %220 : vector<128xf32> to vector<1x128xf32>
    %222 = vector.extract_strided_slice %218 {offsets = [0, 0], sizes = [1, 16], strides = [1, 1]} : vector<1x128xf32> to vector<1x16xf32>
    %cst_71 = arith.constant dense<0.000000e+00> : vector<1xf32>
    %223 = vector.multi_reduction <add>, %222, %cst_71 [1] : vector<1x16xf32> to vector<1xf32>
    %224 = vector.shape_cast %223 : vector<1xf32> to vector<1x1xf32>
    %225 = vector.extract_strided_slice %221 {offsets = [0, 0], sizes = [1, 16], strides = [1, 1]} : vector<1x128xf32> to vector<1x16xf32>
    %cst_72 = arith.constant dense<0.000000e+00> : vector<1xf32>
    %226 = vector.multi_reduction <add>, %225, %cst_72 [1] : vector<1x16xf32> to vector<1xf32>
    %227 = vector.shape_cast %226 : vector<1xf32> to vector<1x1xf32>
    %cst_73 = arith.constant 0.001953125 : f32
    %228 = vector.broadcast %cst_73 : f32 to vector<1x1xf32>
    %229 = arith.mulf %224, %228 : vector<1x1xf32>
    %cst_74 = arith.constant 0.001953125 : f32
    %230 = vector.broadcast %cst_74 : f32 to vector<1x1xf32>
    %231 = arith.mulf %227, %230 : vector<1x1xf32>
    %232 = arith.mulf %229, %229 : vector<1x1xf32>
    %233 = arith.subf %231, %232 : vector<1x1xf32>
    %234 = vector.extract_strided_slice %215 {offsets = [0, 0], sizes = [1, 1], strides = [1, 1]} : vector<1x8xf32> to vector<1x1xf32>
    %cst_75 = arith.constant 9.99999974E-6 : f32
    %235 = vector.broadcast %cst_75 : f32 to vector<1x1xf32>
    %236 = arith.addf %233, %235 : vector<1x1xf32>
    %237 = math.rsqrt %236 : vector<1x1xf32>
    %238 = arith.mulf %234, %237 : vector<1x1xf32>
    %239 = vector.extract_strided_slice %216 {offsets = [0, 0], sizes = [1, 1], strides = [1, 1]} : vector<1x8xf32> to vector<1x1xf32>
    %240 = arith.mulf %229, %238 : vector<1x1xf32>
    %241 = arith.subf %239, %240 : vector<1x1xf32>
    %242 = vector.shape_cast %238 : vector<1x1xf32> to vector<1x1xf32>
    %243 = vector.broadcast %242 : vector<1x1xf32> to vector<1x16xf32>
    %244 = vector.shape_cast %241 : vector<1x1xf32> to vector<1x1xf32>
    %245 = vector.broadcast %244 : vector<1x1xf32> to vector<1x16xf32>
    %246 = vector.extract_strided_slice %218 {offsets = [0, 16], sizes = [1, 16], strides = [1, 1]} : vector<1x128xf32> to vector<1x16xf32>
    %cst_76 = arith.constant dense<0.000000e+00> : vector<1xf32>
    %247 = vector.multi_reduction <add>, %246, %cst_76 [1] : vector<1x16xf32> to vector<1xf32>
    %248 = vector.shape_cast %247 : vector<1xf32> to vector<1x1xf32>
    %249 = vector.extract_strided_slice %221 {offsets = [0, 16], sizes = [1, 16], strides = [1, 1]} : vector<1x128xf32> to vector<1x16xf32>
    %cst_77 = arith.constant dense<0.000000e+00> : vector<1xf32>
    %250 = vector.multi_reduction <add>, %249, %cst_77 [1] : vector<1x16xf32> to vector<1xf32>
    %251 = vector.shape_cast %250 : vector<1xf32> to vector<1x1xf32>
    %cst_78 = arith.constant 0.001953125 : f32
    %252 = vector.broadcast %cst_78 : f32 to vector<1x1xf32>
    %253 = arith.mulf %248, %252 : vector<1x1xf32>
    %cst_79 = arith.constant 0.001953125 : f32
    %254 = vector.broadcast %cst_79 : f32 to vector<1x1xf32>
    %255 = arith.mulf %251, %254 : vector<1x1xf32>
    %256 = arith.mulf %253, %253 : vector<1x1xf32>
    %257 = arith.subf %255, %256 : vector<1x1xf32>
    %258 = vector.extract_strided_slice %215 {offsets = [0, 1], sizes = [1, 1], strides = [1, 1]} : vector<1x8xf32> to vector<1x1xf32>
    %cst_80 = arith.constant 9.99999974E-6 : f32
    %259 = vector.broadcast %cst_80 : f32 to vector<1x1xf32>
    %260 = arith.addf %257, %259 : vector<1x1xf32>
    %261 = math.rsqrt %260 : vector<1x1xf32>
    %262 = arith.mulf %258, %261 : vector<1x1xf32>
    %263 = vector.extract_strided_slice %216 {offsets = [0, 1], sizes = [1, 1], strides = [1, 1]} : vector<1x8xf32> to vector<1x1xf32>
    %264 = arith.mulf %253, %262 : vector<1x1xf32>
    %265 = arith.subf %263, %264 : vector<1x1xf32>
    %266 = vector.shape_cast %262 : vector<1x1xf32> to vector<1x1xf32>
    %267 = vector.broadcast %266 : vector<1x1xf32> to vector<1x16xf32>
    %268 = vector.shape_cast %265 : vector<1x1xf32> to vector<1x1xf32>
    %269 = vector.broadcast %268 : vector<1x1xf32> to vector<1x16xf32>
    %270 = vector.extract_strided_slice %218 {offsets = [0, 32], sizes = [1, 16], strides = [1, 1]} : vector<1x128xf32> to vector<1x16xf32>
    %cst_81 = arith.constant dense<0.000000e+00> : vector<1xf32>
    %271 = vector.multi_reduction <add>, %270, %cst_81 [1] : vector<1x16xf32> to vector<1xf32>
    %272 = vector.shape_cast %271 : vector<1xf32> to vector<1x1xf32>
    %273 = vector.extract_strided_slice %221 {offsets = [0, 32], sizes = [1, 16], strides = [1, 1]} : vector<1x128xf32> to vector<1x16xf32>
    %cst_82 = arith.constant dense<0.000000e+00> : vector<1xf32>
    %274 = vector.multi_reduction <add>, %273, %cst_82 [1] : vector<1x16xf32> to vector<1xf32>
    %275 = vector.shape_cast %274 : vector<1xf32> to vector<1x1xf32>
    %cst_83 = arith.constant 0.001953125 : f32
    %276 = vector.broadcast %cst_83 : f32 to vector<1x1xf32>
    %277 = arith.mulf %272, %276 : vector<1x1xf32>
    %cst_84 = arith.constant 0.001953125 : f32
    %278 = vector.broadcast %cst_84 : f32 to vector<1x1xf32>
    %279 = arith.mulf %275, %278 : vector<1x1xf32>
    %280 = arith.mulf %277, %277 : vector<1x1xf32>
    %281 = arith.subf %279, %280 : vector<1x1xf32>
    %282 = vector.extract_strided_slice %215 {offsets = [0, 2], sizes = [1, 1], strides = [1, 1]} : vector<1x8xf32> to vector<1x1xf32>
    %cst_85 = arith.constant 9.99999974E-6 : f32
    %283 = vector.broadcast %cst_85 : f32 to vector<1x1xf32>
    %284 = arith.addf %281, %283 : vector<1x1xf32>
    %285 = math.rsqrt %284 : vector<1x1xf32>
    %286 = arith.mulf %282, %285 : vector<1x1xf32>
    %287 = vector.extract_strided_slice %216 {offsets = [0, 2], sizes = [1, 1], strides = [1, 1]} : vector<1x8xf32> to vector<1x1xf32>
    %288 = arith.mulf %277, %286 : vector<1x1xf32>
    %289 = arith.subf %287, %288 : vector<1x1xf32>
    %290 = vector.shape_cast %286 : vector<1x1xf32> to vector<1x1xf32>
    %291 = vector.broadcast %290 : vector<1x1xf32> to vector<1x16xf32>
    %292 = vector.shape_cast %289 : vector<1x1xf32> to vector<1x1xf32>
    %293 = vector.broadcast %292 : vector<1x1xf32> to vector<1x16xf32>
    %294 = vector.extract_strided_slice %218 {offsets = [0, 48], sizes = [1, 16], strides = [1, 1]} : vector<1x128xf32> to vector<1x16xf32>
    %cst_86 = arith.constant dense<0.000000e+00> : vector<1xf32>
    %295 = vector.multi_reduction <add>, %294, %cst_86 [1] : vector<1x16xf32> to vector<1xf32>
    %296 = vector.shape_cast %295 : vector<1xf32> to vector<1x1xf32>
    %297 = vector.extract_strided_slice %221 {offsets = [0, 48], sizes = [1, 16], strides = [1, 1]} : vector<1x128xf32> to vector<1x16xf32>
    %cst_87 = arith.constant dense<0.000000e+00> : vector<1xf32>
    %298 = vector.multi_reduction <add>, %297, %cst_87 [1] : vector<1x16xf32> to vector<1xf32>
    %299 = vector.shape_cast %298 : vector<1xf32> to vector<1x1xf32>
    %cst_88 = arith.constant 0.001953125 : f32
    %300 = vector.broadcast %cst_88 : f32 to vector<1x1xf32>
    %301 = arith.mulf %296, %300 : vector<1x1xf32>
    %cst_89 = arith.constant 0.001953125 : f32
    %302 = vector.broadcast %cst_89 : f32 to vector<1x1xf32>
    %303 = arith.mulf %299, %302 : vector<1x1xf32>
    %304 = arith.mulf %301, %301 : vector<1x1xf32>
    %305 = arith.subf %303, %304 : vector<1x1xf32>
    %306 = vector.extract_strided_slice %215 {offsets = [0, 3], sizes = [1, 1], strides = [1, 1]} : vector<1x8xf32> to vector<1x1xf32>
    %cst_90 = arith.constant 9.99999974E-6 : f32
    %307 = vector.broadcast %cst_90 : f32 to vector<1x1xf32>
    %308 = arith.addf %305, %307 : vector<1x1xf32>
    %309 = math.rsqrt %308 : vector<1x1xf32>
    %310 = arith.mulf %306, %309 : vector<1x1xf32>
    %311 = vector.extract_strided_slice %216 {offsets = [0, 3], sizes = [1, 1], strides = [1, 1]} : vector<1x8xf32> to vector<1x1xf32>
    %312 = arith.mulf %301, %310 : vector<1x1xf32>
    %313 = arith.subf %311, %312 : vector<1x1xf32>
    %314 = vector.shape_cast %310 : vector<1x1xf32> to vector<1x1xf32>
    %315 = vector.broadcast %314 : vector<1x1xf32> to vector<1x16xf32>
    %316 = vector.shape_cast %313 : vector<1x1xf32> to vector<1x1xf32>
    %317 = vector.broadcast %316 : vector<1x1xf32> to vector<1x16xf32>
    %318 = vector.extract_strided_slice %218 {offsets = [0, 64], sizes = [1, 16], strides = [1, 1]} : vector<1x128xf32> to vector<1x16xf32>
    %cst_91 = arith.constant dense<0.000000e+00> : vector<1xf32>
    %319 = vector.multi_reduction <add>, %318, %cst_91 [1] : vector<1x16xf32> to vector<1xf32>
    %320 = vector.shape_cast %319 : vector<1xf32> to vector<1x1xf32>
    %321 = vector.extract_strided_slice %221 {offsets = [0, 64], sizes = [1, 16], strides = [1, 1]} : vector<1x128xf32> to vector<1x16xf32>
    %cst_92 = arith.constant dense<0.000000e+00> : vector<1xf32>
    %322 = vector.multi_reduction <add>, %321, %cst_92 [1] : vector<1x16xf32> to vector<1xf32>
    %323 = vector.shape_cast %322 : vector<1xf32> to vector<1x1xf32>
    %cst_93 = arith.constant 0.001953125 : f32
    %324 = vector.broadcast %cst_93 : f32 to vector<1x1xf32>
    %325 = arith.mulf %320, %324 : vector<1x1xf32>
    %cst_94 = arith.constant 0.001953125 : f32
    %326 = vector.broadcast %cst_94 : f32 to vector<1x1xf32>
    %327 = arith.mulf %323, %326 : vector<1x1xf32>
    %328 = arith.mulf %325, %325 : vector<1x1xf32>
    %329 = arith.subf %327, %328 : vector<1x1xf32>
    %330 = vector.extract_strided_slice %215 {offsets = [0, 4], sizes = [1, 1], strides = [1, 1]} : vector<1x8xf32> to vector<1x1xf32>
    %cst_95 = arith.constant 9.99999974E-6 : f32
    %331 = vector.broadcast %cst_95 : f32 to vector<1x1xf32>
    %332 = arith.addf %329, %331 : vector<1x1xf32>
    %333 = math.rsqrt %332 : vector<1x1xf32>
    %334 = arith.mulf %330, %333 : vector<1x1xf32>
    %335 = vector.extract_strided_slice %216 {offsets = [0, 4], sizes = [1, 1], strides = [1, 1]} : vector<1x8xf32> to vector<1x1xf32>
    %336 = arith.mulf %325, %334 : vector<1x1xf32>
    %337 = arith.subf %335, %336 : vector<1x1xf32>
    %338 = vector.shape_cast %334 : vector<1x1xf32> to vector<1x1xf32>
    %339 = vector.broadcast %338 : vector<1x1xf32> to vector<1x16xf32>
    %340 = vector.shape_cast %337 : vector<1x1xf32> to vector<1x1xf32>
    %341 = vector.broadcast %340 : vector<1x1xf32> to vector<1x16xf32>
    %342 = vector.extract_strided_slice %218 {offsets = [0, 80], sizes = [1, 16], strides = [1, 1]} : vector<1x128xf32> to vector<1x16xf32>
    %cst_96 = arith.constant dense<0.000000e+00> : vector<1xf32>
    %343 = vector.multi_reduction <add>, %342, %cst_96 [1] : vector<1x16xf32> to vector<1xf32>
    %344 = vector.shape_cast %343 : vector<1xf32> to vector<1x1xf32>
    %345 = vector.extract_strided_slice %221 {offsets = [0, 80], sizes = [1, 16], strides = [1, 1]} : vector<1x128xf32> to vector<1x16xf32>
    %cst_97 = arith.constant dense<0.000000e+00> : vector<1xf32>
    %346 = vector.multi_reduction <add>, %345, %cst_97 [1] : vector<1x16xf32> to vector<1xf32>
    %347 = vector.shape_cast %346 : vector<1xf32> to vector<1x1xf32>
    %cst_98 = arith.constant 0.001953125 : f32
    %348 = vector.broadcast %cst_98 : f32 to vector<1x1xf32>
    %349 = arith.mulf %344, %348 : vector<1x1xf32>
    %cst_99 = arith.constant 0.001953125 : f32
    %350 = vector.broadcast %cst_99 : f32 to vector<1x1xf32>
    %351 = arith.mulf %347, %350 : vector<1x1xf32>
    %352 = arith.mulf %349, %349 : vector<1x1xf32>
    %353 = arith.subf %351, %352 : vector<1x1xf32>
    %354 = vector.extract_strided_slice %215 {offsets = [0, 5], sizes = [1, 1], strides = [1, 1]} : vector<1x8xf32> to vector<1x1xf32>
    %cst_100 = arith.constant 9.99999974E-6 : f32
    %355 = vector.broadcast %cst_100 : f32 to vector<1x1xf32>
    %356 = arith.addf %353, %355 : vector<1x1xf32>
    %357 = math.rsqrt %356 : vector<1x1xf32>
    %358 = arith.mulf %354, %357 : vector<1x1xf32>
    %359 = vector.extract_strided_slice %216 {offsets = [0, 5], sizes = [1, 1], strides = [1, 1]} : vector<1x8xf32> to vector<1x1xf32>
    %360 = arith.mulf %349, %358 : vector<1x1xf32>
    %361 = arith.subf %359, %360 : vector<1x1xf32>
    %362 = vector.shape_cast %358 : vector<1x1xf32> to vector<1x1xf32>
    %363 = vector.broadcast %362 : vector<1x1xf32> to vector<1x16xf32>
    %364 = vector.shape_cast %361 : vector<1x1xf32> to vector<1x1xf32>
    %365 = vector.broadcast %364 : vector<1x1xf32> to vector<1x16xf32>
    %366 = vector.extract_strided_slice %218 {offsets = [0, 96], sizes = [1, 16], strides = [1, 1]} : vector<1x128xf32> to vector<1x16xf32>
    %cst_101 = arith.constant dense<0.000000e+00> : vector<1xf32>
    %367 = vector.multi_reduction <add>, %366, %cst_101 [1] : vector<1x16xf32> to vector<1xf32>
    %368 = vector.shape_cast %367 : vector<1xf32> to vector<1x1xf32>
    %369 = vector.extract_strided_slice %221 {offsets = [0, 96], sizes = [1, 16], strides = [1, 1]} : vector<1x128xf32> to vector<1x16xf32>
    %cst_102 = arith.constant dense<0.000000e+00> : vector<1xf32>
    %370 = vector.multi_reduction <add>, %369, %cst_102 [1] : vector<1x16xf32> to vector<1xf32>
    %371 = vector.shape_cast %370 : vector<1xf32> to vector<1x1xf32>
    %cst_103 = arith.constant 0.001953125 : f32
    %372 = vector.broadcast %cst_103 : f32 to vector<1x1xf32>
    %373 = arith.mulf %368, %372 : vector<1x1xf32>
    %cst_104 = arith.constant 0.001953125 : f32
    %374 = vector.broadcast %cst_104 : f32 to vector<1x1xf32>
    %375 = arith.mulf %371, %374 : vector<1x1xf32>
    %376 = arith.mulf %373, %373 : vector<1x1xf32>
    %377 = arith.subf %375, %376 : vector<1x1xf32>
    %378 = vector.extract_strided_slice %215 {offsets = [0, 6], sizes = [1, 1], strides = [1, 1]} : vector<1x8xf32> to vector<1x1xf32>
    %cst_105 = arith.constant 9.99999974E-6 : f32
    %379 = vector.broadcast %cst_105 : f32 to vector<1x1xf32>
    %380 = arith.addf %377, %379 : vector<1x1xf32>
    %381 = math.rsqrt %380 : vector<1x1xf32>
    %382 = arith.mulf %378, %381 : vector<1x1xf32>
    %383 = vector.extract_strided_slice %216 {offsets = [0, 6], sizes = [1, 1], strides = [1, 1]} : vector<1x8xf32> to vector<1x1xf32>
    %384 = arith.mulf %373, %382 : vector<1x1xf32>
    %385 = arith.subf %383, %384 : vector<1x1xf32>
    %386 = vector.shape_cast %382 : vector<1x1xf32> to vector<1x1xf32>
    %387 = vector.broadcast %386 : vector<1x1xf32> to vector<1x16xf32>
    %388 = vector.shape_cast %385 : vector<1x1xf32> to vector<1x1xf32>
    %389 = vector.broadcast %388 : vector<1x1xf32> to vector<1x16xf32>
    %390 = vector.extract_strided_slice %218 {offsets = [0, 112], sizes = [1, 16], strides = [1, 1]} : vector<1x128xf32> to vector<1x16xf32>
    %cst_106 = arith.constant dense<0.000000e+00> : vector<1xf32>
    %391 = vector.multi_reduction <add>, %390, %cst_106 [1] : vector<1x16xf32> to vector<1xf32>
    %392 = vector.shape_cast %391 : vector<1xf32> to vector<1x1xf32>
    %393 = vector.extract_strided_slice %221 {offsets = [0, 112], sizes = [1, 16], strides = [1, 1]} : vector<1x128xf32> to vector<1x16xf32>
    %cst_107 = arith.constant dense<0.000000e+00> : vector<1xf32>
    %394 = vector.multi_reduction <add>, %393, %cst_107 [1] : vector<1x16xf32> to vector<1xf32>
    %395 = vector.shape_cast %394 : vector<1xf32> to vector<1x1xf32>
    %cst_108 = arith.constant 0.001953125 : f32
    %396 = vector.broadcast %cst_108 : f32 to vector<1x1xf32>
    %397 = arith.mulf %392, %396 : vector<1x1xf32>
    %cst_109 = arith.constant 0.001953125 : f32
    %398 = vector.broadcast %cst_109 : f32 to vector<1x1xf32>
    %399 = arith.mulf %395, %398 : vector<1x1xf32>
    %400 = arith.mulf %397, %397 : vector<1x1xf32>
    %401 = arith.subf %399, %400 : vector<1x1xf32>
    %402 = vector.extract_strided_slice %215 {offsets = [0, 7], sizes = [1, 1], strides = [1, 1]} : vector<1x8xf32> to vector<1x1xf32>
    %cst_110 = arith.constant 9.99999974E-6 : f32
    %403 = vector.broadcast %cst_110 : f32 to vector<1x1xf32>
    %404 = arith.addf %401, %403 : vector<1x1xf32>
    %405 = math.rsqrt %404 : vector<1x1xf32>
    %406 = arith.mulf %402, %405 : vector<1x1xf32>
    %407 = vector.extract_strided_slice %216 {offsets = [0, 7], sizes = [1, 1], strides = [1, 1]} : vector<1x8xf32> to vector<1x1xf32>
    %408 = arith.mulf %397, %406 : vector<1x1xf32>
    %409 = arith.subf %407, %408 : vector<1x1xf32>
    %410 = vector.shape_cast %406 : vector<1x1xf32> to vector<1x1xf32>
    %411 = vector.broadcast %410 : vector<1x1xf32> to vector<1x16xf32>
    %412 = vector.shape_cast %409 : vector<1x1xf32> to vector<1x1xf32>
    %413 = vector.broadcast %412 : vector<1x1xf32> to vector<1x16xf32>
    %414 = tpu.concatenate %243, %267, %291, %315, %339, %363, %387, %411 in 1 : vector<1x16xf32>, vector<1x16xf32>, vector<1x16xf32>, vector<1x16xf32>, vector<1x16xf32>, vector<1x16xf32>, vector<1x16xf32>, vector<1x16xf32> -> vector<1x128xf32>
    %415 = tpu.concatenate %245, %269, %293, %317, %341, %365, %389, %413 in 1 : vector<1x16xf32>, vector<1x16xf32>, vector<1x16xf32>, vector<1x16xf32>, vector<1x16xf32>, vector<1x16xf32>, vector<1x16xf32>, vector<1x16xf32> -> vector<1x128xf32>
    %416 = vector.broadcast %414 : vector<1x128xf32> to vector<32x128xf32>
    %417 = arith.mulf %214, %416 : vector<32x128xf32>
    %418 = vector.broadcast %415 : vector<1x128xf32> to vector<32x128xf32>
    %419 = arith.addf %417, %418 : vector<32x128xf32>
    %cst_111 = arith.constant 0.000000e+00 : f32
    %420 = vector.broadcast %cst_111 : f32 to vector<32x128xf32>
    %421 = arith.maximumf %419, %420 : vector<32x128xf32>
    %c0_112 = arith.constant 0 : index
    %c0_113 = arith.constant 0 : index
    %422 = vector.load %arg15[%c0_112, %c0_113] : memref<32x128xf32, #tpu.memory_space<vmem>>, vector<32x128xf32>
    tpu.vector_store %arg15[%c0_112, %c0_113], %421 {strides = array<i32>} : memref<32x128xf32, #tpu.memory_space<vmem>>, vector<32x128xf32>,
    return
  }
}

</mosaic_0001>

<llo_original>
// kernel: tpu_custom_call.1
$region0: #{tpu_custom_call.1}
  #allocation0 [shape = 'u32[]', space=smem, size = 0x4, offset = 0x4, fixed_abs, tag = 'smem constant byte address 0x4 - core index']
  #allocation1 [shape = 'u32[144,128]{1,0:T(1,128)}', space=vmem, size = 0x12000, scoped, tag = 'internal scratch']
  %s0 = inlined_call_operand.vmem [shape: f32[32,64], index: 0, kind: input, shape index: {}]
  %s1 = inlined_call_operand.hbm [shape: f32[16,16], index: 1, kind: input, shape index: {}]
  %s2 = inlined_call_operand.vmem [shape: f32[32,32], index: 2, kind: input, shape index: {}]
  %s3 = inlined_call_operand.hbm [shape: f32[9,64], index: 3, kind: input, shape index: {}]
  %s4 = inlined_call_operand.hbm [shape: f32[1,64], index: 4, kind: input, shape index: {}]
  %s5 = inlined_call_operand.vmem [shape: f32[64,32], index: 5, kind: input, shape index: {}]
  %s6 = inlined_call_operand.hbm [shape: f32[1,32], index: 6, kind: input, shape index: {}]
  %s7 = inlined_call_operand.hbm [shape: f32[1,2], index: 7, kind: input, shape index: {}]
  %s8 = inlined_call_operand.hbm [shape: f32[1,2], index: 8, kind: input, shape index: {}]
  %s9 = inlined_call_operand.vmem [shape: f32[9,32], index: 9, kind: input, shape index: {}]
  %s10 = inlined_call_operand.vmem [shape: f32[1,32], index: 10, kind: input, shape index: {}]
  %s11 = inlined_call_operand.vmem [shape: f32[32,128], index: 11, kind: input, shape index: {}]
  %s12 = inlined_call_operand.vmem [shape: f32[1,128], index: 12, kind: input, shape index: {}]
  %s13 = inlined_call_operand.vmem [shape: f32[1,8], index: 13, kind: input, shape index: {}]
  %s14 = inlined_call_operand.vmem [shape: f32[1,8], index: 14, kind: input, shape index: {}]
  %s15 = inlined_call_operand.hbm [shape: f32[32,128], index: 15, kind: output, shape index: {}]
  %s16 = sld [smem:[#allocation0]]
  $region94: #{tpu_custom_call.1} parent=0
    _
  %s18 = ssub.s32 1, %s16
  %s19 = scalar_select 0, %s18, %s16
  $region1: #{tpu_custom_call.1} parent=0
    #allocation2 [shape = 'u8[8192]{0}', space=vmem, size = 0x2000, scoped, tag = 'input window, operand 1, single buffered']
    #allocation3 [shape = 's32[1]{0}', space=sflag, size = 0x4, scoped, tag = 'scoped memory for tpu_custom_call.1']
    #allocation4 [shape = 's32[1]{0}', space=sflag, size = 0x4, scoped, tag = 'scoped memory for tpu_custom_call.1']
    #allocation5 [shape = 'u8[8192]{0}', space=vmem, size = 0x2000, scoped, tag = 'input window, operand 3, single buffered']
    #allocation6 [shape = 's32[1]{0}', space=sflag, size = 0x4, scoped, tag = 'scoped memory for tpu_custom_call.1']
    #allocation7 [shape = 'u8[512]{0}', space=vmem, size = 0x400, scoped, tag = 'input window, operand 4, single buffered']
    #allocation8 [shape = 'u8[512]{0}', space=vmem, size = 0x400, scoped, tag = 'input window, operand 6, single buffered']
    #allocation9 [shape = 's32[1]{0}', space=sflag, size = 0x4, scoped, tag = 'scoped memory for tpu_custom_call.1']
    #allocation10 [shape = 'u8[512]{0}', space=vmem, size = 0x400, scoped, tag = 'input window, operand 7, single buffered']
    #allocation11 [shape = 'u8[512]{0}', space=vmem, size = 0x400, scoped, tag = 'input window, operand 8, single buffered']
    #allocation12 [shape = 's32[1]{0}', space=sflag, size = 0x4, scoped, tag = 'scoped memory for tpu_custom_call.1']
    #allocation13 [shape = 'u8[16384]{0}', space=vmem, size = 0x4000, scoped, tag = 'output window, operand 0, single buffered']
    %20 = vsyncpa [#allocation3], 0
    %21 = vsyncpa [#allocation6], 0
    %22 = vsyncpa [#allocation9], 0
    %23 = vsyncpa [#allocation12], 0
    %24 = vsyncpa [#allocation4], 0
    // Predicated region
    $region2: #{tpu_custom_call.1} parent=1 // pred_check
      _
    $region3: #{tpu_custom_call.1} parent=1 // pred_check_branch
      %26 = sbr.rel (0) target = $region5
    $region4: #{tpu_custom_call.1} parent=1 // pred_region
      _
    $region5: #{tpu_custom_call.1} parent=1 // pred_fallthru
      _
    // Predicated region
    $region6: #{tpu_custom_call.1} parent=1 // pred_check
      _
    $region7: #{tpu_custom_call.1} parent=1 // pred_check_branch
      %28 = sbr.rel (0) target = $region9
    $region8: #{tpu_custom_call.1} parent=1 // pred_region
      %s30 = ssub.s32 256, 256
      %31 = vsyncadd [#allocation3], %s30
      %s32 = sshll.u32 [#allocation2], 4
      %s33 = int_to_ptr.vmem [resolvable:$true] %s32
      %38 = dma.hbm_to_vmem [thread:$0]  %s1, 256, %s33, [#allocation3], 128, 128, 8
    $region9: #{tpu_custom_call.1} parent=1 // pred_fallthru
      _
    // Predicated region
    $region10: #{tpu_custom_call.1} parent=1 // pred_check
      _
    $region11: #{tpu_custom_call.1} parent=1 // pred_check_branch
      %40 = sbr.rel (0) target = $region13
    $region12: #{tpu_custom_call.1} parent=1 // pred_region
      _
    $region13: #{tpu_custom_call.1} parent=1 // pred_fallthru
      _
    // Predicated region
    $region14: #{tpu_custom_call.1} parent=1 // pred_check
      _
    $region15: #{tpu_custom_call.1} parent=1 // pred_check_branch
      %42 = sbr.rel (0) target = $region17
    $region16: #{tpu_custom_call.1} parent=1 // pred_region
      %s44 = ssub.s32 256, 256
      %45 = vsyncadd [#allocation6], %s44
      %s46 = sshll.u32 [#allocation5], 4
      %s47 = int_to_ptr.vmem [resolvable:$true] %s46
      %52 = dma.hbm_to_vmem [thread:$0]  %s3, 256, %s47, [#allocation6], 128, 128, 8
    $region17: #{tpu_custom_call.1} parent=1 // pred_fallthru
      _
    // Predicated region
    $region18: #{tpu_custom_call.1} parent=1 // pred_check
      _
    $region19: #{tpu_custom_call.1} parent=1 // pred_check_branch
      %54 = sbr.rel (0) target = $region21
    $region20: #{tpu_custom_call.1} parent=1 // pred_region
      %s56 = ssub.s32 16, 16
      %57 = vsyncadd [#allocation6], %s56
      %s59 = sshll.u32 [#allocation7], 4
      %s60 = int_to_ptr.vmem [resolvable:$true] %s59
      %62 = dma.hbm_to_vmem [thread:$0]  %s4, 16, %s60, [#allocation6]
    $region21: #{tpu_custom_call.1} parent=1 // pred_fallthru
      _
    // Predicated region
    $region22: #{tpu_custom_call.1} parent=1 // pred_check
      _
    $region23: #{tpu_custom_call.1} parent=1 // pred_check_branch
      %64 = sbr.rel (0) target = $region25
    $region24: #{tpu_custom_call.1} parent=1 // pred_region
      _
    $region25: #{tpu_custom_call.1} parent=1 // pred_fallthru
      _
    // Predicated region
    $region26: #{tpu_custom_call.1} parent=1 // pred_check
      _
    $region27: #{tpu_custom_call.1} parent=1 // pred_check_branch
      %66 = sbr.rel (0) target = $region29
    $region28: #{tpu_custom_call.1} parent=1 // pred_region
      %s68 = ssub.s32 16, 16
      %69 = vsyncadd [#allocation9], %s68
      %s71 = sshll.u32 [#allocation8], 4
      %s72 = int_to_ptr.vmem [resolvable:$true] %s71
      %74 = dma.hbm_to_vmem [thread:$0]  %s6, 16, %s72, [#allocation9]
    $region29: #{tpu_custom_call.1} parent=1 // pred_fallthru
      _
    // Predicated region
    $region30: #{tpu_custom_call.1} parent=1 // pred_check
      _
    $region31: #{tpu_custom_call.1} parent=1 // pred_check_branch
      %76 = sbr.rel (0) target = $region33
    $region32: #{tpu_custom_call.1} parent=1 // pred_region
      %s78 = ssub.s32 16, 16
      %79 = vsyncadd [#allocation9], %s78
      %s81 = sshll.u32 [#allocation10], 4
      %s82 = int_to_ptr.vmem [resolvable:$true] %s81
      %84 = dma.hbm_to_vmem [thread:$0]  %s7, 16, %s82, [#allocation9]
    $region33: #{tpu_custom_call.1} parent=1 // pred_fallthru
      _
    // Predicated region
    $region34: #{tpu_custom_call.1} parent=1 // pred_check
      _
    $region35: #{tpu_custom_call.1} parent=1 // pred_check_branch
      %86 = sbr.rel (0) target = $region37
    $region36: #{tpu_custom_call.1} parent=1 // pred_region
      %s88 = ssub.s32 16, 16
      %89 = vsyncadd [#allocation12], %s88
      %s91 = sshll.u32 [#allocation11], 4
      %s92 = int_to_ptr.vmem [resolvable:$true] %s91
      %94 = dma.hbm_to_vmem [thread:$0]  %s8, 16, %s92, [#allocation12]
    $region37: #{tpu_custom_call.1} parent=1 // pred_fallthru
      _
    // Predicated region
    $region38: #{tpu_custom_call.1} parent=1 // pred_check
      _
    $region39: #{tpu_custom_call.1} parent=1 // pred_check_branch
      %96 = sbr.rel (0) target = $region41
    $region40: #{tpu_custom_call.1} parent=1 // pred_region
      _
    $region41: #{tpu_custom_call.1} parent=1 // pred_fallthru
      _
    // Predicated region
    $region42: #{tpu_custom_call.1} parent=1 // pred_check
      _
    $region43: #{tpu_custom_call.1} parent=1 // pred_check_branch
      %98 = sbr.rel (0) target = $region45
    $region44: #{tpu_custom_call.1} parent=1 // pred_region
      _
    $region45: #{tpu_custom_call.1} parent=1 // pred_fallthru
      _
    // Predicated region
    $region46: #{tpu_custom_call.1} parent=1 // pred_check
      _
    $region47: #{tpu_custom_call.1} parent=1 // pred_check_branch
      %100 = sbr.rel (0) target = $region49
    $region48: #{tpu_custom_call.1} parent=1 // pred_region
      _
    $region49: #{tpu_custom_call.1} parent=1 // pred_fallthru
      _
    // Predicated region
    $region50: #{tpu_custom_call.1} parent=1 // pred_check
      _
    $region51: #{tpu_custom_call.1} parent=1 // pred_check_branch
      %102 = sbr.rel (0) target = $region53
    $region52: #{tpu_custom_call.1} parent=1 // pred_region
      _
    $region53: #{tpu_custom_call.1} parent=1 // pred_fallthru
      _
    // Predicated region
    $region54: #{tpu_custom_call.1} parent=1 // pred_check
      _
    $region55: #{tpu_custom_call.1} parent=1 // pred_check_branch
      %104 = sbr.rel (0) target = $region57
    $region56: #{tpu_custom_call.1} parent=1 // pred_region
      _
    $region57: #{tpu_custom_call.1} parent=1 // pred_fallthru
      _
    // Predicated region
    $region58: #{tpu_custom_call.1} parent=1 // pred_check
      _
    $region59: #{tpu_custom_call.1} parent=1 // pred_check_branch
      %106 = sbr.rel (0) target = $region61
    $region60: #{tpu_custom_call.1} parent=1 // pred_region
      _
    $region61: #{tpu_custom_call.1} parent=1 // pred_fallthru
      _
    // Predicated region
    $region62: #{tpu_custom_call.1} parent=1 // pred_check
      _
    $region63: #{tpu_custom_call.1} parent=1 // pred_check_branch
      %108 = sbr.rel (0) target = $region65
    $region64: #{tpu_custom_call.1} parent=1 // pred_region
      %109 = dma.done [#allocation3], 256
    $region65: #{tpu_custom_call.1} parent=1 // pred_fallthru
      _
    // Predicated region
    $region66: #{tpu_custom_call.1} parent=1 // pred_check
      _
    $region67: #{tpu_custom_call.1} parent=1 // pred_check_branch
      %111 = sbr.rel (0) target = $region69
    $region68: #{tpu_custom_call.1} parent=1 // pred_region
      %112 = dma.done [#allocation6], 256
    $region69: #{tpu_custom_call.1} parent=1 // pred_fallthru
      _
    // Predicated region
    $region70: #{tpu_custom_call.1} parent=1 // pred_check
      _
    $region71: #{tpu_custom_call.1} parent=1 // pred_check_branch
      %114 = sbr.rel (0) target = $region73
    $region72: #{tpu_custom_call.1} parent=1 // pred_region
      %115 = dma.done [#allocation6], 16
    $region73: #{tpu_custom_call.1} parent=1 // pred_fallthru
      _
    // Predicated region
    $region74: #{tpu_custom_call.1} parent=1 // pred_check
      _
    $region75: #{tpu_custom_call.1} parent=1 // pred_check_branch
      %117 = sbr.rel (0) target = $region77
    $region76: #{tpu_custom_call.1} parent=1 // pred_region
      %118 = dma.done [#allocation9], 16
    $region77: #{tpu_custom_call.1} parent=1 // pred_fallthru
      _
    // Predicated region
    $region78: #{tpu_custom_call.1} parent=1 // pred_check
      _
    $region79: #{tpu_custom_call.1} parent=1 // pred_check_branch
      %120 = sbr.rel (0) target = $region81
    $region80: #{tpu_custom_call.1} parent=1 // pred_region
      %121 = dma.done [#allocation9], 16
    $region81: #{tpu_custom_call.1} parent=1 // pred_fallthru
      _
    // Predicated region
    $region82: #{tpu_custom_call.1} parent=1 // pred_check
      _
    $region83: #{tpu_custom_call.1} parent=1 // pred_check_branch
      %123 = sbr.rel (0) target = $region85
    $region84: #{tpu_custom_call.1} parent=1 // pred_region
      %124 = dma.done [#allocation12], 16
    $region85: #{tpu_custom_call.1} parent=1 // pred_fallthru
      _
    %v125 = vld [vmem:[%s0] sm:$0xff]
    %v126 = vld [vmem:[%s0 + $0x8] sm:$0xff]
    %v127 = vld [vmem:[%s0 + $0x10] sm:$0xff]
    %v128 = vld [vmem:[%s0 + $0x18] sm:$0xff]
    %v129 = vld [vmem:[#allocation2] sm:$0xff]
    %v130 = vld [vmem:[#allocation2 + $0x8] sm:$0xff]
    %v131 = vld [vmem:[%s2] sm:$0xff]
    %v132 = vld [vmem:[%s2 + $0x8] sm:$0xff]
    %v133 = vld [vmem:[%s2 + $0x10] sm:$0xff]
    %v134 = vld [vmem:[%s2 + $0x18] sm:$0xff]
    %137 = vrot.lane.b32.xlu0 %v125, 96
    %v138 = vpop.permute.xlu0 %137
    %139 = vrot.lane.b32.xlu0 %v126, 96
    %v140 = vpop.permute.xlu0 %139
    %vm143 = vcmask 130048
    %v145 = vsel %vm143, %v129, 0
    %v148 = vsel %vm143, %v130, 0
    %150 = vmatprep.subr.mxu0 0.0
    %151 = vmatpush1.msra.mxu0 0.0
    %152 = vmatprep.subr.mxu0 0.0
    %153 = vmatpush1.msra.mxu0 0.0
    %154 = vmatprep.subr.mxu0 0.0
    %155 = vmatpush1.msra.mxu0 0.0
    %156 = vmatprep.subr.mxu0 0.0
    %157 = vmatpush1.msra.mxu0 0.0
    %158 = vmatprep.subr.mxu0 0.0
    %159 = vmatpush1.msra.mxu0 0.0
    %160 = vmatprep.subr.mxu0 0.0
    %161 = vmatpush1.msra.mxu0 0.0
    %162 = vmatprep.subr.mxu0 0.0
    %163 = vmatpush1.msra.mxu0 0.0
    %164 = vmatprep.subr.mxu0 0.0
    %165 = vmatpush1.msra.mxu0 0.0
    %166 = vmatprep.subr.mxu0 0.0
    %167 = vmatpush1.msra.mxu0 0.0
    %168 = vmatprep.subr.mxu0 0.0
    %169 = vmatpush1.msra.mxu0 0.0
    %170 = vmatprep.subr.mxu0 0.0
    %171 = vmatpush1.msra.mxu0 0.0
    %172 = vmatprep.subr.mxu0 0.0
    %173 = vmatpush1.msra.mxu0 0.0
    %174 = vmatprep.subr.mxu0 0.0
    %175 = vmatpush1.msra.mxu0 0.0
    %176 = vmatprep.subr.mxu0 0.0
    %177 = vmatpush1.msra.mxu0 0.0
    %178 = vmatprep.subr.mxu0 0.0
    %v179 = vand.u32 %v140, 4294901760
    %180 = vmatpush1.msra.mxu0 %v179
    %181 = vmatprep.subr.mxu0 0.0
    %v182 = vand.u32 %v138, 4294901760
    %183 = vmatpush1.msra.mxu0 %v182
    %184 = vmatprep.subr.mxu0 0.0
    %185 = vmatpush2.msra.mxu0 0.0
    %186 = vmatprep.subr.mxu0 0.0
    %187 = vmatpush2.msra.mxu0 0.0
    %188 = vmatprep.subr.mxu0 0.0
    %189 = vmatpush2.msra.mxu0 0.0
    %190 = vmatprep.subr.mxu0 0.0
    %191 = vmatpush2.msra.mxu0 0.0
    %192 = vmatprep.subr.mxu0 0.0
    %193 = vmatpush2.msra.mxu0 0.0
    %194 = vmatprep.subr.mxu0 0.0
    %195 = vmatpush2.msra.mxu0 0.0
    %196 = vmatprep.subr.mxu0 0.0
    %197 = vmatpush2.msra.mxu0 0.0
    %198 = vmatprep.subr.mxu0 0.0
    %199 = vmatpush2.msra.mxu0 0.0
    %200 = vmatprep.subr.mxu0 0.0
    %201 = vmatpush2.msra.mxu0 0.0
    %202 = vmatprep.subr.mxu0 0.0
    %203 = vmatpush2.msra.mxu0 0.0
    %204 = vmatprep.subr.mxu0 0.0
    %205 = vmatpush2.msra.mxu0 0.0
    %206 = vmatprep.subr.mxu0 0.0
    %207 = vmatpush2.msra.mxu0 0.0
    %208 = vmatprep.subr.mxu0 0.0
    %209 = vmatpush2.msra.mxu0 0.0
    %210 = vmatprep.subr.mxu0 0.0
    %211 = vmatpush2.msra.mxu0 0.0
    %212 = vmatprep.subr.mxu0 0.0
    %213 = vmatpush2.msra.mxu0 0.0
    %214 = vmatprep.subr.mxu0 0.0
    %215 = vmatpush2.msra.mxu0 0.0
    %216 = vmatprep.mubr.f32.mxu0 0.0
    %v217 = vand.u32 %v145, 4294901760
    %v218 = vsub.f32 %v145, %v217
    %v219 = vand.u32 %v218, 4294901760
    %v220 = vsub.f32 %v218, %v219
    %v221 = vand.u32 %v220, 4294901760
    %222 = vmatmul.mubr.f32.gmra.mxu0 %v221
    %v223 = vpop.f32.mrf.mxu0
    %v224 = vadd.f32 0.0, %v223
    %v225 = vpop.f32.mrf.mxu0
    %226 = vmatprep.mubr.f32.mxu0 0.0
    %v227 = vand.u32 %v148, 4294901760
    %v228 = vsub.f32 %v148, %v227
    %v229 = vand.u32 %v228, 4294901760
    %v230 = vsub.f32 %v228, %v229
    %v231 = vand.u32 %v230, 4294901760
    %232 = vmatmul.mubr.f32.gmra.mxu0 %v231
    %v233 = vpop.f32.mrf.mxu0
    %v234 = vadd.f32 0.0, %v233
    %v235 = vpop.f32.mrf.mxu0
    %236 = vdwg.mxu0
    %237 = vmatprep.subr.mxu0 0.0
    %238 = vmatpush1.msra.mxu0 0.0
    %239 = vmatprep.subr.mxu0 0.0
    %240 = vmatpush1.msra.mxu0 0.0
    %241 = vmatprep.subr.mxu0 0.0
    %242 = vmatpush1.msra.mxu0 0.0
    %243 = vmatprep.subr.mxu0 0.0
    %244 = vmatpush1.msra.mxu0 0.0
    %245 = vmatprep.subr.mxu0 0.0
    %246 = vmatpush1.msra.mxu0 0.0
    %247 = vmatprep.subr.mxu0 0.0
    %248 = vmatpush1.msra.mxu0 0.0
    %249 = vmatprep.subr.mxu0 0.0
    %250 = vmatpush1.msra.mxu0 0.0
    %251 = vmatprep.subr.mxu0 0.0
    %252 = vmatpush1.msra.mxu0 0.0
    %253 = vmatprep.subr.mxu0 0.0
    %254 = vmatpush1.msra.mxu0 0.0
    %255 = vmatprep.subr.mxu0 0.0
    %256 = vmatpush1.msra.mxu0 0.0
    %257 = vmatprep.subr.mxu0 0.0
    %258 = vmatpush1.msra.mxu0 0.0
    %259 = vmatprep.subr.mxu0 0.0
    %260 = vmatpush1.msra.mxu0 0.0
    %261 = vmatprep.subr.mxu0 0.0
    %262 = vmatpush1.msra.mxu0 0.0
    %263 = vmatprep.subr.mxu0 0.0
    %264 = vmatpush1.msra.mxu0 0.0
    %265 = vmatprep.subr.mxu0 0.0
    %v266 = vand.u32 %v140, 4294901760
    %v267 = vsub.f32 %v140, %v266
    %v268 = vand.u32 %v267, 4294901760
    %v269 = vsub.f32 %v267, %v268
    %v270 = vand.u32 %v269, 4294901760
    %271 = vmatpush1.msra.mxu0 %v270
    %272 = vmatprep.subr.mxu0 0.0
    %v273 = vand.u32 %v138, 4294901760
    %v274 = vsub.f32 %v138, %v273
    %v275 = vand.u32 %v274, 4294901760
    %v276 = vsub.f32 %v274, %v275
    %v277 = vand.u32 %v276, 4294901760
    %278 = vmatpush1.msra.mxu0 %v277
    %279 = vmatprep.subr.mxu0 0.0
    %280 = vmatpush2.msra.mxu0 0.0
    %281 = vmatprep.subr.mxu0 0.0
    %282 = vmatpush2.msra.mxu0 0.0
    %283 = vmatprep.subr.mxu0 0.0
    %284 = vmatpush2.msra.mxu0 0.0
    %285 = vmatprep.subr.mxu0 0.0
    %286 = vmatpush2.msra.mxu0 0.0
    %287 = vmatprep.subr.mxu0 0.0
    %288 = vmatpush2.msra.mxu0 0.0
    %289 = vmatprep.subr.mxu0 0.0
    %290 = vmatpush2.msra.mxu0 0.0
    %291 = vmatprep.subr.mxu0 0.0
    %292 = vmatpush2.msra.mxu0 0.0
    %293 = vmatprep.subr.mxu0 0.0
    %294 = vmatpush2.msra.mxu0 0.0
    %295 = vmatprep.subr.mxu0 0.0
    %296 = vmatpush2.msra.mxu0 0.0
    %297 = vmatprep.subr.mxu0 0.0
    %298 = vmatpush2.msra.mxu0 0.0
    %299 = vmatprep.subr.mxu0 0.0
    %300 = vmatpush2.msra.mxu0 0.0
    %301 = vmatprep.subr.mxu0 0.0
    %302 = vmatpush2.msra.mxu0 0.0
    %303 = vmatprep.subr.mxu0 0.0
    %304 = vmatpush2.msra.mxu0 0.0
    %305 = vmatprep.subr.mxu0 0.0
    %306 = vmatpush2.msra.mxu0 0.0
    %307 = vmatprep.subr.mxu0 0.0
    %308 = vmatpush2.msra.mxu0 0.0
    %309 = vmatprep.subr.mxu0 0.0
    %310 = vmatpush2.msra.mxu0 0.0
    %311 = vmatprep.mubr.f32.mxu0 0.0
    %v312 = vand.u32 %v145, 4294901760
    %313 = vmatmul.mubr.f32.gmra.mxu0 %v312
    %v314 = vpop.f32.mrf.mxu0
    %v315 = vadd.f32 %v224, %v314
    %v316 = vpop.f32.mrf.mxu0
    %317 = vmatprep.mubr.f32.mxu0 0.0
    %v318 = vand.u32 %v148, 4294901760
    %319 = vmatmul.mubr.f32.gmra.mxu0 %v318
    %v320 = vpop.f32.mrf.mxu0
    %v321 = vadd.f32 %v234, %v320
    %v322 = vpop.f32.mrf.mxu0
    %323 = vdwg.mxu0
    %324 = vmatprep.subr.mxu0 0.0
    %325 = vmatpush1.msra.mxu0 0.0
    %326 = vmatprep.subr.mxu0 0.0
    %327 = vmatpush1.msra.mxu0 0.0
    %328 = vmatprep.subr.mxu0 0.0
    %329 = vmatpush1.msra.mxu0 0.0
    %330 = vmatprep.subr.mxu0 0.0
    %331 = vmatpush1.msra.mxu0 0.0
    %332 = vmatprep.subr.mxu0 0.0
    %333 = vmatpush1.msra.mxu0 0.0
    %334 = vmatprep.subr.mxu0 0.0
    %335 = vmatpush1.msra.mxu0 0.0
    %336 = vmatprep.subr.mxu0 0.0
    %337 = vmatpush1.msra.mxu0 0.0
    %338 = vmatprep.subr.mxu0 0.0
    %339 = vmatpush1.msra.mxu0 0.0
    %340 = vmatprep.subr.mxu0 0.0
    %341 = vmatpush1.msra.mxu0 0.0
    %342 = vmatprep.subr.mxu0 0.0
    %343 = vmatpush1.msra.mxu0 0.0
    %344 = vmatprep.subr.mxu0 0.0
    %345 = vmatpush1.msra.mxu0 0.0
    %346 = vmatprep.subr.mxu0 0.0
    %347 = vmatpush1.msra.mxu0 0.0
    %348 = vmatprep.subr.mxu0 0.0
    %349 = vmatpush1.msra.mxu0 0.0
    %350 = vmatprep.subr.mxu0 0.0
    %351 = vmatpush1.msra.mxu0 0.0
    %352 = vmatprep.subr.mxu0 0.0
    %v353 = vand.u32 %v140, 4294901760
    %v354 = vsub.f32 %v140, %v353
    %355 = vmatpush1.msra.mxu0 %v354
    %356 = vmatprep.subr.mxu0 0.0
    %v357 = vand.u32 %v138, 4294901760
    %v358 = vsub.f32 %v138, %v357
    %359 = vmatpush1.msra.mxu0 %v358
    %360 = vmatprep.subr.mxu0 0.0
    %361 = vmatpush2.msra.mxu0 0.0
    %362 = vmatprep.subr.mxu0 0.0
    %363 = vmatpush2.msra.mxu0 0.0
    %364 = vmatprep.subr.mxu0 0.0
    %365 = vmatpush2.msra.mxu0 0.0
    %366 = vmatprep.subr.mxu0 0.0
    %367 = vmatpush2.msra.mxu0 0.0
    %368 = vmatprep.subr.mxu0 0.0
    %369 = vmatpush2.msra.mxu0 0.0
    %370 = vmatprep.subr.mxu0 0.0
    %371 = vmatpush2.msra.mxu0 0.0
    %372 = vmatprep.subr.mxu0 0.0
    %373 = vmatpush2.msra.mxu0 0.0
    %374 = vmatprep.subr.mxu0 0.0
    %375 = vmatpush2.msra.mxu0 0.0
    %376 = vmatprep.subr.mxu0 0.0
    %377 = vmatpush2.msra.mxu0 0.0
    %378 = vmatprep.subr.mxu0 0.0
    %379 = vmatpush2.msra.mxu0 0.0
    %380 = vmatprep.subr.mxu0 0.0
    %381 = vmatpush2.msra.mxu0 0.0
    %382 = vmatprep.subr.mxu0 0.0
    %383 = vmatpush2.msra.mxu0 0.0
    %384 = vmatprep.subr.mxu0 0.0
    %385 = vmatpush2.msra.mxu0 0.0
    %386 = vmatprep.subr.mxu0 0.0
    %387 = vmatpush2.msra.mxu0 0.0
    %388 = vmatprep.subr.mxu0 0.0
    %389 = vmatpush2.msra.mxu0 0.0
    %390 = vmatprep.subr.mxu0 0.0
    %391 = vmatpush2.msra.mxu0 0.0
    %392 = vmatprep.mubr.f32.mxu0 0.0
    %v393 = vand.u32 %v145, 4294901760
    %v394 = vsub.f32 %v145, %v393
    %395 = vmatmul.mubr.f32.gmra.mxu0 %v394
    %v396 = vpop.f32.mrf.mxu0
    %v397 = vadd.f32 %v315, %v396
    %v398 = vpop.f32.mrf.mxu0
    %399 = vmatprep.mubr.f32.mxu0 0.0
    %v400 = vand.u32 %v148, 4294901760
    %v401 = vsub.f32 %v148, %v400
    %402 = vmatmul.mubr.f32.gmra.mxu0 %v401
    %v403 = vpop.f32.mrf.mxu0
    %v404 = vadd.f32 %v321, %v403
    %v405 = vpop.f32.mrf.mxu0
    %406 = vdwg.mxu0
    %407 = vmatprep.subr.mxu0 0.0
    %408 = vmatpush1.msra.mxu0 0.0
    %409 = vmatprep.subr.mxu0 0.0
    %410 = vmatpush1.msra.mxu0 0.0
    %411 = vmatprep.subr.mxu0 0.0
    %412 = vmatpush1.msra.mxu0 0.0
    %413 = vmatprep.subr.mxu0 0.0
    %414 = vmatpush1.msra.mxu0 0.0
    %415 = vmatprep.subr.mxu0 0.0
    %416 = vmatpush1.msra.mxu0 0.0
    %417 = vmatprep.subr.mxu0 0.0
    %418 = vmatpush1.msra.mxu0 0.0
    %419 = vmatprep.subr.mxu0 0.0
    %420 = vmatpush1.msra.mxu0 0.0
    %421 = vmatprep.subr.mxu0 0.0
    %422 = vmatpush1.msra.mxu0 0.0
    %423 = vmatprep.subr.mxu0 0.0
    %424 = vmatpush1.msra.mxu0 0.0
    %425 = vmatprep.subr.mxu0 0.0
    %426 = vmatpush1.msra.mxu0 0.0
    %427 = vmatprep.subr.mxu0 0.0
    %428 = vmatpush1.msra.mxu0 0.0
    %429 = vmatprep.subr.mxu0 0.0
    %430 = vmatpush1.msra.mxu0 0.0
    %431 = vmatprep.subr.mxu0 0.0
    %432 = vmatpush1.msra.mxu0 0.0
    %433 = vmatprep.subr.mxu0 0.0
    %434 = vmatpush1.msra.mxu0 0.0
    %435 = vmatprep.subr.mxu0 0.0
    %v436 = vand.u32 %v140, 4294901760
    %437 = vmatpush1.msra.mxu0 %v436
    %438 = vmatprep.subr.mxu0 0.0
    %v439 = vand.u32 %v138, 4294901760
    %440 = vmatpush1.msra.mxu0 %v439
    %441 = vmatprep.subr.mxu0 0.0
    %442 = vmatpush2.msra.mxu0 0.0
    %443 = vmatprep.subr.mxu0 0.0
    %444 = vmatpush2.msra.mxu0 0.0
    %445 = vmatprep.subr.mxu0 0.0
    %446 = vmatpush2.msra.mxu0 0.0
    %447 = vmatprep.subr.mxu0 0.0
    %448 = vmatpush2.msra.mxu0 0.0
    %449 = vmatprep.subr.mxu0 0.0
    %450 = vmatpush2.msra.mxu0 0.0
    %451 = vmatprep.subr.mxu0 0.0
    %452 = vmatpush2.msra.mxu0 0.0
    %453 = vmatprep.subr.mxu0 0.0
    %454 = vmatpush2.msra.mxu0 0.0
    %455 = vmatprep.subr.mxu0 0.0
    %456 = vmatpush2.msra.mxu0 0.0
    %457 = vmatprep.subr.mxu0 0.0
    %458 = vmatpush2.msra.mxu0 0.0
    %459 = vmatprep.subr.mxu0 0.0
    %460 = vmatpush2.msra.mxu0 0.0
    %461 = vmatprep.subr.mxu0 0.0
    %462 = vmatpush2.msra.mxu0 0.0
    %463 = vmatprep.subr.mxu0 0.0
    %464 = vmatpush2.msra.mxu0 0.0
    %465 = vmatprep.subr.mxu0 0.0
    %466 = vmatpush2.msra.mxu0 0.0
    %467 = vmatprep.subr.mxu0 0.0
    %468 = vmatpush2.msra.mxu0 0.0
    %469 = vmatprep.subr.mxu0 0.0
    %470 = vmatpush2.msra.mxu0 0.0
    %471 = vmatprep.subr.mxu0 0.0
    %472 = vmatpush2.msra.mxu0 0.0
    %473 = vmatprep.mubr.f32.mxu0 0.0
    %v474 = vand.u32 %v145, 4294901760
    %v475 = vsub.f32 %v145, %v474
    %v476 = vand.u32 %v475, 4294901760
    %477 = vmatmul.mubr.f32.gmra.mxu0 %v476
    %v478 = vpop.f32.mrf.mxu0
    %v479 = vadd.f32 %v397, %v478
    %v480 = vpop.f32.mrf.mxu0
    %481 = vmatprep.mubr.f32.mxu0 0.0
    %v482 = vand.u32 %v148, 4294901760
    %v483 = vsub.f32 %v148, %v482
    %v484 = vand.u32 %v483, 4294901760
    %485 = vmatmul.mubr.f32.gmra.mxu0 %v484
    %v486 = vpop.f32.mrf.mxu0
    %v487 = vadd.f32 %v404, %v486
    %v488 = vpop.f32.mrf.mxu0
    %489 = vdwg.mxu0
    %490 = vmatprep.subr.mxu0 0.0
    %491 = vmatpush1.msra.mxu0 0.0
    %492 = vmatprep.subr.mxu0 0.0
    %493 = vmatpush1.msra.mxu0 0.0
    %494 = vmatprep.subr.mxu0 0.0
    %495 = vmatpush1.msra.mxu0 0.0
    %496 = vmatprep.subr.mxu0 0.0
    %497 = vmatpush1.msra.mxu0 0.0
    %498 = vmatprep.subr.mxu0 0.0
    %499 = vmatpush1.msra.mxu0 0.0
    %500 = vmatprep.subr.mxu0 0.0
    %501 = vmatpush1.msra.mxu0 0.0
    %502 = vmatprep.subr.mxu0 0.0
    %503 = vmatpush1.msra.mxu0 0.0
    %504 = vmatprep.subr.mxu0 0.0
    %505 = vmatpush1.msra.mxu0 0.0
    %506 = vmatprep.subr.mxu0 0.0
    %507 = vmatpush1.msra.mxu0 0.0
    %508 = vmatprep.subr.mxu0 0.0
    %509 = vmatpush1.msra.mxu0 0.0
    %510 = vmatprep.subr.mxu0 0.0
    %511 = vmatpush1.msra.mxu0 0.0
    %512 = vmatprep.subr.mxu0 0.0
    %513 = vmatpush1.msra.mxu0 0.0
    %514 = vmatprep.subr.mxu0 0.0
    %515 = vmatpush1.msra.mxu0 0.0
    %516 = vmatprep.subr.mxu0 0.0
    %517 = vmatpush1.msra.mxu0 0.0
    %518 = vmatprep.subr.mxu0 0.0
    %v519 = vand.u32 %v140, 4294901760
    %v520 = vsub.f32 %v140, %v519
    %v521 = vand.u32 %v520, 4294901760
    %522 = vmatpush1.msra.mxu0 %v521
    %523 = vmatprep.subr.mxu0 0.0
    %v524 = vand.u32 %v138, 4294901760
    %v525 = vsub.f32 %v138, %v524
    %v526 = vand.u32 %v525, 4294901760
    %527 = vmatpush1.msra.mxu0 %v526
    %528 = vmatprep.subr.mxu0 0.0
    %529 = vmatpush2.msra.mxu0 0.0
    %530 = vmatprep.subr.mxu0 0.0
    %531 = vmatpush2.msra.mxu0 0.0
    %532 = vmatprep.subr.mxu0 0.0
    %533 = vmatpush2.msra.mxu0 0.0
    %534 = vmatprep.subr.mxu0 0.0
    %535 = vmatpush2.msra.mxu0 0.0
    %536 = vmatprep.subr.mxu0 0.0
    %537 = vmatpush2.msra.mxu0 0.0
    %538 = vmatprep.subr.mxu0 0.0
    %539 = vmatpush2.msra.mxu0 0.0
    %540 = vmatprep.subr.mxu0 0.0
    %541 = vmatpush2.msra.mxu0 0.0
    %542 = vmatprep.subr.mxu0 0.0
    %543 = vmatpush2.msra.mxu0 0.0
    %544 = vmatprep.subr.mxu0 0.0
    %545 = vmatpush2.msra.mxu0 0.0
    %546 = vmatprep.subr.mxu0 0.0
    %547 = vmatpush2.msra.mxu0 0.0
    %548 = vmatprep.subr.mxu0 0.0
    %549 = vmatpush2.msra.mxu0 0.0
    %550 = vmatprep.subr.mxu0 0.0
    %551 = vmatpush2.msra.mxu0 0.0
    %552 = vmatprep.subr.mxu0 0.0
    %553 = vmatpush2.msra.mxu0 0.0
    %554 = vmatprep.subr.mxu0 0.0
    %555 = vmatpush2.msra.mxu0 0.0
    %556 = vmatprep.subr.mxu0 0.0
    %557 = vmatpush2.msra.mxu0 0.0
    %558 = vmatprep.subr.mxu0 0.0
    %559 = vmatpush2.msra.mxu0 0.0
    %560 = vmatprep.mubr.f32.mxu0 0.0
    %v561 = vand.u32 %v145, 4294901760
    %562 = vmatmul.mubr.f32.gmra.mxu0 %v561
    %v563 = vpop.f32.mrf.mxu0
    %v564 = vadd.f32 %v479, %v563
    %v565 = vpop.f32.mrf.mxu0
    %566 = vmatprep.mubr.f32.mxu0 0.0
    %v567 = vand.u32 %v148, 4294901760
    %568 = vmatmul.mubr.f32.gmra.mxu0 %v567
    %v569 = vpop.f32.mrf.mxu0
    %v570 = vadd.f32 %v487, %v569
    %v571 = vpop.f32.mrf.mxu0
    %572 = vdwg.mxu0
    %573 = vmatprep.subr.mxu0 0.0
    %574 = vmatpush1.msra.mxu0 0.0
    %575 = vmatprep.subr.mxu0 0.0
    %576 = vmatpush1.msra.mxu0 0.0
    %577 = vmatprep.subr.mxu0 0.0
    %578 = vmatpush1.msra.mxu0 0.0
    %579 = vmatprep.subr.mxu0 0.0
    %580 = vmatpush1.msra.mxu0 0.0
    %581 = vmatprep.subr.mxu0 0.0
    %582 = vmatpush1.msra.mxu0 0.0
    %583 = vmatprep.subr.mxu0 0.0
    %584 = vmatpush1.msra.mxu0 0.0
    %585 = vmatprep.subr.mxu0 0.0
    %586 = vmatpush1.msra.mxu0 0.0
    %587 = vmatprep.subr.mxu0 0.0
    %588 = vmatpush1.msra.mxu0 0.0
    %589 = vmatprep.subr.mxu0 0.0
    %590 = vmatpush1.msra.mxu0 0.0
    %591 = vmatprep.subr.mxu0 0.0
    %592 = vmatpush1.msra.mxu0 0.0
    %593 = vmatprep.subr.mxu0 0.0
    %594 = vmatpush1.msra.mxu0 0.0
    %595 = vmatprep.subr.mxu0 0.0
    %596 = vmatpush1.msra.mxu0 0.0
    %597 = vmatprep.subr.mxu0 0.0
    %598 = vmatpush1.msra.mxu0 0.0
    %599 = vmatprep.subr.mxu0 0.0
    %600 = vmatpush1.msra.mxu0 0.0
    %601 = vmatprep.subr.mxu0 0.0
    %v602 = vand.u32 %v140, 4294901760
    %603 = vmatpush1.msra.mxu0 %v602
    %604 = vmatprep.subr.mxu0 0.0
    %v605 = vand.u32 %v138, 4294901760
    %606 = vmatpush1.msra.mxu0 %v605
    %607 = vmatprep.subr.mxu0 0.0
    %608 = vmatpush2.msra.mxu0 0.0
    %609 = vmatprep.subr.mxu0 0.0
    %610 = vmatpush2.msra.mxu0 0.0
    %611 = vmatprep.subr.mxu0 0.0
    %612 = vmatpush2.msra.mxu0 0.0
    %613 = vmatprep.subr.mxu0 0.0
    %614 = vmatpush2.msra.mxu0 0.0
    %615 = vmatprep.subr.mxu0 0.0
    %616 = vmatpush2.msra.mxu0 0.0
    %617 = vmatprep.subr.mxu0 0.0
    %618 = vmatpush2.msra.mxu0 0.0
    %619 = vmatprep.subr.mxu0 0.0
    %620 = vmatpush2.msra.mxu0 0.0
    %621 = vmatprep.subr.mxu0 0.0
    %622 = vmatpush2.msra.mxu0 0.0
    %623 = vmatprep.subr.mxu0 0.0
    %624 = vmatpush2.msra.mxu0 0.0
    %625 = vmatprep.subr.mxu0 0.0
    %626 = vmatpush2.msra.mxu0 0.0
    %627 = vmatprep.subr.mxu0 0.0
    %628 = vmatpush2.msra.mxu0 0.0
    %629 = vmatprep.subr.mxu0 0.0
    %630 = vmatpush2.msra.mxu0 0.0
    %631 = vmatprep.subr.mxu0 0.0
    %632 = vmatpush2.msra.mxu0 0.0
    %633 = vmatprep.subr.mxu0 0.0
    %634 = vmatpush2.msra.mxu0 0.0
    %635 = vmatprep.subr.mxu0 0.0
    %636 = vmatpush2.msra.mxu0 0.0
    %637 = vmatprep.subr.mxu0 0.0
    %638 = vmatpush2.msra.mxu0 0.0
    %639 = vmatprep.mubr.f32.mxu0 0.0
    %v640 = vand.u32 %v145, 4294901760
    %641 = vmatmul.mubr.f32.gmra.mxu0 %v640
    %v642 = vpop.f32.mrf.mxu0
    %v643 = vadd.f32 %v564, %v642
    %v644 = vpop.f32.mrf.mxu0
    %645 = vmatprep.mubr.f32.mxu0 0.0
    %v646 = vand.u32 %v148, 4294901760
    %647 = vmatmul.mubr.f32.gmra.mxu0 %v646
    %v648 = vpop.f32.mrf.mxu0
    %v649 = vadd.f32 %v570, %v648
    %v650 = vpop.f32.mrf.mxu0
    %651 = vdwg.mxu0
    %vm652 = vcmask 261120
    %v654 = vsel %vm652, %v643, 0
    %v657 = vsel %vm652, %v649, 0
    %659 = vmatprep.subr.mxu0 0.0
    %660 = vmatpush1.msra.mxu0 0.0
    %661 = vmatprep.subr.mxu0 0.0
    %662 = vmatpush1.msra.mxu0 0.0
    %663 = vmatprep.subr.mxu0 0.0
    %664 = vmatpush1.msra.mxu0 0.0
    %665 = vmatprep.subr.mxu0 0.0
    %666 = vmatpush1.msra.mxu0 0.0
    %667 = vmatprep.subr.mxu0 0.0
    %668 = vmatpush1.msra.mxu0 0.0
    %669 = vmatprep.subr.mxu0 0.0
    %670 = vmatpush1.msra.mxu0 0.0
    %671 = vmatprep.subr.mxu0 0.0
    %672 = vmatpush1.msra.mxu0 0.0
    %673 = vmatprep.subr.mxu0 0.0
    %674 = vmatpush1.msra.mxu0 0.0
    %675 = vmatprep.subr.mxu0 0.0
    %676 = vmatpush1.msra.mxu0 0.0
    %677 = vmatprep.subr.mxu0 0.0
    %678 = vmatpush1.msra.mxu0 0.0
    %679 = vmatprep.subr.mxu0 0.0
    %680 = vmatpush1.msra.mxu0 0.0
    %681 = vmatprep.subr.mxu0 0.0
    %682 = vmatpush1.msra.mxu0 0.0
    %683 = vmatprep.subr.mxu0 0.0
    %v684 = vand.u32 %v134, 4294901760
    %685 = vmatpush1.msra.mxu0 %v684
    %686 = vmatprep.subr.mxu0 0.0
    %v687 = vand.u32 %v133, 4294901760
    %688 = vmatpush1.msra.mxu0 %v687
    %689 = vmatprep.subr.mxu0 0.0
    %v690 = vand.u32 %v132, 4294901760
    %691 = vmatpush1.msra.mxu0 %v690
    %692 = vmatprep.subr.mxu0 0.0
    %v693 = vand.u32 %v131, 4294901760
    %694 = vmatpush1.msra.mxu0 %v693
    %695 = vmatprep.subr.mxu0 0.0
    %696 = vmatpush2.msra.mxu0 0.0
    %697 = vmatprep.subr.mxu0 0.0
    %698 = vmatpush2.msra.mxu0 0.0
    %699 = vmatprep.subr.mxu0 0.0
    %700 = vmatpush2.msra.mxu0 0.0
    %701 = vmatprep.subr.mxu0 0.0
    %702 = vmatpush2.msra.mxu0 0.0
    %703 = vmatprep.subr.mxu0 0.0
    %704 = vmatpush2.msra.mxu0 0.0
    %705 = vmatprep.subr.mxu0 0.0
    %706 = vmatpush2.msra.mxu0 0.0
    %707 = vmatprep.subr.mxu0 0.0
    %708 = vmatpush2.msra.mxu0 0.0
    %709 = vmatprep.subr.mxu0 0.0
    %710 = vmatpush2.msra.mxu0 0.0
    %711 = vmatprep.subr.mxu0 0.0
    %712 = vmatpush2.msra.mxu0 0.0
    %713 = vmatprep.subr.mxu0 0.0
    %714 = vmatpush2.msra.mxu0 0.0
    %715 = vmatprep.subr.mxu0 0.0
    %716 = vmatpush2.msra.mxu0 0.0
    %717 = vmatprep.subr.mxu0 0.0
    %718 = vmatpush2.msra.mxu0 0.0
    %719 = vmatprep.subr.mxu0 0.0
    %720 = vmatpush2.msra.mxu0 0.0
    %721 = vmatprep.subr.mxu0 0.0
    %722 = vmatpush2.msra.mxu0 0.0
    %723 = vmatprep.subr.mxu0 0.0
    %724 = vmatpush2.msra.mxu0 0.0
    %725 = vmatprep.subr.mxu0 0.0
    %726 = vmatpush2.msra.mxu0 0.0
    %727 = vmatprep.mubr.f32.mxu0 0.0
    %v728 = vand.u32 %v654, 4294901760
    %v729 = vsub.f32 %v654, %v728
    %v730 = vand.u32 %v729, 4294901760
    %v731 = vsub.f32 %v729, %v730
    %v732 = vand.u32 %v731, 4294901760
    %733 = vmatmul.mubr.f32.gmra.mxu0 %v732
    %v734 = vpop.f32.mrf.mxu0
    %v735 = vadd.f32 0.0, %v734
    %v736 = vpop.f32.mrf.mxu0
    %737 = vmatprep.mubr.f32.mxu0 0.0
    %v738 = vand.u32 %v657, 4294901760
    %v739 = vsub.f32 %v657, %v738
    %v740 = vand.u32 %v739, 4294901760
    %v741 = vsub.f32 %v739, %v740
    %v742 = vand.u32 %v741, 4294901760
    %743 = vmatmul.mubr.f32.gmra.mxu0 %v742
    %v744 = vpop.f32.mrf.mxu0
    %v745 = vadd.f32 0.0, %v744
    %v746 = vpop.f32.mrf.mxu0
    %747 = vdwg.mxu0
    %748 = vmatprep.subr.mxu0 0.0
    %749 = vmatpush1.msra.mxu0 0.0
    %750 = vmatprep.subr.mxu0 0.0
    %751 = vmatpush1.msra.mxu0 0.0
    %752 = vmatprep.subr.mxu0 0.0
    %753 = vmatpush1.msra.mxu0 0.0
    %754 = vmatprep.subr.mxu0 0.0
    %755 = vmatpush1.msra.mxu0 0.0
    %756 = vmatprep.subr.mxu0 0.0
    %757 = vmatpush1.msra.mxu0 0.0
    %758 = vmatprep.subr.mxu0 0.0
    %759 = vmatpush1.msra.mxu0 0.0
    %760 = vmatprep.subr.mxu0 0.0
    %761 = vmatpush1.msra.mxu0 0.0
    %762 = vmatprep.subr.mxu0 0.0
    %763 = vmatpush1.msra.mxu0 0.0
    %764 = vmatprep.subr.mxu0 0.0
    %765 = vmatpush1.msra.mxu0 0.0
    %766 = vmatprep.subr.mxu0 0.0
    %767 = vmatpush1.msra.mxu0 0.0
    %768 = vmatprep.subr.mxu0 0.0
    %769 = vmatpush1.msra.mxu0 0.0
    %770 = vmatprep.subr.mxu0 0.0
    %771 = vmatpush1.msra.mxu0 0.0
    %772 = vmatprep.subr.mxu0 0.0
    %v773 = vand.u32 %v134, 4294901760
    %v774 = vsub.f32 %v134, %v773
    %v775 = vand.u32 %v774, 4294901760
    %v776 = vsub.f32 %v774, %v775
    %v777 = vand.u32 %v776, 4294901760
    %778 = vmatpush1.msra.mxu0 %v777
    %779 = vmatprep.subr.mxu0 0.0
    %v780 = vand.u32 %v133, 4294901760
    %v781 = vsub.f32 %v133, %v780
    %v782 = vand.u32 %v781, 4294901760
    %v783 = vsub.f32 %v781, %v782
    %v784 = vand.u32 %v783, 4294901760
    %785 = vmatpush1.msra.mxu0 %v784
    %786 = vmatprep.subr.mxu0 0.0
    %v787 = vand.u32 %v132, 4294901760
    %v788 = vsub.f32 %v132, %v787
    %v789 = vand.u32 %v788, 4294901760
    %v790 = vsub.f32 %v788, %v789
    %v791 = vand.u32 %v790, 4294901760
    %792 = vmatpush1.msra.mxu0 %v791
    %793 = vmatprep.subr.mxu0 0.0
    %v794 = vand.u32 %v131, 4294901760
    %v795 = vsub.f32 %v131, %v794
    %v796 = vand.u32 %v795, 4294901760
    %v797 = vsub.f32 %v795, %v796
    %v798 = vand.u32 %v797, 4294901760
    %799 = vmatpush1.msra.mxu0 %v798
    %800 = vmatprep.subr.mxu0 0.0
    %801 = vmatpush2.msra.mxu0 0.0
    %802 = vmatprep.subr.mxu0 0.0
    %803 = vmatpush2.msra.mxu0 0.0
    %804 = vmatprep.subr.mxu0 0.0
    %805 = vmatpush2.msra.mxu0 0.0
    %806 = vmatprep.subr.mxu0 0.0
    %807 = vmatpush2.msra.mxu0 0.0
    %808 = vmatprep.subr.mxu0 0.0
    %809 = vmatpush2.msra.mxu0 0.0
    %810 = vmatprep.subr.mxu0 0.0
    %811 = vmatpush2.msra.mxu0 0.0
    %812 = vmatprep.subr.mxu0 0.0
    %813 = vmatpush2.msra.mxu0 0.0
    %814 = vmatprep.subr.mxu0 0.0
    %815 = vmatpush2.msra.mxu0 0.0
    %816 = vmatprep.subr.mxu0 0.0
    %817 = vmatpush2.msra.mxu0 0.0
    %818 = vmatprep.subr.mxu0 0.0
    %819 = vmatpush2.msra.mxu0 0.0
    %820 = vmatprep.subr.mxu0 0.0
    %821 = vmatpush2.msra.mxu0 0.0
    %822 = vmatprep.subr.mxu0 0.0
    %823 = vmatpush2.msra.mxu0 0.0
    %824 = vmatprep.subr.mxu0 0.0
    %825 = vmatpush2.msra.mxu0 0.0
    %826 = vmatprep.subr.mxu0 0.0
    %827 = vmatpush2.msra.mxu0 0.0
    %828 = vmatprep.subr.mxu0 0.0
    %829 = vmatpush2.msra.mxu0 0.0
    %830 = vmatprep.subr.mxu0 0.0
    %831 = vmatpush2.msra.mxu0 0.0
    %832 = vmatprep.mubr.f32.mxu0 0.0
    %v833 = vand.u32 %v654, 4294901760
    %834 = vmatmul.mubr.f32.gmra.mxu0 %v833
    %v835 = vpop.f32.mrf.mxu0
    %v836 = vadd.f32 %v735, %v835
    %v837 = vpop.f32.mrf.mxu0
    %838 = vmatprep.mubr.f32.mxu0 0.0
    %v839 = vand.u32 %v657, 4294901760
    %840 = vmatmul.mubr.f32.gmra.mxu0 %v839
    %v841 = vpop.f32.mrf.mxu0
    %v842 = vadd.f32 %v745, %v841
    %v843 = vpop.f32.mrf.mxu0
    %844 = vdwg.mxu0
    %845 = vmatprep.subr.mxu0 0.0
    %846 = vmatpush1.msra.mxu0 0.0
    %847 = vmatprep.subr.mxu0 0.0
    %848 = vmatpush1.msra.mxu0 0.0
    %849 = vmatprep.subr.mxu0 0.0
    %850 = vmatpush1.msra.mxu0 0.0
    %851 = vmatprep.subr.mxu0 0.0
    %852 = vmatpush1.msra.mxu0 0.0
    %853 = vmatprep.subr.mxu0 0.0
    %854 = vmatpush1.msra.mxu0 0.0
    %855 = vmatprep.subr.mxu0 0.0
    %856 = vmatpush1.msra.mxu0 0.0
    %857 = vmatprep.subr.mxu0 0.0
    %858 = vmatpush1.msra.mxu0 0.0
    %859 = vmatprep.subr.mxu0 0.0
    %860 = vmatpush1.msra.mxu0 0.0
    %861 = vmatprep.subr.mxu0 0.0
    %862 = vmatpush1.msra.mxu0 0.0
    %863 = vmatprep.subr.mxu0 0.0
    %864 = vmatpush1.msra.mxu0 0.0
    %865 = vmatprep.subr.mxu0 0.0
    %866 = vmatpush1.msra.mxu0 0.0
    %867 = vmatprep.subr.mxu0 0.0
    %868 = vmatpush1.msra.mxu0 0.0
    %869 = vmatprep.subr.mxu0 0.0
    %v870 = vand.u32 %v134, 4294901760
    %v871 = vsub.f32 %v134, %v870
    %872 = vmatpush1.msra.mxu0 %v871
    %873 = vmatprep.subr.mxu0 0.0
    %v874 = vand.u32 %v133, 4294901760
    %v875 = vsub.f32 %v133, %v874
    %876 = vmatpush1.msra.mxu0 %v875
    %877 = vmatprep.subr.mxu0 0.0
    %v878 = vand.u32 %v132, 4294901760
    %v879 = vsub.f32 %v132, %v878
    %880 = vmatpush1.msra.mxu0 %v879
    %881 = vmatprep.subr.mxu0 0.0
    %v882 = vand.u32 %v131, 4294901760
    %v883 = vsub.f32 %v131, %v882
    %884 = vmatpush1.msra.mxu0 %v883
    %885 = vmatprep.subr.mxu0 0.0
    %886 = vmatpush2.msra.mxu0 0.0
    %887 = vmatprep.subr.mxu0 0.0
    %888 = vmatpush2.msra.mxu0 0.0
    %889 = vmatprep.subr.mxu0 0.0
    %890 = vmatpush2.msra.mxu0 0.0
    %891 = vmatprep.subr.mxu0 0.0
    %892 = vmatpush2.msra.mxu0 0.0
    %893 = vmatprep.subr.mxu0 0.0
    %894 = vmatpush2.msra.mxu0 0.0
    %895 = vmatprep.subr.mxu0 0.0
    %896 = vmatpush2.msra.mxu0 0.0
    %897 = vmatprep.subr.mxu0 0.0
    %898 = vmatpush2.msra.mxu0 0.0
    %899 = vmatprep.subr.mxu0 0.0
    %900 = vmatpush2.msra.mxu0 0.0
    %901 = vmatprep.subr.mxu0 0.0
    %902 = vmatpush2.msra.mxu0 0.0
    %903 = vmatprep.subr.mxu0 0.0
    %904 = vmatpush2.msra.mxu0 0.0
    %905 = vmatprep.subr.mxu0 0.0
    %906 = vmatpush2.msra.mxu0 0.0
    %907 = vmatprep.subr.mxu0 0.0
    %908 = vmatpush2.msra.mxu0 0.0
    %909 = vmatprep.subr.mxu0 0.0
    %910 = vmatpush2.msra.mxu0 0.0
    %911 = vmatprep.subr.mxu0 0.0
    %912 = vmatpush2.msra.mxu0 0.0
    %913 = vmatprep.subr.mxu0 0.0
    %914 = vmatpush2.msra.mxu0 0.0
    %915 = vmatprep.subr.mxu0 0.0
    %916 = vmatpush2.msra.mxu0 0.0
    %917 = vmatprep.mubr.f32.mxu0 0.0
    %v918 = vand.u32 %v654, 4294901760
    %v919 = vsub.f32 %v654, %v918
    %920 = vmatmul.mubr.f32.gmra.mxu0 %v919
    %v921 = vpop.f32.mrf.mxu0
    %v922 = vadd.f32 %v836, %v921
    %v923 = vpop.f32.mrf.mxu0
    %924 = vmatprep.mubr.f32.mxu0 0.0
    %v925 = vand.u32 %v657, 4294901760
    %v926 = vsub.f32 %v657, %v925
    %927 = vmatmul.mubr.f32.gmra.mxu0 %v926
    %v928 = vpop.f32.mrf.mxu0
    %v929 = vadd.f32 %v842, %v928
    %v930 = vpop.f32.mrf.mxu0
    %931 = vdwg.mxu0
    %932 = vmatprep.subr.mxu0 0.0
    %933 = vmatpush1.msra.mxu0 0.0
    %934 = vmatprep.subr.mxu0 0.0
    %935 = vmatpush1.msra.mxu0 0.0
    %936 = vmatprep.subr.mxu0 0.0
    %937 = vmatpush1.msra.mxu0 0.0
    %938 = vmatprep.subr.mxu0 0.0
    %939 = vmatpush1.msra.mxu0 0.0
    %940 = vmatprep.subr.mxu0 0.0
    %941 = vmatpush1.msra.mxu0 0.0
    %942 = vmatprep.subr.mxu0 0.0
    %943 = vmatpush1.msra.mxu0 0.0
    %944 = vmatprep.subr.mxu0 0.0
    %945 = vmatpush1.msra.mxu0 0.0
    %946 = vmatprep.subr.mxu0 0.0
    %947 = vmatpush1.msra.mxu0 0.0
    %948 = vmatprep.subr.mxu0 0.0
    %949 = vmatpush1.msra.mxu0 0.0
    %950 = vmatprep.subr.mxu0 0.0
    %951 = vmatpush1.msra.mxu0 0.0
    %952 = vmatprep.subr.mxu0 0.0
    %953 = vmatpush1.msra.mxu0 0.0
    %954 = vmatprep.subr.mxu0 0.0
    %955 = vmatpush1.msra.mxu0 0.0
    %956 = vmatprep.subr.mxu0 0.0
    %v957 = vand.u32 %v134, 4294901760
    %958 = vmatpush1.msra.mxu0 %v957
    %959 = vmatprep.subr.mxu0 0.0
    %v960 = vand.u32 %v133, 4294901760
    %961 = vmatpush1.msra.mxu0 %v960
    %962 = vmatprep.subr.mxu0 0.0
    %v963 = vand.u32 %v132, 4294901760
    %964 = vmatpush1.msra.mxu0 %v963
    %965 = vmatprep.subr.mxu0 0.0
    %v966 = vand.u32 %v131, 4294901760
    %967 = vmatpush1.msra.mxu0 %v966
    %968 = vmatprep.subr.mxu0 0.0
    %969 = vmatpush2.msra.mxu0 0.0
    %970 = vmatprep.subr.mxu0 0.0
    %971 = vmatpush2.msra.mxu0 0.0
    %972 = vmatprep.subr.mxu0 0.0
    %973 = vmatpush2.msra.mxu0 0.0
    %974 = vmatprep.subr.mxu0 0.0
    %975 = vmatpush2.msra.mxu0 0.0
    %976 = vmatprep.subr.mxu0 0.0
    %977 = vmatpush2.msra.mxu0 0.0
    %978 = vmatprep.subr.mxu0 0.0
    %979 = vmatpush2.msra.mxu0 0.0
    %980 = vmatprep.subr.mxu0 0.0
    %981 = vmatpush2.msra.mxu0 0.0
    %982 = vmatprep.subr.mxu0 0.0
    %983 = vmatpush2.msra.mxu0 0.0
    %984 = vmatprep.subr.mxu0 0.0
    %985 = vmatpush2.msra.mxu0 0.0
    %986 = vmatprep.subr.mxu0 0.0
    %987 = vmatpush2.msra.mxu0 0.0
    %988 = vmatprep.subr.mxu0 0.0
    %989 = vmatpush2.msra.mxu0 0.0
    %990 = vmatprep.subr.mxu0 0.0
    %991 = vmatpush2.msra.mxu0 0.0
    %992 = vmatprep.subr.mxu0 0.0
    %993 = vmatpush2.msra.mxu0 0.0
    %994 = vmatprep.subr.mxu0 0.0
    %995 = vmatpush2.msra.mxu0 0.0
    %996 = vmatprep.subr.mxu0 0.0
    %997 = vmatpush2.msra.mxu0 0.0
    %998 = vmatprep.subr.mxu0 0.0
    %999 = vmatpush2.msra.mxu0 0.0
    %1000 = vmatprep.mubr.f32.mxu0 0.0
    %v1001 = vand.u32 %v654, 4294901760
    %v1002 = vsub.f32 %v654, %v1001
    %v1003 = vand.u32 %v1002, 4294901760
    %1004 = vmatmul.mubr.f32.gmra.mxu0 %v1003
    %v1005 = vpop.f32.mrf.mxu0
    %v1006 = vadd.f32 %v922, %v1005
    %v1007 = vpop.f32.mrf.mxu0
    %1008 = vmatprep.mubr.f32.mxu0 0.0
    %v1009 = vand.u32 %v657, 4294901760
    %v1010 = vsub.f32 %v657, %v1009
    %v1011 = vand.u32 %v1010, 4294901760
    %1012 = vmatmul.mubr.f32.gmra.mxu0 %v1011
    %v1013 = vpop.f32.mrf.mxu0
    %v1014 = vadd.f32 %v929, %v1013
    %v1015 = vpop.f32.mrf.mxu0
    %1016 = vdwg.mxu0
    %1017 = vmatprep.subr.mxu0 0.0
    %1018 = vmatpush1.msra.mxu0 0.0
    %1019 = vmatprep.subr.mxu0 0.0
    %1020 = vmatpush1.msra.mxu0 0.0
    %1021 = vmatprep.subr.mxu0 0.0
    %1022 = vmatpush1.msra.mxu0 0.0
    %1023 = vmatprep.subr.mxu0 0.0
    %1024 = vmatpush1.msra.mxu0 0.0
    %1025 = vmatprep.subr.mxu0 0.0
    %1026 = vmatpush1.msra.mxu0 0.0
    %1027 = vmatprep.subr.mxu0 0.0
    %1028 = vmatpush1.msra.mxu0 0.0
    %1029 = vmatprep.subr.mxu0 0.0
    %1030 = vmatpush1.msra.mxu0 0.0
    %1031 = vmatprep.subr.mxu0 0.0
    %1032 = vmatpush1.msra.mxu0 0.0
    %1033 = vmatprep.subr.mxu0 0.0
    %1034 = vmatpush1.msra.mxu0 0.0
    %1035 = vmatprep.subr.mxu0 0.0
    %1036 = vmatpush1.msra.mxu0 0.0
    %1037 = vmatprep.subr.mxu0 0.0
    %1038 = vmatpush1.msra.mxu0 0.0
    %1039 = vmatprep.subr.mxu0 0.0
    %1040 = vmatpush1.msra.mxu0 0.0
    %1041 = vmatprep.subr.mxu0 0.0
    %v1042 = vand.u32 %v134, 4294901760
    %v1043 = vsub.f32 %v134, %v1042
    %v1044 = vand.u32 %v1043, 4294901760
    %1045 = vmatpush1.msra.mxu0 %v1044
    %1046 = vmatprep.subr.mxu0 0.0
    %v1047 = vand.u32 %v133, 4294901760
    %v1048 = vsub.f32 %v133, %v1047
    %v1049 = vand.u32 %v1048, 4294901760
    %1050 = vmatpush1.msra.mxu0 %v1049
    %1051 = vmatprep.subr.mxu0 0.0
    %v1052 = vand.u32 %v132, 4294901760
    %v1053 = vsub.f32 %v132, %v1052
    %v1054 = vand.u32 %v1053, 4294901760
    %1055 = vmatpush1.msra.mxu0 %v1054
    %1056 = vmatprep.subr.mxu0 0.0
    %v1057 = vand.u32 %v131, 4294901760
    %v1058 = vsub.f32 %v131, %v1057
    %v1059 = vand.u32 %v1058, 4294901760
    %1060 = vmatpush1.msra.mxu0 %v1059
    %1061 = vmatprep.subr.mxu0 0.0
    %1062 = vmatpush2.msra.mxu0 0.0
    %1063 = vmatprep.subr.mxu0 0.0
    %1064 = vmatpush2.msra.mxu0 0.0
    %1065 = vmatprep.subr.mxu0 0.0
    %1066 = vmatpush2.msra.mxu0 0.0
    %1067 = vmatprep.subr.mxu0 0.0
    %1068 = vmatpush2.msra.mxu0 0.0
    %1069 = vmatprep.subr.mxu0 0.0
    %1070 = vmatpush2.msra.mxu0 0.0
    %1071 = vmatprep.subr.mxu0 0.0
    %1072 = vmatpush2.msra.mxu0 0.0
    %1073 = vmatprep.subr.mxu0 0.0
    %1074 = vmatpush2.msra.mxu0 0.0
    %1075 = vmatprep.subr.mxu0 0.0
    %1076 = vmatpush2.msra.mxu0 0.0
    %1077 = vmatprep.subr.mxu0 0.0
    %1078 = vmatpush2.msra.mxu0 0.0
    %1079 = vmatprep.subr.mxu0 0.0
    %1080 = vmatpush2.msra.mxu0 0.0
    %1081 = vmatprep.subr.mxu0 0.0
    %1082 = vmatpush2.msra.mxu0 0.0
    %1083 = vmatprep.subr.mxu0 0.0
    %1084 = vmatpush2.msra.mxu0 0.0
    %1085 = vmatprep.subr.mxu0 0.0
    %1086 = vmatpush2.msra.mxu0 0.0
    %1087 = vmatprep.subr.mxu0 0.0
    %1088 = vmatpush2.msra.mxu0 0.0
    %1089 = vmatprep.subr.mxu0 0.0
    %1090 = vmatpush2.msra.mxu0 0.0
    %1091 = vmatprep.subr.mxu0 0.0
    %1092 = vmatpush2.msra.mxu0 0.0
    %1093 = vmatprep.mubr.f32.mxu0 0.0
    %v1094 = vand.u32 %v654, 4294901760
    %1095 = vmatmul.mubr.f32.gmra.mxu0 %v1094
    %v1096 = vpop.f32.mrf.mxu0
    %v1097 = vadd.f32 %v1006, %v1096
    %v1098 = vpop.f32.mrf.mxu0
    %1099 = vmatprep.mubr.f32.mxu0 0.0
    %v1100 = vand.u32 %v657, 4294901760
    %1101 = vmatmul.mubr.f32.gmra.mxu0 %v1100
    %v1102 = vpop.f32.mrf.mxu0
    %v1103 = vadd.f32 %v1014, %v1102
    %v1104 = vpop.f32.mrf.mxu0
    %1105 = vdwg.mxu0
    %1106 = vmatprep.subr.mxu0 0.0
    %1107 = vmatpush1.msra.mxu0 0.0
    %1108 = vmatprep.subr.mxu0 0.0
    %1109 = vmatpush1.msra.mxu0 0.0
    %1110 = vmatprep.subr.mxu0 0.0
    %1111 = vmatpush1.msra.mxu0 0.0
    %1112 = vmatprep.subr.mxu0 0.0
    %1113 = vmatpush1.msra.mxu0 0.0
    %1114 = vmatprep.subr.mxu0 0.0
    %1115 = vmatpush1.msra.mxu0 0.0
    %1116 = vmatprep.subr.mxu0 0.0
    %1117 = vmatpush1.msra.mxu0 0.0
    %1118 = vmatprep.subr.mxu0 0.0
    %1119 = vmatpush1.msra.mxu0 0.0
    %1120 = vmatprep.subr.mxu0 0.0
    %1121 = vmatpush1.msra.mxu0 0.0
    %1122 = vmatprep.subr.mxu0 0.0
    %1123 = vmatpush1.msra.mxu0 0.0
    %1124 = vmatprep.subr.mxu0 0.0
    %1125 = vmatpush1.msra.mxu0 0.0
    %1126 = vmatprep.subr.mxu0 0.0
    %1127 = vmatpush1.msra.mxu0 0.0
    %1128 = vmatprep.subr.mxu0 0.0
    %1129 = vmatpush1.msra.mxu0 0.0
    %1130 = vmatprep.subr.mxu0 0.0
    %v1131 = vand.u32 %v134, 4294901760
    %1132 = vmatpush1.msra.mxu0 %v1131
    %1133 = vmatprep.subr.mxu0 0.0
    %v1134 = vand.u32 %v133, 4294901760
    %1135 = vmatpush1.msra.mxu0 %v1134
    %1136 = vmatprep.subr.mxu0 0.0
    %v1137 = vand.u32 %v132, 4294901760
    %1138 = vmatpush1.msra.mxu0 %v1137
    %1139 = vmatprep.subr.mxu0 0.0
    %v1140 = vand.u32 %v131, 4294901760
    %1141 = vmatpush1.msra.mxu0 %v1140
    %1142 = vmatprep.subr.mxu0 0.0
    %1143 = vmatpush2.msra.mxu0 0.0
    %1144 = vmatprep.subr.mxu0 0.0
    %1145 = vmatpush2.msra.mxu0 0.0
    %1146 = vmatprep.subr.mxu0 0.0
    %1147 = vmatpush2.msra.mxu0 0.0
    %1148 = vmatprep.subr.mxu0 0.0
    %1149 = vmatpush2.msra.mxu0 0.0
    %1150 = vmatprep.subr.mxu0 0.0
    %1151 = vmatpush2.msra.mxu0 0.0
    %1152 = vmatprep.subr.mxu0 0.0
    %1153 = vmatpush2.msra.mxu0 0.0
    %1154 = vmatprep.subr.mxu0 0.0
    %1155 = vmatpush2.msra.mxu0 0.0
    %1156 = vmatprep.subr.mxu0 0.0
    %1157 = vmatpush2.msra.mxu0 0.0
    %1158 = vmatprep.subr.mxu0 0.0
    %1159 = vmatpush2.msra.mxu0 0.0
    %1160 = vmatprep.subr.mxu0 0.0
    %1161 = vmatpush2.msra.mxu0 0.0
    %1162 = vmatprep.subr.mxu0 0.0
    %1163 = vmatpush2.msra.mxu0 0.0
    %1164 = vmatprep.subr.mxu0 0.0
    %1165 = vmatpush2.msra.mxu0 0.0
    %1166 = vmatprep.subr.mxu0 0.0
    %1167 = vmatpush2.msra.mxu0 0.0
    %1168 = vmatprep.subr.mxu0 0.0
    %1169 = vmatpush2.msra.mxu0 0.0
    %1170 = vmatprep.subr.mxu0 0.0
    %1171 = vmatpush2.msra.mxu0 0.0
    %1172 = vmatprep.subr.mxu0 0.0
    %1173 = vmatpush2.msra.mxu0 0.0
    %1174 = vmatprep.mubr.f32.mxu0 0.0
    %v1175 = vand.u32 %v654, 4294901760
    %1176 = vmatmul.mubr.f32.gmra.mxu0 %v1175
    %v1177 = vpop.f32.mrf.mxu0
    %v1178 = vadd.f32 %v1097, %v1177
    %v1179 = vpop.f32.mrf.mxu0
    %1180 = vmatprep.mubr.f32.mxu0 0.0
    %v1181 = vand.u32 %v657, 4294901760
    %1182 = vmatmul.mubr.f32.gmra.mxu0 %v1181
    %v1183 = vpop.f32.mrf.mxu0
    %v1184 = vadd.f32 %v1103, %v1183
    %v1185 = vpop.f32.mrf.mxu0
    %1186 = vdwg.mxu0
    %1189 = vrot.lane.b32.xlu0 %v127, 96
    %v1190 = vpop.permute.xlu0 %1189
    %1191 = vrot.lane.b32.xlu0 %v128, 96
    %v1192 = vpop.permute.xlu0 %1191
    %1195 = vmatprep.subr.mxu0 0.0
    %1196 = vmatpush1.msra.mxu0 0.0
    %1197 = vmatprep.subr.mxu0 0.0
    %1198 = vmatpush1.msra.mxu0 0.0
    %1199 = vmatprep.subr.mxu0 0.0
    %1200 = vmatpush1.msra.mxu0 0.0
    %1201 = vmatprep.subr.mxu0 0.0
    %1202 = vmatpush1.msra.mxu0 0.0
    %1203 = vmatprep.subr.mxu0 0.0
    %1204 = vmatpush1.msra.mxu0 0.0
    %1205 = vmatprep.subr.mxu0 0.0
    %1206 = vmatpush1.msra.mxu0 0.0
    %1207 = vmatprep.subr.mxu0 0.0
    %1208 = vmatpush1.msra.mxu0 0.0
    %1209 = vmatprep.subr.mxu0 0.0
    %1210 = vmatpush1.msra.mxu0 0.0
    %1211 = vmatprep.subr.mxu0 0.0
    %1212 = vmatpush1.msra.mxu0 0.0
    %1213 = vmatprep.subr.mxu0 0.0
    %1214 = vmatpush1.msra.mxu0 0.0
    %1215 = vmatprep.subr.mxu0 0.0
    %1216 = vmatpush1.msra.mxu0 0.0
    %1217 = vmatprep.subr.mxu0 0.0
    %1218 = vmatpush1.msra.mxu0 0.0
    %1219 = vmatprep.subr.mxu0 0.0
    %1220 = vmatpush1.msra.mxu0 0.0
    %1221 = vmatprep.subr.mxu0 0.0
    %1222 = vmatpush1.msra.mxu0 0.0
    %1223 = vmatprep.subr.mxu0 0.0
    %v1224 = vand.u32 %v1192, 4294901760
    %1225 = vmatpush1.msra.mxu0 %v1224
    %1226 = vmatprep.subr.mxu0 0.0
    %v1227 = vand.u32 %v1190, 4294901760
    %1228 = vmatpush1.msra.mxu0 %v1227
    %1229 = vmatprep.subr.mxu0 0.0
    %1230 = vmatpush2.msra.mxu0 0.0
    %1231 = vmatprep.subr.mxu0 0.0
    %1232 = vmatpush2.msra.mxu0 0.0
    %1233 = vmatprep.subr.mxu0 0.0
    %1234 = vmatpush2.msra.mxu0 0.0
    %1235 = vmatprep.subr.mxu0 0.0
    %1236 = vmatpush2.msra.mxu0 0.0
    %1237 = vmatprep.subr.mxu0 0.0
    %1238 = vmatpush2.msra.mxu0 0.0
    %1239 = vmatprep.subr.mxu0 0.0
    %1240 = vmatpush2.msra.mxu0 0.0
    %1241 = vmatprep.subr.mxu0 0.0
    %1242 = vmatpush2.msra.mxu0 0.0
    %1243 = vmatprep.subr.mxu0 0.0
    %1244 = vmatpush2.msra.mxu0 0.0
    %1245 = vmatprep.subr.mxu0 0.0
    %1246 = vmatpush2.msra.mxu0 0.0
    %1247 = vmatprep.subr.mxu0 0.0
    %1248 = vmatpush2.msra.mxu0 0.0
    %1249 = vmatprep.subr.mxu0 0.0
    %1250 = vmatpush2.msra.mxu0 0.0
    %1251 = vmatprep.subr.mxu0 0.0
    %1252 = vmatpush2.msra.mxu0 0.0
    %1253 = vmatprep.subr.mxu0 0.0
    %1254 = vmatpush2.msra.mxu0 0.0
    %1255 = vmatprep.subr.mxu0 0.0
    %1256 = vmatpush2.msra.mxu0 0.0
    %1257 = vmatprep.subr.mxu0 0.0
    %1258 = vmatpush2.msra.mxu0 0.0
    %1259 = vmatprep.subr.mxu0 0.0
    %1260 = vmatpush2.msra.mxu0 0.0
    %1261 = vmatprep.mubr.f32.mxu0 0.0
    %v1262 = vand.u32 %v145, 4294901760
    %v1263 = vsub.f32 %v145, %v1262
    %v1264 = vand.u32 %v1263, 4294901760
    %v1265 = vsub.f32 %v1263, %v1264
    %v1266 = vand.u32 %v1265, 4294901760
    %1267 = vmatmul.mubr.f32.gmra.mxu0 %v1266
    %v1268 = vpop.f32.mrf.mxu0
    %v1269 = vadd.f32 0.0, %v1268
    %v1270 = vpop.f32.mrf.mxu0
    %1271 = vmatprep.mubr.f32.mxu0 0.0
    %v1272 = vand.u32 %v148, 4294901760
    %v1273 = vsub.f32 %v148, %v1272
    %v1274 = vand.u32 %v1273, 4294901760
    %v1275 = vsub.f32 %v1273, %v1274
    %v1276 = vand.u32 %v1275, 4294901760
    %1277 = vmatmul.mubr.f32.gmra.mxu0 %v1276
    %v1278 = vpop.f32.mrf.mxu0
    %v1279 = vadd.f32 0.0, %v1278
    %v1280 = vpop.f32.mrf.mxu0
    %1281 = vdwg.mxu0
    %1282 = vmatprep.subr.mxu0 0.0
    %1283 = vmatpush1.msra.mxu0 0.0
    %1284 = vmatprep.subr.mxu0 0.0
    %1285 = vmatpush1.msra.mxu0 0.0
    %1286 = vmatprep.subr.mxu0 0.0
    %1287 = vmatpush1.msra.mxu0 0.0
    %1288 = vmatprep.subr.mxu0 0.0
    %1289 = vmatpush1.msra.mxu0 0.0
    %1290 = vmatprep.subr.mxu0 0.0
    %1291 = vmatpush1.msra.mxu0 0.0
    %1292 = vmatprep.subr.mxu0 0.0
    %1293 = vmatpush1.msra.mxu0 0.0
    %1294 = vmatprep.subr.mxu0 0.0
    %1295 = vmatpush1.msra.mxu0 0.0
    %1296 = vmatprep.subr.mxu0 0.0
    %1297 = vmatpush1.msra.mxu0 0.0
    %1298 = vmatprep.subr.mxu0 0.0
    %1299 = vmatpush1.msra.mxu0 0.0
    %1300 = vmatprep.subr.mxu0 0.0
    %1301 = vmatpush1.msra.mxu0 0.0
    %1302 = vmatprep.subr.mxu0 0.0
    %1303 = vmatpush1.msra.mxu0 0.0
    %1304 = vmatprep.subr.mxu0 0.0
    %1305 = vmatpush1.msra.mxu0 0.0
    %1306 = vmatprep.subr.mxu0 0.0
    %1307 = vmatpush1.msra.mxu0 0.0
    %1308 = vmatprep.subr.mxu0 0.0
    %1309 = vmatpush1.msra.mxu0 0.0
    %1310 = vmatprep.subr.mxu0 0.0
    %v1311 = vand.u32 %v1192, 4294901760
    %v1312 = vsub.f32 %v1192, %v1311
    %v1313 = vand.u32 %v1312, 4294901760
    %v1314 = vsub.f32 %v1312, %v1313
    %v1315 = vand.u32 %v1314, 4294901760
    %1316 = vmatpush1.msra.mxu0 %v1315
    %1317 = vmatprep.subr.mxu0 0.0
    %v1318 = vand.u32 %v1190, 4294901760
    %v1319 = vsub.f32 %v1190, %v1318
    %v1320 = vand.u32 %v1319, 4294901760
    %v1321 = vsub.f32 %v1319, %v1320
    %v1322 = vand.u32 %v1321, 4294901760
    %1323 = vmatpush1.msra.mxu0 %v1322
    %1324 = vmatprep.subr.mxu0 0.0
    %1325 = vmatpush2.msra.mxu0 0.0
    %1326 = vmatprep.subr.mxu0 0.0
    %1327 = vmatpush2.msra.mxu0 0.0
    %1328 = vmatprep.subr.mxu0 0.0
    %1329 = vmatpush2.msra.mxu0 0.0
    %1330 = vmatprep.subr.mxu0 0.0
    %1331 = vmatpush2.msra.mxu0 0.0
    %1332 = vmatprep.subr.mxu0 0.0
    %1333 = vmatpush2.msra.mxu0 0.0
    %1334 = vmatprep.subr.mxu0 0.0
    %1335 = vmatpush2.msra.mxu0 0.0
    %1336 = vmatprep.subr.mxu0 0.0
    %1337 = vmatpush2.msra.mxu0 0.0
    %1338 = vmatprep.subr.mxu0 0.0
    %1339 = vmatpush2.msra.mxu0 0.0
    %1340 = vmatprep.subr.mxu0 0.0
    %1341 = vmatpush2.msra.mxu0 0.0
    %1342 = vmatprep.subr.mxu0 0.0
    %1343 = vmatpush2.msra.mxu0 0.0
    %1344 = vmatprep.subr.mxu0 0.0
    %1345 = vmatpush2.msra.mxu0 0.0
    %1346 = vmatprep.subr.mxu0 0.0
    %1347 = vmatpush2.msra.mxu0 0.0
    %1348 = vmatprep.subr.mxu0 0.0
    %1349 = vmatpush2.msra.mxu0 0.0
    %1350 = vmatprep.subr.mxu0 0.0
    %1351 = vmatpush2.msra.mxu0 0.0
    %1352 = vmatprep.subr.mxu0 0.0
    %1353 = vmatpush2.msra.mxu0 0.0
    %1354 = vmatprep.subr.mxu0 0.0
    %1355 = vmatpush2.msra.mxu0 0.0
    %1356 = vmatprep.mubr.f32.mxu0 0.0
    %v1357 = vand.u32 %v145, 4294901760
    %1358 = vmatmul.mubr.f32.gmra.mxu0 %v1357
    %v1359 = vpop.f32.mrf.mxu0
    %v1360 = vadd.f32 %v1269, %v1359
    %v1361 = vpop.f32.mrf.mxu0
    %1362 = vmatprep.mubr.f32.mxu0 0.0
    %v1363 = vand.u32 %v148, 4294901760
    %1364 = vmatmul.mubr.f32.gmra.mxu0 %v1363
    %v1365 = vpop.f32.mrf.mxu0
    %v1366 = vadd.f32 %v1279, %v1365
    %v1367 = vpop.f32.mrf.mxu0
    %1368 = vdwg.mxu0
    %1369 = vmatprep.subr.mxu0 0.0
    %1370 = vmatpush1.msra.mxu0 0.0
    %1371 = vmatprep.subr.mxu0 0.0
    %1372 = vmatpush1.msra.mxu0 0.0
    %1373 = vmatprep.subr.mxu0 0.0
    %1374 = vmatpush1.msra.mxu0 0.0
    %1375 = vmatprep.subr.mxu0 0.0
    %1376 = vmatpush1.msra.mxu0 0.0
    %1377 = vmatprep.subr.mxu0 0.0
    %1378 = vmatpush1.msra.mxu0 0.0
    %1379 = vmatprep.subr.mxu0 0.0
    %1380 = vmatpush1.msra.mxu0 0.0
    %1381 = vmatprep.subr.mxu0 0.0
    %1382 = vmatpush1.msra.mxu0 0.0
    %1383 = vmatprep.subr.mxu0 0.0
    %1384 = vmatpush1.msra.mxu0 0.0
    %1385 = vmatprep.subr.mxu0 0.0
    %1386 = vmatpush1.msra.mxu0 0.0
    %1387 = vmatprep.subr.mxu0 0.0
    %1388 = vmatpush1.msra.mxu0 0.0
    %1389 = vmatprep.subr.mxu0 0.0
    %1390 = vmatpush1.msra.mxu0 0.0
    %1391 = vmatprep.subr.mxu0 0.0
    %1392 = vmatpush1.msra.mxu0 0.0
    %1393 = vmatprep.subr.mxu0 0.0
    %1394 = vmatpush1.msra.mxu0 0.0
    %1395 = vmatprep.subr.mxu0 0.0
    %1396 = vmatpush1.msra.mxu0 0.0
    %1397 = vmatprep.subr.mxu0 0.0
    %v1398 = vand.u32 %v1192, 4294901760
    %v1399 = vsub.f32 %v1192, %v1398
    %1400 = vmatpush1.msra.mxu0 %v1399
    %1401 = vmatprep.subr.mxu0 0.0
    %v1402 = vand.u32 %v1190, 4294901760
    %v1403 = vsub.f32 %v1190, %v1402
    %1404 = vmatpush1.msra.mxu0 %v1403
    %1405 = vmatprep.subr.mxu0 0.0
    %1406 = vmatpush2.msra.mxu0 0.0
    %1407 = vmatprep.subr.mxu0 0.0
    %1408 = vmatpush2.msra.mxu0 0.0
    %1409 = vmatprep.subr.mxu0 0.0
    %1410 = vmatpush2.msra.mxu0 0.0
    %1411 = vmatprep.subr.mxu0 0.0
    %1412 = vmatpush2.msra.mxu0 0.0
    %1413 = vmatprep.subr.mxu0 0.0
    %1414 = vmatpush2.msra.mxu0 0.0
    %1415 = vmatprep.subr.mxu0 0.0
    %1416 = vmatpush2.msra.mxu0 0.0
    %1417 = vmatprep.subr.mxu0 0.0
    %1418 = vmatpush2.msra.mxu0 0.0
    %1419 = vmatprep.subr.mxu0 0.0
    %1420 = vmatpush2.msra.mxu0 0.0
    %1421 = vmatprep.subr.mxu0 0.0
    %1422 = vmatpush2.msra.mxu0 0.0
    %1423 = vmatprep.subr.mxu0 0.0
    %1424 = vmatpush2.msra.mxu0 0.0
    %1425 = vmatprep.subr.mxu0 0.0
    %1426 = vmatpush2.msra.mxu0 0.0
    %1427 = vmatprep.subr.mxu0 0.0
    %1428 = vmatpush2.msra.mxu0 0.0
    %1429 = vmatprep.subr.mxu0 0.0
    %1430 = vmatpush2.msra.mxu0 0.0
    %1431 = vmatprep.subr.mxu0 0.0
    %1432 = vmatpush2.msra.mxu0 0.0
    %1433 = vmatprep.subr.mxu0 0.0
    %1434 = vmatpush2.msra.mxu0 0.0
    %1435 = vmatprep.subr.mxu0 0.0
    %1436 = vmatpush2.msra.mxu0 0.0
    %1437 = vmatprep.mubr.f32.mxu0 0.0
    %v1438 = vand.u32 %v145, 4294901760
    %v1439 = vsub.f32 %v145, %v1438
    %1440 = vmatmul.mubr.f32.gmra.mxu0 %v1439
    %v1441 = vpop.f32.mrf.mxu0
    %v1442 = vadd.f32 %v1360, %v1441
    %v1443 = vpop.f32.mrf.mxu0
    %1444 = vmatprep.mubr.f32.mxu0 0.0
    %v1445 = vand.u32 %v148, 4294901760
    %v1446 = vsub.f32 %v148, %v1445
    %1447 = vmatmul.mubr.f32.gmra.mxu0 %v1446
    %v1448 = vpop.f32.mrf.mxu0
    %v1449 = vadd.f32 %v1366, %v1448
    %v1450 = vpop.f32.mrf.mxu0
    %1451 = vdwg.mxu0
    %1452 = vmatprep.subr.mxu0 0.0
    %1453 = vmatpush1.msra.mxu0 0.0
    %1454 = vmatprep.subr.mxu0 0.0
    %1455 = vmatpush1.msra.mxu0 0.0
    %1456 = vmatprep.subr.mxu0 0.0
    %1457 = vmatpush1.msra.mxu0 0.0
    %1458 = vmatprep.subr.mxu0 0.0
    %1459 = vmatpush1.msra.mxu0 0.0
    %1460 = vmatprep.subr.mxu0 0.0
    %1461 = vmatpush1.msra.mxu0 0.0
    %1462 = vmatprep.subr.mxu0 0.0
    %1463 = vmatpush1.msra.mxu0 0.0
    %1464 = vmatprep.subr.mxu0 0.0
    %1465 = vmatpush1.msra.mxu0 0.0
    %1466 = vmatprep.subr.mxu0 0.0
    %1467 = vmatpush1.msra.mxu0 0.0
    %1468 = vmatprep.subr.mxu0 0.0
    %1469 = vmatpush1.msra.mxu0 0.0
    %1470 = vmatprep.subr.mxu0 0.0
    %1471 = vmatpush1.msra.mxu0 0.0
    %1472 = vmatprep.subr.mxu0 0.0
    %1473 = vmatpush1.msra.mxu0 0.0
    %1474 = vmatprep.subr.mxu0 0.0
    %1475 = vmatpush1.msra.mxu0 0.0
    %1476 = vmatprep.subr.mxu0 0.0
    %1477 = vmatpush1.msra.mxu0 0.0
    %1478 = vmatprep.subr.mxu0 0.0
    %1479 = vmatpush1.msra.mxu0 0.0
    %1480 = vmatprep.subr.mxu0 0.0
    %v1481 = vand.u32 %v1192, 4294901760
    %1482 = vmatpush1.msra.mxu0 %v1481
    %1483 = vmatprep.subr.mxu0 0.0
    %v1484 = vand.u32 %v1190, 4294901760
    %1485 = vmatpush1.msra.mxu0 %v1484
    %1486 = vmatprep.subr.mxu0 0.0
    %1487 = vmatpush2.msra.mxu0 0.0
    %1488 = vmatprep.subr.mxu0 0.0
    %1489 = vmatpush2.msra.mxu0 0.0
    %1490 = vmatprep.subr.mxu0 0.0
    %1491 = vmatpush2.msra.mxu0 0.0
    %1492 = vmatprep.subr.mxu0 0.0
    %1493 = vmatpush2.msra.mxu0 0.0
    %1494 = vmatprep.subr.mxu0 0.0
    %1495 = vmatpush2.msra.mxu0 0.0
    %1496 = vmatprep.subr.mxu0 0.0
    %1497 = vmatpush2.msra.mxu0 0.0
    %1498 = vmatprep.subr.mxu0 0.0
    %1499 = vmatpush2.msra.mxu0 0.0
    %1500 = vmatprep.subr.mxu0 0.0
    %1501 = vmatpush2.msra.mxu0 0.0
    %1502 = vmatprep.subr.mxu0 0.0
    %1503 = vmatpush2.msra.mxu0 0.0
    %1504 = vmatprep.subr.mxu0 0.0
    %1505 = vmatpush2.msra.mxu0 0.0
    %1506 = vmatprep.subr.mxu0 0.0
    %1507 = vmatpush2.msra.mxu0 0.0
    %1508 = vmatprep.subr.mxu0 0.0
    %1509 = vmatpush2.msra.mxu0 0.0
    %1510 = vmatprep.subr.mxu0 0.0
    %1511 = vmatpush2.msra.mxu0 0.0
    %1512 = vmatprep.subr.mxu0 0.0
    %1513 = vmatpush2.msra.mxu0 0.0
    %1514 = vmatprep.subr.mxu0 0.0
    %1515 = vmatpush2.msra.mxu0 0.0
    %1516 = vmatprep.subr.mxu0 0.0
    %1517 = vmatpush2.msra.mxu0 0.0
    %1518 = vmatprep.mubr.f32.mxu0 0.0
    %v1519 = vand.u32 %v145, 4294901760
    %v1520 = vsub.f32 %v145, %v1519
    %v1521 = vand.u32 %v1520, 4294901760
    %1522 = vmatmul.mubr.f32.gmra.mxu0 %v1521
    %v1523 = vpop.f32.mrf.mxu0
    %v1524 = vadd.f32 %v1442, %v1523
    %v1525 = vpop.f32.mrf.mxu0
    %1526 = vmatprep.mubr.f32.mxu0 0.0
    %v1527 = vand.u32 %v148, 4294901760
    %v1528 = vsub.f32 %v148, %v1527
    %v1529 = vand.u32 %v1528, 4294901760
    %1530 = vmatmul.mubr.f32.gmra.mxu0 %v1529
    %v1531 = vpop.f32.mrf.mxu0
    %v1532 = vadd.f32 %v1449, %v1531
    %v1533 = vpop.f32.mrf.mxu0
    %1534 = vdwg.mxu0
    %1535 = vmatprep.subr.mxu0 0.0
    %1536 = vmatpush1.msra.mxu0 0.0
    %1537 = vmatprep.subr.mxu0 0.0
    %1538 = vmatpush1.msra.mxu0 0.0
    %1539 = vmatprep.subr.mxu0 0.0
    %1540 = vmatpush1.msra.mxu0 0.0
    %1541 = vmatprep.subr.mxu0 0.0
    %1542 = vmatpush1.msra.mxu0 0.0
    %1543 = vmatprep.subr.mxu0 0.0
    %1544 = vmatpush1.msra.mxu0 0.0
    %1545 = vmatprep.subr.mxu0 0.0
    %1546 = vmatpush1.msra.mxu0 0.0
    %1547 = vmatprep.subr.mxu0 0.0
    %1548 = vmatpush1.msra.mxu0 0.0
    %1549 = vmatprep.subr.mxu0 0.0
    %1550 = vmatpush1.msra.mxu0 0.0
    %1551 = vmatprep.subr.mxu0 0.0
    %1552 = vmatpush1.msra.mxu0 0.0
    %1553 = vmatprep.subr.mxu0 0.0
    %1554 = vmatpush1.msra.mxu0 0.0
    %1555 = vmatprep.subr.mxu0 0.0
    %1556 = vmatpush1.msra.mxu0 0.0
    %1557 = vmatprep.subr.mxu0 0.0
    %1558 = vmatpush1.msra.mxu0 0.0
    %1559 = vmatprep.subr.mxu0 0.0
    %1560 = vmatpush1.msra.mxu0 0.0
    %1561 = vmatprep.subr.mxu0 0.0
    %1562 = vmatpush1.msra.mxu0 0.0
    %1563 = vmatprep.subr.mxu0 0.0
    %v1564 = vand.u32 %v1192, 4294901760
    %v1565 = vsub.f32 %v1192, %v1564
    %v1566 = vand.u32 %v1565, 4294901760
    %1567 = vmatpush1.msra.mxu0 %v1566
    %1568 = vmatprep.subr.mxu0 0.0
    %v1569 = vand.u32 %v1190, 4294901760
    %v1570 = vsub.f32 %v1190, %v1569
    %v1571 = vand.u32 %v1570, 4294901760
    %1572 = vmatpush1.msra.mxu0 %v1571
    %1573 = vmatprep.subr.mxu0 0.0
    %1574 = vmatpush2.msra.mxu0 0.0
    %1575 = vmatprep.subr.mxu0 0.0
    %1576 = vmatpush2.msra.mxu0 0.0
    %1577 = vmatprep.subr.mxu0 0.0
    %1578 = vmatpush2.msra.mxu0 0.0
    %1579 = vmatprep.subr.mxu0 0.0
    %1580 = vmatpush2.msra.mxu0 0.0
    %1581 = vmatprep.subr.mxu0 0.0
    %1582 = vmatpush2.msra.mxu0 0.0
    %1583 = vmatprep.subr.mxu0 0.0
    %1584 = vmatpush2.msra.mxu0 0.0
    %1585 = vmatprep.subr.mxu0 0.0
    %1586 = vmatpush2.msra.mxu0 0.0
    %1587 = vmatprep.subr.mxu0 0.0
    %1588 = vmatpush2.msra.mxu0 0.0
    %1589 = vmatprep.subr.mxu0 0.0
    %1590 = vmatpush2.msra.mxu0 0.0
    %1591 = vmatprep.subr.mxu0 0.0
    %1592 = vmatpush2.msra.mxu0 0.0
    %1593 = vmatprep.subr.mxu0 0.0
    %1594 = vmatpush2.msra.mxu0 0.0
    %1595 = vmatprep.subr.mxu0 0.0
    %1596 = vmatpush2.msra.mxu0 0.0
    %1597 = vmatprep.subr.mxu0 0.0
    %1598 = vmatpush2.msra.mxu0 0.0
    %1599 = vmatprep.subr.mxu0 0.0
    %1600 = vmatpush2.msra.mxu0 0.0
    %1601 = vmatprep.subr.mxu0 0.0
    %1602 = vmatpush2.msra.mxu0 0.0
    %1603 = vmatprep.subr.mxu0 0.0
    %1604 = vmatpush2.msra.mxu0 0.0
    %1605 = vmatprep.mubr.f32.mxu0 0.0
    %v1606 = vand.u32 %v145, 4294901760
    %1607 = vmatmul.mubr.f32.gmra.mxu0 %v1606
    %v1608 = vpop.f32.mrf.mxu0
    %v1609 = vadd.f32 %v1524, %v1608
    %v1610 = vpop.f32.mrf.mxu0
    %1611 = vmatprep.mubr.f32.mxu0 0.0
    %v1612 = vand.u32 %v148, 4294901760
    %1613 = vmatmul.mubr.f32.gmra.mxu0 %v1612
    %v1614 = vpop.f32.mrf.mxu0
    %v1615 = vadd.f32 %v1532, %v1614
    %v1616 = vpop.f32.mrf.mxu0
    %1617 = vdwg.mxu0
    %1618 = vmatprep.subr.mxu0 0.0
    %1619 = vmatpush1.msra.mxu0 0.0
    %1620 = vmatprep.subr.mxu0 0.0
    %1621 = vmatpush1.msra.mxu0 0.0
    %1622 = vmatprep.subr.mxu0 0.0
    %1623 = vmatpush1.msra.mxu0 0.0
    %1624 = vmatprep.subr.mxu0 0.0
    %1625 = vmatpush1.msra.mxu0 0.0
    %1626 = vmatprep.subr.mxu0 0.0
    %1627 = vmatpush1.msra.mxu0 0.0
    %1628 = vmatprep.subr.mxu0 0.0
    %1629 = vmatpush1.msra.mxu0 0.0
    %1630 = vmatprep.subr.mxu0 0.0
    %1631 = vmatpush1.msra.mxu0 0.0
    %1632 = vmatprep.subr.mxu0 0.0
    %1633 = vmatpush1.msra.mxu0 0.0
    %1634 = vmatprep.subr.mxu0 0.0
    %1635 = vmatpush1.msra.mxu0 0.0
    %1636 = vmatprep.subr.mxu0 0.0
    %1637 = vmatpush1.msra.mxu0 0.0
    %1638 = vmatprep.subr.mxu0 0.0
    %1639 = vmatpush1.msra.mxu0 0.0
    %1640 = vmatprep.subr.mxu0 0.0
    %1641 = vmatpush1.msra.mxu0 0.0
    %1642 = vmatprep.subr.mxu0 0.0
    %1643 = vmatpush1.msra.mxu0 0.0
    %1644 = vmatprep.subr.mxu0 0.0
    %1645 = vmatpush1.msra.mxu0 0.0
    %1646 = vmatprep.subr.mxu0 0.0
    %v1647 = vand.u32 %v1192, 4294901760
    %1648 = vmatpush1.msra.mxu0 %v1647
    %1649 = vmatprep.subr.mxu0 0.0
    %v1650 = vand.u32 %v1190, 4294901760
    %1651 = vmatpush1.msra.mxu0 %v1650
    %1652 = vmatprep.subr.mxu0 0.0
    %1653 = vmatpush2.msra.mxu0 0.0
    %1654 = vmatprep.subr.mxu0 0.0
    %1655 = vmatpush2.msra.mxu0 0.0
    %1656 = vmatprep.subr.mxu0 0.0
    %1657 = vmatpush2.msra.mxu0 0.0
    %1658 = vmatprep.subr.mxu0 0.0
    %1659 = vmatpush2.msra.mxu0 0.0
    %1660 = vmatprep.subr.mxu0 0.0
    %1661 = vmatpush2.msra.mxu0 0.0
    %1662 = vmatprep.subr.mxu0 0.0
    %1663 = vmatpush2.msra.mxu0 0.0
    %1664 = vmatprep.subr.mxu0 0.0
    %1665 = vmatpush2.msra.mxu0 0.0
    %1666 = vmatprep.subr.mxu0 0.0
    %1667 = vmatpush2.msra.mxu0 0.0
    %1668 = vmatprep.subr.mxu0 0.0
    %1669 = vmatpush2.msra.mxu0 0.0
    %1670 = vmatprep.subr.mxu0 0.0
    %1671 = vmatpush2.msra.mxu0 0.0
    %1672 = vmatprep.subr.mxu0 0.0
    %1673 = vmatpush2.msra.mxu0 0.0
    %1674 = vmatprep.subr.mxu0 0.0
    %1675 = vmatpush2.msra.mxu0 0.0
    %1676 = vmatprep.subr.mxu0 0.0
    %1677 = vmatpush2.msra.mxu0 0.0
    %1678 = vmatprep.subr.mxu0 0.0
    %1679 = vmatpush2.msra.mxu0 0.0
    %1680 = vmatprep.subr.mxu0 0.0
    %1681 = vmatpush2.msra.mxu0 0.0
    %1682 = vmatprep.subr.mxu0 0.0
    %1683 = vmatpush2.msra.mxu0 0.0
    %1684 = vmatprep.mubr.f32.mxu0 0.0
    %v1685 = vand.u32 %v145, 4294901760
    %1686 = vmatmul.mubr.f32.gmra.mxu0 %v1685
    %v1687 = vpop.f32.mrf.mxu0
    %v1688 = vadd.f32 %v1609, %v1687
    %v1689 = vpop.f32.mrf.mxu0
    %1690 = vmatprep.mubr.f32.mxu0 0.0
    %v1691 = vand.u32 %v148, 4294901760
    %1692 = vmatmul.mubr.f32.gmra.mxu0 %v1691
    %v1693 = vpop.f32.mrf.mxu0
    %v1694 = vadd.f32 %v1615, %v1693
    %v1695 = vpop.f32.mrf.mxu0
    %1696 = vdwg.mxu0
    %v1698 = vsel %vm652, %v1688, 0
    %v1701 = vsel %vm652, %v1694, 0
    %1703 = vmatprep.subr.mxu0 0.0
    %1704 = vmatpush1.msra.mxu0 0.0
    %1705 = vmatprep.subr.mxu0 0.0
    %1706 = vmatpush1.msra.mxu0 0.0
    %1707 = vmatprep.subr.mxu0 0.0
    %1708 = vmatpush1.msra.mxu0 0.0
    %1709 = vmatprep.subr.mxu0 0.0
    %1710 = vmatpush1.msra.mxu0 0.0
    %1711 = vmatprep.subr.mxu0 0.0
    %1712 = vmatpush1.msra.mxu0 0.0
    %1713 = vmatprep.subr.mxu0 0.0
    %1714 = vmatpush1.msra.mxu0 0.0
    %1715 = vmatprep.subr.mxu0 0.0
    %1716 = vmatpush1.msra.mxu0 0.0
    %1717 = vmatprep.subr.mxu0 0.0
    %1718 = vmatpush1.msra.mxu0 0.0
    %1719 = vmatprep.subr.mxu0 0.0
    %1720 = vmatpush1.msra.mxu0 0.0
    %1721 = vmatprep.subr.mxu0 0.0
    %1722 = vmatpush1.msra.mxu0 0.0
    %1723 = vmatprep.subr.mxu0 0.0
    %1724 = vmatpush1.msra.mxu0 0.0
    %1725 = vmatprep.subr.mxu0 0.0
    %1726 = vmatpush1.msra.mxu0 0.0
    %1727 = vmatprep.subr.mxu0 0.0
    %v1728 = vand.u32 %v134, 4294901760
    %1729 = vmatpush1.msra.mxu0 %v1728
    %1730 = vmatprep.subr.mxu0 0.0
    %v1731 = vand.u32 %v133, 4294901760
    %1732 = vmatpush1.msra.mxu0 %v1731
    %1733 = vmatprep.subr.mxu0 0.0
    %v1734 = vand.u32 %v132, 4294901760
    %1735 = vmatpush1.msra.mxu0 %v1734
    %1736 = vmatprep.subr.mxu0 0.0
    %v1737 = vand.u32 %v131, 4294901760
    %1738 = vmatpush1.msra.mxu0 %v1737
    %1739 = vmatprep.subr.mxu0 0.0
    %1740 = vmatpush2.msra.mxu0 0.0
    %1741 = vmatprep.subr.mxu0 0.0
    %1742 = vmatpush2.msra.mxu0 0.0
    %1743 = vmatprep.subr.mxu0 0.0
    %1744 = vmatpush2.msra.mxu0 0.0
    %1745 = vmatprep.subr.mxu0 0.0
    %1746 = vmatpush2.msra.mxu0 0.0
    %1747 = vmatprep.subr.mxu0 0.0
    %1748 = vmatpush2.msra.mxu0 0.0
    %1749 = vmatprep.subr.mxu0 0.0
    %1750 = vmatpush2.msra.mxu0 0.0
    %1751 = vmatprep.subr.mxu0 0.0
    %1752 = vmatpush2.msra.mxu0 0.0
    %1753 = vmatprep.subr.mxu0 0.0
    %1754 = vmatpush2.msra.mxu0 0.0
    %1755 = vmatprep.subr.mxu0 0.0
    %1756 = vmatpush2.msra.mxu0 0.0
    %1757 = vmatprep.subr.mxu0 0.0
    %1758 = vmatpush2.msra.mxu0 0.0
    %1759 = vmatprep.subr.mxu0 0.0
    %1760 = vmatpush2.msra.mxu0 0.0
    %1761 = vmatprep.subr.mxu0 0.0
    %1762 = vmatpush2.msra.mxu0 0.0
    %1763 = vmatprep.subr.mxu0 0.0
    %1764 = vmatpush2.msra.mxu0 0.0
    %1765 = vmatprep.subr.mxu0 0.0
    %1766 = vmatpush2.msra.mxu0 0.0
    %1767 = vmatprep.subr.mxu0 0.0
    %1768 = vmatpush2.msra.mxu0 0.0
    %1769 = vmatprep.subr.mxu0 0.0
    %1770 = vmatpush2.msra.mxu0 0.0
    %1771 = vmatprep.mubr.f32.mxu0 0.0
    %v1772 = vand.u32 %v1698, 4294901760
    %v1773 = vsub.f32 %v1698, %v1772
    %v1774 = vand.u32 %v1773, 4294901760
    %v1775 = vsub.f32 %v1773, %v1774
    %v1776 = vand.u32 %v1775, 4294901760
    %1777 = vmatmul.mubr.f32.gmra.mxu0 %v1776
    %v1778 = vpop.f32.mrf.mxu0
    %v1779 = vadd.f32 0.0, %v1778
    %v1780 = vpop.f32.mrf.mxu0
    %1781 = vmatprep.mubr.f32.mxu0 0.0
    %v1782 = vand.u32 %v1701, 4294901760
    %v1783 = vsub.f32 %v1701, %v1782
    %v1784 = vand.u32 %v1783, 4294901760
    %v1785 = vsub.f32 %v1783, %v1784
    %v1786 = vand.u32 %v1785, 4294901760
    %1787 = vmatmul.mubr.f32.gmra.mxu0 %v1786
    %v1788 = vpop.f32.mrf.mxu0
    %v1789 = vadd.f32 0.0, %v1788
    %v1790 = vpop.f32.mrf.mxu0
    %1791 = vdwg.mxu0
    %1792 = vmatprep.subr.mxu0 0.0
    %1793 = vmatpush1.msra.mxu0 0.0
    %1794 = vmatprep.subr.mxu0 0.0
    %1795 = vmatpush1.msra.mxu0 0.0
    %1796 = vmatprep.subr.mxu0 0.0
    %1797 = vmatpush1.msra.mxu0 0.0
    %1798 = vmatprep.subr.mxu0 0.0
    %1799 = vmatpush1.msra.mxu0 0.0
    %1800 = vmatprep.subr.mxu0 0.0
    %1801 = vmatpush1.msra.mxu0 0.0
    %1802 = vmatprep.subr.mxu0 0.0
    %1803 = vmatpush1.msra.mxu0 0.0
    %1804 = vmatprep.subr.mxu0 0.0
    %1805 = vmatpush1.msra.mxu0 0.0
    %1806 = vmatprep.subr.mxu0 0.0
    %1807 = vmatpush1.msra.mxu0 0.0
    %1808 = vmatprep.subr.mxu0 0.0
    %1809 = vmatpush1.msra.mxu0 0.0
    %1810 = vmatprep.subr.mxu0 0.0
    %1811 = vmatpush1.msra.mxu0 0.0
    %1812 = vmatprep.subr.mxu0 0.0
    %1813 = vmatpush1.msra.mxu0 0.0
    %1814 = vmatprep.subr.mxu0 0.0
    %1815 = vmatpush1.msra.mxu0 0.0
    %1816 = vmatprep.subr.mxu0 0.0
    %v1817 = vand.u32 %v134, 4294901760
    %v1818 = vsub.f32 %v134, %v1817
    %v1819 = vand.u32 %v1818, 4294901760
    %v1820 = vsub.f32 %v1818, %v1819
    %v1821 = vand.u32 %v1820, 4294901760
    %1822 = vmatpush1.msra.mxu0 %v1821
    %1823 = vmatprep.subr.mxu0 0.0
    %v1824 = vand.u32 %v133, 4294901760
    %v1825 = vsub.f32 %v133, %v1824
    %v1826 = vand.u32 %v1825, 4294901760
    %v1827 = vsub.f32 %v1825, %v1826
    %v1828 = vand.u32 %v1827, 4294901760
    %1829 = vmatpush1.msra.mxu0 %v1828
    %1830 = vmatprep.subr.mxu0 0.0
    %v1831 = vand.u32 %v132, 4294901760
    %v1832 = vsub.f32 %v132, %v1831
    %v1833 = vand.u32 %v1832, 4294901760
    %v1834 = vsub.f32 %v1832, %v1833
    %v1835 = vand.u32 %v1834, 4294901760
    %1836 = vmatpush1.msra.mxu0 %v1835
    %1837 = vmatprep.subr.mxu0 0.0
    %v1838 = vand.u32 %v131, 4294901760
    %v1839 = vsub.f32 %v131, %v1838
    %v1840 = vand.u32 %v1839, 4294901760
    %v1841 = vsub.f32 %v1839, %v1840
    %v1842 = vand.u32 %v1841, 4294901760
    %1843 = vmatpush1.msra.mxu0 %v1842
    %1844 = vmatprep.subr.mxu0 0.0
    %1845 = vmatpush2.msra.mxu0 0.0
    %1846 = vmatprep.subr.mxu0 0.0
    %1847 = vmatpush2.msra.mxu0 0.0
    %1848 = vmatprep.subr.mxu0 0.0
    %1849 = vmatpush2.msra.mxu0 0.0
    %1850 = vmatprep.subr.mxu0 0.0
    %1851 = vmatpush2.msra.mxu0 0.0
    %1852 = vmatprep.subr.mxu0 0.0
    %1853 = vmatpush2.msra.mxu0 0.0
    %1854 = vmatprep.subr.mxu0 0.0
    %1855 = vmatpush2.msra.mxu0 0.0
    %1856 = vmatprep.subr.mxu0 0.0
    %1857 = vmatpush2.msra.mxu0 0.0
    %1858 = vmatprep.subr.mxu0 0.0
    %1859 = vmatpush2.msra.mxu0 0.0
    %1860 = vmatprep.subr.mxu0 0.0
    %1861 = vmatpush2.msra.mxu0 0.0
    %1862 = vmatprep.subr.mxu0 0.0
    %1863 = vmatpush2.msra.mxu0 0.0
    %1864 = vmatprep.subr.mxu0 0.0
    %1865 = vmatpush2.msra.mxu0 0.0
    %1866 = vmatprep.subr.mxu0 0.0
    %1867 = vmatpush2.msra.mxu0 0.0
    %1868 = vmatprep.subr.mxu0 0.0
    %1869 = vmatpush2.msra.mxu0 0.0
    %1870 = vmatprep.subr.mxu0 0.0
    %1871 = vmatpush2.msra.mxu0 0.0
    %1872 = vmatprep.subr.mxu0 0.0
    %1873 = vmatpush2.msra.mxu0 0.0
    %1874 = vmatprep.subr.mxu0 0.0
    %1875 = vmatpush2.msra.mxu0 0.0
    %1876 = vmatprep.mubr.f32.mxu0 0.0
    %v1877 = vand.u32 %v1698, 4294901760
    %1878 = vmatmul.mubr.f32.gmra.mxu0 %v1877
    %v1879 = vpop.f32.mrf.mxu0
    %v1880 = vadd.f32 %v1779, %v1879
    %v1881 = vpop.f32.mrf.mxu0
    %1882 = vmatprep.mubr.f32.mxu0 0.0
    %v1883 = vand.u32 %v1701, 4294901760
    %1884 = vmatmul.mubr.f32.gmra.mxu0 %v1883
    %v1885 = vpop.f32.mrf.mxu0
    %v1886 = vadd.f32 %v1789, %v1885
    %v1887 = vpop.f32.mrf.mxu0
    %1888 = vdwg.mxu0
    %1889 = vmatprep.subr.mxu0 0.0
    %1890 = vmatpush1.msra.mxu0 0.0
    %1891 = vmatprep.subr.mxu0 0.0
    %1892 = vmatpush1.msra.mxu0 0.0
    %1893 = vmatprep.subr.mxu0 0.0
    %1894 = vmatpush1.msra.mxu0 0.0
    %1895 = vmatprep.subr.mxu0 0.0
    %1896 = vmatpush1.msra.mxu0 0.0
    %1897 = vmatprep.subr.mxu0 0.0
    %1898 = vmatpush1.msra.mxu0 0.0
    %1899 = vmatprep.subr.mxu0 0.0
    %1900 = vmatpush1.msra.mxu0 0.0
    %1901 = vmatprep.subr.mxu0 0.0
    %1902 = vmatpush1.msra.mxu0 0.0
    %1903 = vmatprep.subr.mxu0 0.0
    %1904 = vmatpush1.msra.mxu0 0.0
    %1905 = vmatprep.subr.mxu0 0.0
    %1906 = vmatpush1.msra.mxu0 0.0
    %1907 = vmatprep.subr.mxu0 0.0
    %1908 = vmatpush1.msra.mxu0 0.0
    %1909 = vmatprep.subr.mxu0 0.0
    %1910 = vmatpush1.msra.mxu0 0.0
    %1911 = vmatprep.subr.mxu0 0.0
    %1912 = vmatpush1.msra.mxu0 0.0
    %1913 = vmatprep.subr.mxu0 0.0
    %v1914 = vand.u32 %v134, 4294901760
    %v1915 = vsub.f32 %v134, %v1914
    %1916 = vmatpush1.msra.mxu0 %v1915
    %1917 = vmatprep.subr.mxu0 0.0
    %v1918 = vand.u32 %v133, 4294901760
    %v1919 = vsub.f32 %v133, %v1918
    %1920 = vmatpush1.msra.mxu0 %v1919
    %1921 = vmatprep.subr.mxu0 0.0
    %v1922 = vand.u32 %v132, 4294901760
    %v1923 = vsub.f32 %v132, %v1922
    %1924 = vmatpush1.msra.mxu0 %v1923
    %1925 = vmatprep.subr.mxu0 0.0
    %v1926 = vand.u32 %v131, 4294901760
    %v1927 = vsub.f32 %v131, %v1926
    %1928 = vmatpush1.msra.mxu0 %v1927
    %1929 = vmatprep.subr.mxu0 0.0
    %1930 = vmatpush2.msra.mxu0 0.0
    %1931 = vmatprep.subr.mxu0 0.0
    %1932 = vmatpush2.msra.mxu0 0.0
    %1933 = vmatprep.subr.mxu0 0.0
    %1934 = vmatpush2.msra.mxu0 0.0
    %1935 = vmatprep.subr.mxu0 0.0
    %1936 = vmatpush2.msra.mxu0 0.0
    %1937 = vmatprep.subr.mxu0 0.0
    %1938 = vmatpush2.msra.mxu0 0.0
    %1939 = vmatprep.subr.mxu0 0.0
    %1940 = vmatpush2.msra.mxu0 0.0
    %1941 = vmatprep.subr.mxu0 0.0
    %1942 = vmatpush2.msra.mxu0 0.0
    %1943 = vmatprep.subr.mxu0 0.0
    %1944 = vmatpush2.msra.mxu0 0.0
    %1945 = vmatprep.subr.mxu0 0.0
    %1946 = vmatpush2.msra.mxu0 0.0
    %1947 = vmatprep.subr.mxu0 0.0
    %1948 = vmatpush2.msra.mxu0 0.0
    %1949 = vmatprep.subr.mxu0 0.0
    %1950 = vmatpush2.msra.mxu0 0.0
    %1951 = vmatprep.subr.mxu0 0.0
    %1952 = vmatpush2.msra.mxu0 0.0
    %1953 = vmatprep.subr.mxu0 0.0
    %1954 = vmatpush2.msra.mxu0 0.0
    %1955 = vmatprep.subr.mxu0 0.0
    %1956 = vmatpush2.msra.mxu0 0.0
    %1957 = vmatprep.subr.mxu0 0.0
    %1958 = vmatpush2.msra.mxu0 0.0
    %1959 = vmatprep.subr.mxu0 0.0
    %1960 = vmatpush2.msra.mxu0 0.0
    %1961 = vmatprep.mubr.f32.mxu0 0.0
    %v1962 = vand.u32 %v1698, 4294901760
    %v1963 = vsub.f32 %v1698, %v1962
    %1964 = vmatmul.mubr.f32.gmra.mxu0 %v1963
    %v1965 = vpop.f32.mrf.mxu0
    %v1966 = vadd.f32 %v1880, %v1965
    %v1967 = vpop.f32.mrf.mxu0
    %1968 = vmatprep.mubr.f32.mxu0 0.0
    %v1969 = vand.u32 %v1701, 4294901760
    %v1970 = vsub.f32 %v1701, %v1969
    %1971 = vmatmul.mubr.f32.gmra.mxu0 %v1970
    %v1972 = vpop.f32.mrf.mxu0
    %v1973 = vadd.f32 %v1886, %v1972
    %v1974 = vpop.f32.mrf.mxu0
    %1975 = vdwg.mxu0
    %1976 = vmatprep.subr.mxu0 0.0
    %1977 = vmatpush1.msra.mxu0 0.0
    %1978 = vmatprep.subr.mxu0 0.0
    %1979 = vmatpush1.msra.mxu0 0.0
    %1980 = vmatprep.subr.mxu0 0.0
    %1981 = vmatpush1.msra.mxu0 0.0
    %1982 = vmatprep.subr.mxu0 0.0
    %1983 = vmatpush1.msra.mxu0 0.0
    %1984 = vmatprep.subr.mxu0 0.0
    %1985 = vmatpush1.msra.mxu0 0.0
    %1986 = vmatprep.subr.mxu0 0.0
    %1987 = vmatpush1.msra.mxu0 0.0
    %1988 = vmatprep.subr.mxu0 0.0
    %1989 = vmatpush1.msra.mxu0 0.0
    %1990 = vmatprep.subr.mxu0 0.0
    %1991 = vmatpush1.msra.mxu0 0.0
    %1992 = vmatprep.subr.mxu0 0.0
    %1993 = vmatpush1.msra.mxu0 0.0
    %1994 = vmatprep.subr.mxu0 0.0
    %1995 = vmatpush1.msra.mxu0 0.0
    %1996 = vmatprep.subr.mxu0 0.0
    %1997 = vmatpush1.msra.mxu0 0.0
    %1998 = vmatprep.subr.mxu0 0.0
    %1999 = vmatpush1.msra.mxu0 0.0
    %2000 = vmatprep.subr.mxu0 0.0
    %v2001 = vand.u32 %v134, 4294901760
    %2002 = vmatpush1.msra.mxu0 %v2001
    %2003 = vmatprep.subr.mxu0 0.0
    %v2004 = vand.u32 %v133, 4294901760
    %2005 = vmatpush1.msra.mxu0 %v2004
    %2006 = vmatprep.subr.mxu0 0.0
    %v2007 = vand.u32 %v132, 4294901760
    %2008 = vmatpush1.msra.mxu0 %v2007
    %2009 = vmatprep.subr.mxu0 0.0
    %v2010 = vand.u32 %v131, 4294901760
    %2011 = vmatpush1.msra.mxu0 %v2010
    %2012 = vmatprep.subr.mxu0 0.0
    %2013 = vmatpush2.msra.mxu0 0.0
    %2014 = vmatprep.subr.mxu0 0.0
    %2015 = vmatpush2.msra.mxu0 0.0
    %2016 = vmatprep.subr.mxu0 0.0
    %2017 = vmatpush2.msra.mxu0 0.0
    %2018 = vmatprep.subr.mxu0 0.0
    %2019 = vmatpush2.msra.mxu0 0.0
    %2020 = vmatprep.subr.mxu0 0.0
    %2021 = vmatpush2.msra.mxu0 0.0
    %2022 = vmatprep.subr.mxu0 0.0
    %2023 = vmatpush2.msra.mxu0 0.0
    %2024 = vmatprep.subr.mxu0 0.0
    %2025 = vmatpush2.msra.mxu0 0.0
    %2026 = vmatprep.subr.mxu0 0.0
    %2027 = vmatpush2.msra.mxu0 0.0
    %2028 = vmatprep.subr.mxu0 0.0
    %2029 = vmatpush2.msra.mxu0 0.0
    %2030 = vmatprep.subr.mxu0 0.0
    %2031 = vmatpush2.msra.mxu0 0.0
    %2032 = vmatprep.subr.mxu0 0.0
    %2033 = vmatpush2.msra.mxu0 0.0
    %2034 = vmatprep.subr.mxu0 0.0
    %2035 = vmatpush2.msra.mxu0 0.0
    %2036 = vmatprep.subr.mxu0 0.0
    %2037 = vmatpush2.msra.mxu0 0.0
    %2038 = vmatprep.subr.mxu0 0.0
    %2039 = vmatpush2.msra.mxu0 0.0
    %2040 = vmatprep.subr.mxu0 0.0
    %2041 = vmatpush2.msra.mxu0 0.0
    %2042 = vmatprep.subr.mxu0 0.0
    %2043 = vmatpush2.msra.mxu0 0.0
    %2044 = vmatprep.mubr.f32.mxu0 0.0
    %v2045 = vand.u32 %v1698, 4294901760
    %v2046 = vsub.f32 %v1698, %v2045
    %v2047 = vand.u32 %v2046, 4294901760
    %2048 = vmatmul.mubr.f32.gmra.mxu0 %v2047
    %v2049 = vpop.f32.mrf.mxu0
    %v2050 = vadd.f32 %v1966, %v2049
    %v2051 = vpop.f32.mrf.mxu0
    %2052 = vmatprep.mubr.f32.mxu0 0.0
    %v2053 = vand.u32 %v1701, 4294901760
    %v2054 = vsub.f32 %v1701, %v2053
    %v2055 = vand.u32 %v2054, 4294901760
    %2056 = vmatmul.mubr.f32.gmra.mxu0 %v2055
    %v2057 = vpop.f32.mrf.mxu0
    %v2058 = vadd.f32 %v1973, %v2057
    %v2059 = vpop.f32.mrf.mxu0
    %2060 = vdwg.mxu0
    %2061 = vmatprep.subr.mxu0 0.0
    %2062 = vmatpush1.msra.mxu0 0.0
    %2063 = vmatprep.subr.mxu0 0.0
    %2064 = vmatpush1.msra.mxu0 0.0
    %2065 = vmatprep.subr.mxu0 0.0
    %2066 = vmatpush1.msra.mxu0 0.0
    %2067 = vmatprep.subr.mxu0 0.0
    %2068 = vmatpush1.msra.mxu0 0.0
    %2069 = vmatprep.subr.mxu0 0.0
    %2070 = vmatpush1.msra.mxu0 0.0
    %2071 = vmatprep.subr.mxu0 0.0
    %2072 = vmatpush1.msra.mxu0 0.0
    %2073 = vmatprep.subr.mxu0 0.0
    %2074 = vmatpush1.msra.mxu0 0.0
    %2075 = vmatprep.subr.mxu0 0.0
    %2076 = vmatpush1.msra.mxu0 0.0
    %2077 = vmatprep.subr.mxu0 0.0
    %2078 = vmatpush1.msra.mxu0 0.0
    %2079 = vmatprep.subr.mxu0 0.0
    %2080 = vmatpush1.msra.mxu0 0.0
    %2081 = vmatprep.subr.mxu0 0.0
    %2082 = vmatpush1.msra.mxu0 0.0
    %2083 = vmatprep.subr.mxu0 0.0
    %2084 = vmatpush1.msra.mxu0 0.0
    %2085 = vmatprep.subr.mxu0 0.0
    %v2086 = vand.u32 %v134, 4294901760
    %v2087 = vsub.f32 %v134, %v2086
    %v2088 = vand.u32 %v2087, 4294901760
    %2089 = vmatpush1.msra.mxu0 %v2088
    %2090 = vmatprep.subr.mxu0 0.0
    %v2091 = vand.u32 %v133, 4294901760
    %v2092 = vsub.f32 %v133, %v2091
    %v2093 = vand.u32 %v2092, 4294901760
    %2094 = vmatpush1.msra.mxu0 %v2093
    %2095 = vmatprep.subr.mxu0 0.0
    %v2096 = vand.u32 %v132, 4294901760
    %v2097 = vsub.f32 %v132, %v2096
    %v2098 = vand.u32 %v2097, 4294901760
    %2099 = vmatpush1.msra.mxu0 %v2098
    %2100 = vmatprep.subr.mxu0 0.0
    %v2101 = vand.u32 %v131, 4294901760
    %v2102 = vsub.f32 %v131, %v2101
    %v2103 = vand.u32 %v2102, 4294901760
    %2104 = vmatpush1.msra.mxu0 %v2103
    %2105 = vmatprep.subr.mxu0 0.0
    %2106 = vmatpush2.msra.mxu0 0.0
    %2107 = vmatprep.subr.mxu0 0.0
    %2108 = vmatpush2.msra.mxu0 0.0
    %2109 = vmatprep.subr.mxu0 0.0
    %2110 = vmatpush2.msra.mxu0 0.0
    %2111 = vmatprep.subr.mxu0 0.0
    %2112 = vmatpush2.msra.mxu0 0.0
    %2113 = vmatprep.subr.mxu0 0.0
    %2114 = vmatpush2.msra.mxu0 0.0
    %2115 = vmatprep.subr.mxu0 0.0
    %2116 = vmatpush2.msra.mxu0 0.0
    %2117 = vmatprep.subr.mxu0 0.0
    %2118 = vmatpush2.msra.mxu0 0.0
    %2119 = vmatprep.subr.mxu0 0.0
    %2120 = vmatpush2.msra.mxu0 0.0
    %2121 = vmatprep.subr.mxu0 0.0
    %2122 = vmatpush2.msra.mxu0 0.0
    %2123 = vmatprep.subr.mxu0 0.0
    %2124 = vmatpush2.msra.mxu0 0.0
    %2125 = vmatprep.subr.mxu0 0.0
    %2126 = vmatpush2.msra.mxu0 0.0
    %2127 = vmatprep.subr.mxu0 0.0
    %2128 = vmatpush2.msra.mxu0 0.0
    %2129 = vmatprep.subr.mxu0 0.0
    %2130 = vmatpush2.msra.mxu0 0.0
    %2131 = vmatprep.subr.mxu0 0.0
    %2132 = vmatpush2.msra.mxu0 0.0
    %2133 = vmatprep.subr.mxu0 0.0
    %2134 = vmatpush2.msra.mxu0 0.0
    %2135 = vmatprep.subr.mxu0 0.0
    %2136 = vmatpush2.msra.mxu0 0.0
    %2137 = vmatprep.mubr.f32.mxu0 0.0
    %v2138 = vand.u32 %v1698, 4294901760
    %2139 = vmatmul.mubr.f32.gmra.mxu0 %v2138
    %v2140 = vpop.f32.mrf.mxu0
    %v2141 = vadd.f32 %v2050, %v2140
    %v2142 = vpop.f32.mrf.mxu0
    %2143 = vmatprep.mubr.f32.mxu0 0.0
    %v2144 = vand.u32 %v1701, 4294901760
    %2145 = vmatmul.mubr.f32.gmra.mxu0 %v2144
    %v2146 = vpop.f32.mrf.mxu0
    %v2147 = vadd.f32 %v2058, %v2146
    %v2148 = vpop.f32.mrf.mxu0
    %2149 = vdwg.mxu0
    %2150 = vmatprep.subr.mxu0 0.0
    %2151 = vmatpush1.msra.mxu0 0.0
    %2152 = vmatprep.subr.mxu0 0.0
    %2153 = vmatpush1.msra.mxu0 0.0
    %2154 = vmatprep.subr.mxu0 0.0
    %2155 = vmatpush1.msra.mxu0 0.0
    %2156 = vmatprep.subr.mxu0 0.0
    %2157 = vmatpush1.msra.mxu0 0.0
    %2158 = vmatprep.subr.mxu0 0.0
    %2159 = vmatpush1.msra.mxu0 0.0
    %2160 = vmatprep.subr.mxu0 0.0
    %2161 = vmatpush1.msra.mxu0 0.0
    %2162 = vmatprep.subr.mxu0 0.0
    %2163 = vmatpush1.msra.mxu0 0.0
    %2164 = vmatprep.subr.mxu0 0.0
    %2165 = vmatpush1.msra.mxu0 0.0
    %2166 = vmatprep.subr.mxu0 0.0
    %2167 = vmatpush1.msra.mxu0 0.0
    %2168 = vmatprep.subr.mxu0 0.0
    %2169 = vmatpush1.msra.mxu0 0.0
    %2170 = vmatprep.subr.mxu0 0.0
    %2171 = vmatpush1.msra.mxu0 0.0
    %2172 = vmatprep.subr.mxu0 0.0
    %2173 = vmatpush1.msra.mxu0 0.0
    %2174 = vmatprep.subr.mxu0 0.0
    %v2175 = vand.u32 %v134, 4294901760
    %2176 = vmatpush1.msra.mxu0 %v2175
    %2177 = vmatprep.subr.mxu0 0.0
    %v2178 = vand.u32 %v133, 4294901760
    %2179 = vmatpush1.msra.mxu0 %v2178
    %2180 = vmatprep.subr.mxu0 0.0
    %v2181 = vand.u32 %v132, 4294901760
    %2182 = vmatpush1.msra.mxu0 %v2181
    %2183 = vmatprep.subr.mxu0 0.0
    %v2184 = vand.u32 %v131, 4294901760
    %2185 = vmatpush1.msra.mxu0 %v2184
    %2186 = vmatprep.subr.mxu0 0.0
    %2187 = vmatpush2.msra.mxu0 0.0
    %2188 = vmatprep.subr.mxu0 0.0
    %2189 = vmatpush2.msra.mxu0 0.0
    %2190 = vmatprep.subr.mxu0 0.0
    %2191 = vmatpush2.msra.mxu0 0.0
    %2192 = vmatprep.subr.mxu0 0.0
    %2193 = vmatpush2.msra.mxu0 0.0
    %2194 = vmatprep.subr.mxu0 0.0
    %2195 = vmatpush2.msra.mxu0 0.0
    %2196 = vmatprep.subr.mxu0 0.0
    %2197 = vmatpush2.msra.mxu0 0.0
    %2198 = vmatprep.subr.mxu0 0.0
    %2199 = vmatpush2.msra.mxu0 0.0
    %2200 = vmatprep.subr.mxu0 0.0
    %2201 = vmatpush2.msra.mxu0 0.0
    %2202 = vmatprep.subr.mxu0 0.0
    %2203 = vmatpush2.msra.mxu0 0.0
    %2204 = vmatprep.subr.mxu0 0.0
    %2205 = vmatpush2.msra.mxu0 0.0
    %2206 = vmatprep.subr.mxu0 0.0
    %2207 = vmatpush2.msra.mxu0 0.0
    %2208 = vmatprep.subr.mxu0 0.0
    %2209 = vmatpush2.msra.mxu0 0.0
    %2210 = vmatprep.subr.mxu0 0.0
    %2211 = vmatpush2.msra.mxu0 0.0
    %2212 = vmatprep.subr.mxu0 0.0
    %2213 = vmatpush2.msra.mxu0 0.0
    %2214 = vmatprep.subr.mxu0 0.0
    %2215 = vmatpush2.msra.mxu0 0.0
    %2216 = vmatprep.subr.mxu0 0.0
    %2217 = vmatpush2.msra.mxu0 0.0
    %2218 = vmatprep.mubr.f32.mxu0 0.0
    %v2219 = vand.u32 %v1698, 4294901760
    %2220 = vmatmul.mubr.f32.gmra.mxu0 %v2219
    %v2221 = vpop.f32.mrf.mxu0
    %v2222 = vadd.f32 %v2141, %v2221
    %v2223 = vpop.f32.mrf.mxu0
    %2224 = vmatprep.mubr.f32.mxu0 0.0
    %v2225 = vand.u32 %v1701, 4294901760
    %2226 = vmatmul.mubr.f32.gmra.mxu0 %v2225
    %v2227 = vpop.f32.mrf.mxu0
    %v2228 = vadd.f32 %v2147, %v2227
    %v2229 = vpop.f32.mrf.mxu0
    %2230 = vdwg.mxu0
    %2235 = vrot.lane.b32.xlu0 %v1178, 32
    %v2236 = vpop.permute.xlu0 %2235
    %2237 = vrot.lane.b32.xlu0 %v1184, 32
    %v2238 = vpop.permute.xlu0 %2237
    %2239 = vrot.lane.b32.xlu0 %v2222, 32
    %v2240 = vpop.permute.xlu0 %2239
    %2241 = vrot.lane.b32.xlu0 %v2228, 32
    %v2242 = vpop.permute.xlu0 %2241
    %v2247 = vsel %vm652, %v125, %v2236
    %v2248 = vsel %vm652, %v126, %v2238
    %v2249 = vsel %vm652, %v127, %v2240
    %v2250 = vsel %vm652, %v128, %v2242
    %v2251 = vlaneseq
    %v2252 = vshrl.u32 %v2251, 7
    %v2253 = vadd.s32 %v2252, 8
    %v2254 = vadd.s32 %v2252, 16
    %v2255 = vadd.s32 %v2252, 24
    %vm2256 = vcmp.lt.s32.totalorder %v2252, 0
    %v2257 = vsub.s32 0, %v2252
    %v2258 = vsel %vm2256, %v2257, %v2252
    %v2259 = vshrl.u32 %v2258, 4
    %v2260 = vand.u32 %v2258, 15
    %v2261 = vsub.s32 0, %v2260
    %v2262 = vsel %vm2256, %v2261, %v2260
    %vm2263 = vcmp.lt.s32.totalorder %v2253, 0
    %v2264 = vsub.s32 0, %v2253
    %v2265 = vsel %vm2263, %v2264, %v2253
    %v2266 = vshrl.u32 %v2265, 4
    %v2267 = vand.u32 %v2265, 15
    %v2268 = vsub.s32 0, %v2267
    %v2269 = vsel %vm2263, %v2268, %v2267
    %vm2270 = vcmp.lt.s32.totalorder %v2254, 0
    %v2271 = vsub.s32 0, %v2254
    %v2272 = vsel %vm2270, %v2271, %v2254
    %v2273 = vshrl.u32 %v2272, 4
    %v2274 = vand.u32 %v2272, 15
    %v2275 = vsub.s32 0, %v2274
    %v2276 = vsel %vm2270, %v2275, %v2274
    %vm2277 = vcmp.lt.s32.totalorder %v2255, 0
    %v2278 = vsub.s32 0, %v2255
    %v2279 = vsel %vm2277, %v2278, %v2255
    %v2280 = vshrl.u32 %v2279, 4
    %v2281 = vand.u32 %v2279, 15
    %v2282 = vsub.s32 0, %v2281
    %v2283 = vsel %vm2277, %v2282, %v2281
    %vm2284 = vcmp.ne.s32.totalorder %v2262, 0
    %vm2285 = vcmp.ne.s32.totalorder %v2269, 0
    %vm2286 = vcmp.ne.s32.totalorder %v2276, 0
    %vm2287 = vcmp.ne.s32.totalorder %v2283, 0
    %vm2288 = vcmp.lt.s32.totalorder %v2262, 0
    %vm2289 = vcmp.lt.s32.totalorder %v2269, 0
    %vm2290 = vcmp.lt.s32.totalorder %v2276, 0
    %vm2291 = vcmp.lt.s32.totalorder %v2283, 0
    %vm2292 = vmand %vm2288, %vm2284
    %vm2293 = vmand %vm2289, %vm2285
    %vm2294 = vmand %vm2290, %vm2286
    %vm2295 = vmand %vm2291, %vm2287
    %v2296 = vadd.s32 %v2262, 16
    %v2297 = vadd.s32 %v2269, 16
    %v2298 = vadd.s32 %v2276, 16
    %v2299 = vadd.s32 %v2283, 16
    %v2300 = vsel %vm2292, %v2296, %v2262
    %v2301 = vsel %vm2293, %v2297, %v2269
    %v2302 = vsel %vm2294, %v2298, %v2276
    %v2303 = vsel %vm2295, %v2299, %v2283
    %vm2304 = vcmp.eq.s32.totalorder %v2300, 0
    %vm2305 = vcmp.eq.s32.totalorder %v2301, 0
    %vm2306 = vcmp.eq.s32.totalorder %v2302, 0
    %vm2307 = vcmp.eq.s32.totalorder %v2303, 0
    %v2308 = vsel %vm2304, 0.0, 1.0
    %v2309 = vsel %vm2305, 0.0, 1.0
    %v2310 = vsel %vm2306, 0.0, 1.0
    %v2311 = vsel %vm2307, 0.0, 1.0
    %vm2312 = vcmp.eq.s32.totalorder %v2300, 15
    %vm2313 = vcmp.eq.s32.totalorder %v2301, 15
    %vm2314 = vcmp.eq.s32.totalorder %v2302, 15
    %vm2315 = vcmp.eq.s32.totalorder %v2303, 15
    %v2316 = vsel %vm2312, 0.0, 1.0
    %v2317 = vsel %vm2313, 0.0, 1.0
    %v2318 = vsel %vm2314, 0.0, 1.0
    %v2319 = vsel %vm2315, 0.0, 1.0
    %v2320 = vld [vmem:[#allocation5] sm:$0xff]
    %v2321 = vld [vmem:[#allocation5 + $0x8] sm:$0x1]
    %v2322 = vld [vmem:[#allocation7] sm:$0x1]
    %v2323 = vrot.slane %v2247, 7
    %v2324 = vrot.slane %v2248, 7
    %v2325 = vrot.slane %v2249, 7
    %v2326 = vrot.slane %v2250, 7
    %vm2327 = vcmp.lt.s32.totalorder %v2252, 1
    %v2328 = vsel %vm2327, %v2325, %v2326
    %v2329 = vsel %vm2327, %v2324, %v2325
    %v2330 = vsel %vm2327, %v2323, %v2324
    %v2331 = vsel %vm2327, %v2326, %v2323
    %v2332 = vmul.f32 %v2308, %v2331
    %v2333 = vmul.f32 %v2309, %v2330
    %v2334 = vmul.f32 %v2310, %v2329
    %v2335 = vmul.f32 %v2311, %v2328
    %v2336 = vrot.slane %v2247, 1
    %v2337 = vrot.slane %v2248, 1
    %v2338 = vrot.slane %v2249, 1
    %v2339 = vrot.slane %v2250, 1
    %vm2340 = vcmp.lt.s32.totalorder %v2252, 7
    %v2341 = vsel %vm2340, %v2338, %v2339
    %v2342 = vsel %vm2340, %v2337, %v2338
    %v2343 = vsel %vm2340, %v2336, %v2337
    %v2344 = vsel %vm2340, %v2339, %v2336
    %v2345 = vmul.f32 %v2316, %v2343
    %v2346 = vmul.f32 %v2317, %v2342
    %v2347 = vmul.f32 %v2318, %v2341
    %v2348 = vmul.f32 %v2319, %v2344
    %v2349 = vlaneseq
    %v2350 = vshrl.u32 %v2349, 7
    %v2351 = vsub.s32 4, %v2350
    %v2352 = vrot.slane %v2320, %v2351
    %v2353 = vmul.f32 %v2352, %v2247
    %v2354 = vmul.f32 %v2352, %v2248
    %v2355 = vmul.f32 %v2352, %v2249
    %v2356 = vmul.f32 %v2352, %v2250
    %v2358 = vlaneseq
    %v2359 = vshrl.u32 %v2358, 7
    %v2360 = vsub.s32 0, %v2359
    %v2361 = vrot.slane %v2322, %v2360
    %v2363 = vadd.f32 %v2353, %v2361
    %v2364 = vadd.f32 %v2354, %v2361
    %v2365 = vadd.f32 %v2355, %v2361
    %v2366 = vadd.f32 %v2356, %v2361
    %vm2367 = vcmask 1048064
    %2368 = vrot.lane.b32.xlu0 %v2332, 64
    %v2369 = vpop.permute.xlu0 %2368
    %v2370 = vsel %vm2367, %v2369, %v2332
    %2371 = vrot.lane.b32.xlu0 %v2333, 64
    %v2372 = vpop.permute.xlu0 %2371
    %v2373 = vsel %vm2367, %v2372, %v2333
    %2374 = vrot.lane.b32.xlu0 %v2334, 64
    %v2375 = vpop.permute.xlu0 %2374
    %v2376 = vsel %vm2367, %v2375, %v2334
    %2377 = vrot.lane.b32.xlu0 %v2335, 64
    %v2378 = vpop.permute.xlu0 %2377
    %v2379 = vsel %vm2367, %v2378, %v2335
    %2380 = vrot.lane.b32.xlu0 %v2370, 64
    %v2381 = vpop.permute.xlu0 %2380
    %2382 = vrot.lane.b32.xlu0 %v2373, 64
    %v2383 = vpop.permute.xlu0 %2382
    %2384 = vrot.lane.b32.xlu0 %v2376, 64
    %v2385 = vpop.permute.xlu0 %2384
    %2386 = vrot.lane.b32.xlu0 %v2379, 64
    %v2387 = vpop.permute.xlu0 %2386
    %v2388 = vsel %vm2367, %v2381, %v2332
    %v2389 = vsel %vm2367, %v2383, %v2333
    %v2390 = vsel %vm2367, %v2385, %v2334
    %v2391 = vsel %vm2367, %v2387, %v2335
    %v2392 = vlaneseq
    %v2393 = vshrl.u32 %v2392, 7
    %v2394 = vsub.s32 0, %v2393
    %v2395 = vrot.slane %v2320, %v2394
    %2400 = vrot.lane.b32.xlu0 %v2388, 65
    %v2401 = vpop.permute.xlu0 %2400
    %2402 = vrot.lane.b32.xlu0 %v2389, 65
    %v2403 = vpop.permute.xlu0 %2402
    %2404 = vrot.lane.b32.xlu0 %v2390, 65
    %v2405 = vpop.permute.xlu0 %2404
    %2406 = vrot.lane.b32.xlu0 %v2391, 65
    %v2407 = vpop.permute.xlu0 %2406
    %v2412 = vmul.f32 %v2395, %v2401
    %v2413 = vmul.f32 %v2395, %v2403
    %v2414 = vmul.f32 %v2395, %v2405
    %v2415 = vmul.f32 %v2395, %v2407
    %v2416 = vadd.f32 %v2363, %v2412
    %v2417 = vadd.f32 %v2364, %v2413
    %v2418 = vadd.f32 %v2365, %v2414
    %v2419 = vadd.f32 %v2366, %v2415
    %v2420 = vlaneseq
    %v2421 = vshrl.u32 %v2420, 7
    %v2422 = vsub.s32 1, %v2421
    %v2423 = vrot.slane %v2320, %v2422
    %v2424 = vmul.f32 %v2423, %v2332
    %v2425 = vmul.f32 %v2423, %v2333
    %v2426 = vmul.f32 %v2423, %v2334
    %v2427 = vmul.f32 %v2423, %v2335
    %v2428 = vadd.f32 %v2416, %v2424
    %v2429 = vadd.f32 %v2417, %v2425
    %v2430 = vadd.f32 %v2418, %v2426
    %v2431 = vadd.f32 %v2419, %v2427
    %v2432 = vlaneseq
    %v2433 = vshrl.u32 %v2432, 7
    %v2434 = vsub.s32 2, %v2433
    %v2435 = vrot.slane %v2320, %v2434
    %2436 = vrot.lane.b32.xlu0 %v2388, 127
    %v2437 = vpop.permute.xlu0 %2436
    %2438 = vrot.lane.b32.xlu0 %v2389, 127
    %v2439 = vpop.permute.xlu0 %2438
    %2440 = vrot.lane.b32.xlu0 %v2390, 127
    %v2441 = vpop.permute.xlu0 %2440
    %2442 = vrot.lane.b32.xlu0 %v2391, 127
    %v2443 = vpop.permute.xlu0 %2442
    %v2448 = vmul.f32 %v2435, %v2437
    %v2449 = vmul.f32 %v2435, %v2439
    %v2450 = vmul.f32 %v2435, %v2441
    %v2451 = vmul.f32 %v2435, %v2443
    %v2452 = vadd.f32 %v2428, %v2448
    %v2453 = vadd.f32 %v2429, %v2449
    %v2454 = vadd.f32 %v2430, %v2450
    %v2455 = vadd.f32 %v2431, %v2451
    %2456 = vrot.lane.b32.xlu0 %v2247, 64
    %v2457 = vpop.permute.xlu0 %2456
    %v2458 = vsel %vm2367, %v2457, %v2247
    %2459 = vrot.lane.b32.xlu0 %v2248, 64
    %v2460 = vpop.permute.xlu0 %2459
    %v2461 = vsel %vm2367, %v2460, %v2248
    %2462 = vrot.lane.b32.xlu0 %v2249, 64
    %v2463 = vpop.permute.xlu0 %2462
    %v2464 = vsel %vm2367, %v2463, %v2249
    %2465 = vrot.lane.b32.xlu0 %v2250, 64
    %v2466 = vpop.permute.xlu0 %2465
    %v2467 = vsel %vm2367, %v2466, %v2250
    %2468 = vrot.lane.b32.xlu0 %v2458, 64
    %v2469 = vpop.permute.xlu0 %2468
    %2470 = vrot.lane.b32.xlu0 %v2461, 64
    %v2471 = vpop.permute.xlu0 %2470
    %2472 = vrot.lane.b32.xlu0 %v2464, 64
    %v2473 = vpop.permute.xlu0 %2472
    %2474 = vrot.lane.b32.xlu0 %v2467, 64
    %v2475 = vpop.permute.xlu0 %2474
    %v2476 = vsel %vm2367, %v2469, %v2247
    %v2477 = vsel %vm2367, %v2471, %v2248
    %v2478 = vsel %vm2367, %v2473, %v2249
    %v2479 = vsel %vm2367, %v2475, %v2250
    %v2480 = vlaneseq
    %v2481 = vshrl.u32 %v2480, 7
    %v2482 = vsub.s32 3, %v2481
    %v2483 = vrot.slane %v2320, %v2482
    %2488 = vrot.lane.b32.xlu0 %v2476, 65
    %v2489 = vpop.permute.xlu0 %2488
    %2490 = vrot.lane.b32.xlu0 %v2477, 65
    %v2491 = vpop.permute.xlu0 %2490
    %2492 = vrot.lane.b32.xlu0 %v2478, 65
    %v2493 = vpop.permute.xlu0 %2492
    %2494 = vrot.lane.b32.xlu0 %v2479, 65
    %v2495 = vpop.permute.xlu0 %2494
    %v2500 = vmul.f32 %v2483, %v2489
    %v2501 = vmul.f32 %v2483, %v2491
    %v2502 = vmul.f32 %v2483, %v2493
    %v2503 = vmul.f32 %v2483, %v2495
    %v2504 = vadd.f32 %v2452, %v2500
    %v2505 = vadd.f32 %v2453, %v2501
    %v2506 = vadd.f32 %v2454, %v2502
    %v2507 = vadd.f32 %v2455, %v2503
    %v2508 = vlaneseq
    %v2509 = vshrl.u32 %v2508, 7
    %v2510 = vsub.s32 5, %v2509
    %v2511 = vrot.slane %v2320, %v2510
    %2512 = vrot.lane.b32.xlu0 %v2476, 127
    %v2513 = vpop.permute.xlu0 %2512
    %2514 = vrot.lane.b32.xlu0 %v2477, 127
    %v2515 = vpop.permute.xlu0 %2514
    %2516 = vrot.lane.b32.xlu0 %v2478, 127
    %v2517 = vpop.permute.xlu0 %2516
    %2518 = vrot.lane.b32.xlu0 %v2479, 127
    %v2519 = vpop.permute.xlu0 %2518
    %v2524 = vmul.f32 %v2511, %v2513
    %v2525 = vmul.f32 %v2511, %v2515
    %v2526 = vmul.f32 %v2511, %v2517
    %v2527 = vmul.f32 %v2511, %v2519
    %v2528 = vadd.f32 %v2504, %v2524
    %v2529 = vadd.f32 %v2505, %v2525
    %v2530 = vadd.f32 %v2506, %v2526
    %v2531 = vadd.f32 %v2507, %v2527
    %2532 = vrot.lane.b32.xlu0 %v2345, 64
    %v2533 = vpop.permute.xlu0 %2532
    %v2534 = vsel %vm2367, %v2533, %v2345
    %2535 = vrot.lane.b32.xlu0 %v2346, 64
    %v2536 = vpop.permute.xlu0 %2535
    %v2537 = vsel %vm2367, %v2536, %v2346
    %2538 = vrot.lane.b32.xlu0 %v2347, 64
    %v2539 = vpop.permute.xlu0 %2538
    %v2540 = vsel %vm2367, %v2539, %v2347
    %2541 = vrot.lane.b32.xlu0 %v2348, 64
    %v2542 = vpop.permute.xlu0 %2541
    %v2543 = vsel %vm2367, %v2542, %v2348
    %2544 = vrot.lane.b32.xlu0 %v2534, 64
    %v2545 = vpop.permute.xlu0 %2544
    %2546 = vrot.lane.b32.xlu0 %v2537, 64
    %v2547 = vpop.permute.xlu0 %2546
    %2548 = vrot.lane.b32.xlu0 %v2540, 64
    %v2549 = vpop.permute.xlu0 %2548
    %2550 = vrot.lane.b32.xlu0 %v2543, 64
    %v2551 = vpop.permute.xlu0 %2550
    %v2552 = vsel %vm2367, %v2545, %v2345
    %v2553 = vsel %vm2367, %v2547, %v2346
    %v2554 = vsel %vm2367, %v2549, %v2347
    %v2555 = vsel %vm2367, %v2551, %v2348
    %v2556 = vlaneseq
    %v2557 = vshrl.u32 %v2556, 7
    %v2558 = vsub.s32 6, %v2557
    %v2559 = vrot.slane %v2320, %v2558
    %2564 = vrot.lane.b32.xlu0 %v2552, 65
    %v2565 = vpop.permute.xlu0 %2564
    %2566 = vrot.lane.b32.xlu0 %v2553, 65
    %v2567 = vpop.permute.xlu0 %2566
    %2568 = vrot.lane.b32.xlu0 %v2554, 65
    %v2569 = vpop.permute.xlu0 %2568
    %2570 = vrot.lane.b32.xlu0 %v2555, 65
    %v2571 = vpop.permute.xlu0 %2570
    %v2576 = vmul.f32 %v2559, %v2565
    %v2577 = vmul.f32 %v2559, %v2567
    %v2578 = vmul.f32 %v2559, %v2569
    %v2579 = vmul.f32 %v2559, %v2571
    %v2580 = vadd.f32 %v2528, %v2576
    %v2581 = vadd.f32 %v2529, %v2577
    %v2582 = vadd.f32 %v2530, %v2578
    %v2583 = vadd.f32 %v2531, %v2579
    %v2584 = vlaneseq
    %v2585 = vshrl.u32 %v2584, 7
    %v2586 = vsub.s32 7, %v2585
    %v2587 = vrot.slane %v2320, %v2586
    %v2588 = vmul.f32 %v2587, %v2345
    %v2589 = vmul.f32 %v2587, %v2346
    %v2590 = vmul.f32 %v2587, %v2347
    %v2591 = vmul.f32 %v2587, %v2348
    %v2592 = vadd.f32 %v2580, %v2588
    %v2593 = vadd.f32 %v2581, %v2589
    %v2594 = vadd.f32 %v2582, %v2590
    %v2595 = vadd.f32 %v2583, %v2591
    %v2596 = vlaneseq
    %v2597 = vshrl.u32 %v2596, 7
    %v2598 = vsub.s32 0, %v2597
    %v2599 = vrot.slane %v2321, %v2598
    %2600 = vrot.lane.b32.xlu0 %v2552, 127
    %v2601 = vpop.permute.xlu0 %2600
    %2602 = vrot.lane.b32.xlu0 %v2553, 127
    %v2603 = vpop.permute.xlu0 %2602
    %2604 = vrot.lane.b32.xlu0 %v2554, 127
    %v2605 = vpop.permute.xlu0 %2604
    %2606 = vrot.lane.b32.xlu0 %v2555, 127
    %v2607 = vpop.permute.xlu0 %2606
    %v2612 = vmul.f32 %v2599, %v2601
    %v2613 = vmul.f32 %v2599, %v2603
    %v2614 = vmul.f32 %v2599, %v2605
    %v2615 = vmul.f32 %v2599, %v2607
    %v2616 = vadd.f32 %v2592, %v2612
    %v2617 = vadd.f32 %v2593, %v2613
    %v2618 = vadd.f32 %v2594, %v2614
    %v2619 = vadd.f32 %v2595, %v2615
    %v2620 = vld [vmem:[%s5] sm:$0xff]
    %v2621 = vld [vmem:[%s5 + $0x8] sm:$0xff]
    %v2622 = vld [vmem:[%s5 + $0x10] sm:$0xff]
    %v2623 = vld [vmem:[%s5 + $0x18] sm:$0xff]
    %v2624 = vld [vmem:[%s5 + $0x20] sm:$0xff]
    %v2625 = vld [vmem:[%s5 + $0x28] sm:$0xff]
    %v2626 = vld [vmem:[%s5 + $0x30] sm:$0xff]
    %v2627 = vld [vmem:[%s5 + $0x38] sm:$0xff]
    %v2628 = vld [vmem:[#allocation8] sm:$0x1]
    %v2630 = vlaneseq
    %v2631 = vshrl.u32 %v2630, 7
    %v2632 = vsub.s32 0, %v2631
    %v2633 = vrot.slane %v2628, %v2632
    %vm2635 = vcmask 523264
    %v2637 = vsel %vm2635, %v2616, 0
    %v2640 = vsel %vm2635, %v2617, 0
    %v2643 = vsel %vm2635, %v2618, 0
    %v2646 = vsel %vm2635, %v2619, 0
    %2648 = vmatprep.subr.mxu0 0.0
    %2649 = vmatpush1.msra.mxu0 0.0
    %2650 = vmatprep.subr.mxu0 0.0
    %2651 = vmatpush1.msra.mxu0 0.0
    %2652 = vmatprep.subr.mxu0 0.0
    %2653 = vmatpush1.msra.mxu0 0.0
    %2654 = vmatprep.subr.mxu0 0.0
    %2655 = vmatpush1.msra.mxu0 0.0
    %2656 = vmatprep.subr.mxu0 0.0
    %2657 = vmatpush1.msra.mxu0 0.0
    %2658 = vmatprep.subr.mxu0 0.0
    %2659 = vmatpush1.msra.mxu0 0.0
    %2660 = vmatprep.subr.mxu0 0.0
    %2661 = vmatpush1.msra.mxu0 0.0
    %2662 = vmatprep.subr.mxu0 0.0
    %2663 = vmatpush1.msra.mxu0 0.0
    %2664 = vmatprep.subr.mxu0 0.0
    %v2665 = vand.u32 %v2627, 4294901760
    %2666 = vmatpush1.msra.mxu0 %v2665
    %2667 = vmatprep.subr.mxu0 0.0
    %v2668 = vand.u32 %v2626, 4294901760
    %2669 = vmatpush1.msra.mxu0 %v2668
    %2670 = vmatprep.subr.mxu0 0.0
    %v2671 = vand.u32 %v2625, 4294901760
    %2672 = vmatpush1.msra.mxu0 %v2671
    %2673 = vmatprep.subr.mxu0 0.0
    %v2674 = vand.u32 %v2624, 4294901760
    %2675 = vmatpush1.msra.mxu0 %v2674
    %2676 = vmatprep.subr.mxu0 0.0
    %v2677 = vand.u32 %v2623, 4294901760
    %2678 = vmatpush1.msra.mxu0 %v2677
    %2679 = vmatprep.subr.mxu0 0.0
    %v2680 = vand.u32 %v2622, 4294901760
    %2681 = vmatpush1.msra.mxu0 %v2680
    %2682 = vmatprep.subr.mxu0 0.0
    %v2683 = vand.u32 %v2621, 4294901760
    %2684 = vmatpush1.msra.mxu0 %v2683
    %2685 = vmatprep.subr.mxu0 0.0
    %v2686 = vand.u32 %v2620, 4294901760
    %2687 = vmatpush1.msra.mxu0 %v2686
    %2688 = vmatprep.subr.mxu0 0.0
    %2689 = vmatpush2.msra.mxu0 0.0
    %2690 = vmatprep.subr.mxu0 0.0
    %2691 = vmatpush2.msra.mxu0 0.0
    %2692 = vmatprep.subr.mxu0 0.0
    %2693 = vmatpush2.msra.mxu0 0.0
    %2694 = vmatprep.subr.mxu0 0.0
    %2695 = vmatpush2.msra.mxu0 0.0
    %2696 = vmatprep.subr.mxu0 0.0
    %2697 = vmatpush2.msra.mxu0 0.0
    %2698 = vmatprep.subr.mxu0 0.0
    %2699 = vmatpush2.msra.mxu0 0.0
    %2700 = vmatprep.subr.mxu0 0.0
    %2701 = vmatpush2.msra.mxu0 0.0
    %2702 = vmatprep.subr.mxu0 0.0
    %2703 = vmatpush2.msra.mxu0 0.0
    %2704 = vmatprep.subr.mxu0 0.0
    %2705 = vmatpush2.msra.mxu0 0.0
    %2706 = vmatprep.subr.mxu0 0.0
    %2707 = vmatpush2.msra.mxu0 0.0
    %2708 = vmatprep.subr.mxu0 0.0
    %2709 = vmatpush2.msra.mxu0 0.0
    %2710 = vmatprep.subr.mxu0 0.0
    %2711 = vmatpush2.msra.mxu0 0.0
    %2712 = vmatprep.subr.mxu0 0.0
    %2713 = vmatpush2.msra.mxu0 0.0
    %2714 = vmatprep.subr.mxu0 0.0
    %2715 = vmatpush2.msra.mxu0 0.0
    %2716 = vmatprep.subr.mxu0 0.0
    %2717 = vmatpush2.msra.mxu0 0.0
    %2718 = vmatprep.subr.mxu0 0.0
    %2719 = vmatpush2.msra.mxu0 0.0
    %2720 = vmatprep.mubr.f32.mxu0 0.0
    %v2721 = vand.u32 %v2637, 4294901760
    %v2722 = vsub.f32 %v2637, %v2721
    %v2723 = vand.u32 %v2722, 4294901760
    %v2724 = vsub.f32 %v2722, %v2723
    %v2725 = vand.u32 %v2724, 4294901760
    %2726 = vmatmul.mubr.f32.gmra.mxu0 %v2725
    %v2727 = vpop.f32.mrf.mxu0
    %v2728 = vadd.f32 %v2633, %v2727
    %v2729 = vpop.f32.mrf.mxu0
    %2730 = vmatprep.mubr.f32.mxu0 0.0
    %v2731 = vand.u32 %v2640, 4294901760
    %v2732 = vsub.f32 %v2640, %v2731
    %v2733 = vand.u32 %v2732, 4294901760
    %v2734 = vsub.f32 %v2732, %v2733
    %v2735 = vand.u32 %v2734, 4294901760
    %2736 = vmatmul.mubr.f32.gmra.mxu0 %v2735
    %v2737 = vpop.f32.mrf.mxu0
    %v2738 = vadd.f32 %v2633, %v2737
    %v2739 = vpop.f32.mrf.mxu0
    %2740 = vmatprep.mubr.f32.mxu0 0.0
    %v2741 = vand.u32 %v2643, 4294901760
    %v2742 = vsub.f32 %v2643, %v2741
    %v2743 = vand.u32 %v2742, 4294901760
    %v2744 = vsub.f32 %v2742, %v2743
    %v2745 = vand.u32 %v2744, 4294901760
    %2746 = vmatmul.mubr.f32.gmra.mxu0 %v2745
    %v2747 = vpop.f32.mrf.mxu0
    %v2748 = vadd.f32 %v2633, %v2747
    %v2749 = vpop.f32.mrf.mxu0
    %2750 = vmatprep.mubr.f32.mxu0 0.0
    %v2751 = vand.u32 %v2646, 4294901760
    %v2752 = vsub.f32 %v2646, %v2751
    %v2753 = vand.u32 %v2752, 4294901760
    %v2754 = vsub.f32 %v2752, %v2753
    %v2755 = vand.u32 %v2754, 4294901760
    %2756 = vmatmul.mubr.f32.gmra.mxu0 %v2755
    %v2757 = vpop.f32.mrf.mxu0
    %v2758 = vadd.f32 %v2633, %v2757
    %v2759 = vpop.f32.mrf.mxu0
    %2760 = vdwg.mxu0
    %2761 = vmatprep.subr.mxu0 0.0
    %2762 = vmatpush1.msra.mxu0 0.0
    %2763 = vmatprep.subr.mxu0 0.0
    %2764 = vmatpush1.msra.mxu0 0.0
    %2765 = vmatprep.subr.mxu0 0.0
    %2766 = vmatpush1.msra.mxu0 0.0
    %2767 = vmatprep.subr.mxu0 0.0
    %2768 = vmatpush1.msra.mxu0 0.0
    %2769 = vmatprep.subr.mxu0 0.0
    %2770 = vmatpush1.msra.mxu0 0.0
    %2771 = vmatprep.subr.mxu0 0.0
    %2772 = vmatpush1.msra.mxu0 0.0
    %2773 = vmatprep.subr.mxu0 0.0
    %2774 = vmatpush1.msra.mxu0 0.0
    %2775 = vmatprep.subr.mxu0 0.0
    %2776 = vmatpush1.msra.mxu0 0.0
    %2777 = vmatprep.subr.mxu0 0.0
    %v2778 = vand.u32 %v2627, 4294901760
    %v2779 = vsub.f32 %v2627, %v2778
    %v2780 = vand.u32 %v2779, 4294901760
    %v2781 = vsub.f32 %v2779, %v2780
    %v2782 = vand.u32 %v2781, 4294901760
    %2783 = vmatpush1.msra.mxu0 %v2782
    %2784 = vmatprep.subr.mxu0 0.0
    %v2785 = vand.u32 %v2626, 4294901760
    %v2786 = vsub.f32 %v2626, %v2785
    %v2787 = vand.u32 %v2786, 4294901760
    %v2788 = vsub.f32 %v2786, %v2787
    %v2789 = vand.u32 %v2788, 4294901760
    %2790 = vmatpush1.msra.mxu0 %v2789
    %2791 = vmatprep.subr.mxu0 0.0
    %v2792 = vand.u32 %v2625, 4294901760
    %v2793 = vsub.f32 %v2625, %v2792
    %v2794 = vand.u32 %v2793, 4294901760
    %v2795 = vsub.f32 %v2793, %v2794
    %v2796 = vand.u32 %v2795, 4294901760
    %2797 = vmatpush1.msra.mxu0 %v2796
    %2798 = vmatprep.subr.mxu0 0.0
    %v2799 = vand.u32 %v2624, 4294901760
    %v2800 = vsub.f32 %v2624, %v2799
    %v2801 = vand.u32 %v2800, 4294901760
    %v2802 = vsub.f32 %v2800, %v2801
    %v2803 = vand.u32 %v2802, 4294901760
    %2804 = vmatpush1.msra.mxu0 %v2803
    %2805 = vmatprep.subr.mxu0 0.0
    %v2806 = vand.u32 %v2623, 4294901760
    %v2807 = vsub.f32 %v2623, %v2806
    %v2808 = vand.u32 %v2807, 4294901760
    %v2809 = vsub.f32 %v2807, %v2808
    %v2810 = vand.u32 %v2809, 4294901760
    %2811 = vmatpush1.msra.mxu0 %v2810
    %2812 = vmatprep.subr.mxu0 0.0
    %v2813 = vand.u32 %v2622, 4294901760
    %v2814 = vsub.f32 %v2622, %v2813
    %v2815 = vand.u32 %v2814, 4294901760
    %v2816 = vsub.f32 %v2814, %v2815
    %v2817 = vand.u32 %v2816, 4294901760
    %2818 = vmatpush1.msra.mxu0 %v2817
    %2819 = vmatprep.subr.mxu0 0.0
    %v2820 = vand.u32 %v2621, 4294901760
    %v2821 = vsub.f32 %v2621, %v2820
    %v2822 = vand.u32 %v2821, 4294901760
    %v2823 = vsub.f32 %v2821, %v2822
    %v2824 = vand.u32 %v2823, 4294901760
    %2825 = vmatpush1.msra.mxu0 %v2824
    %2826 = vmatprep.subr.mxu0 0.0
    %v2827 = vand.u32 %v2620, 4294901760
    %v2828 = vsub.f32 %v2620, %v2827
    %v2829 = vand.u32 %v2828, 4294901760
    %v2830 = vsub.f32 %v2828, %v2829
    %v2831 = vand.u32 %v2830, 4294901760
    %2832 = vmatpush1.msra.mxu0 %v2831
    %2833 = vmatprep.subr.mxu0 0.0
    %2834 = vmatpush2.msra.mxu0 0.0
    %2835 = vmatprep.subr.mxu0 0.0
    %2836 = vmatpush2.msra.mxu0 0.0
    %2837 = vmatprep.subr.mxu0 0.0
    %2838 = vmatpush2.msra.mxu0 0.0
    %2839 = vmatprep.subr.mxu0 0.0
    %2840 = vmatpush2.msra.mxu0 0.0
    %2841 = vmatprep.subr.mxu0 0.0
    %2842 = vmatpush2.msra.mxu0 0.0
    %2843 = vmatprep.subr.mxu0 0.0
    %2844 = vmatpush2.msra.mxu0 0.0
    %2845 = vmatprep.subr.mxu0 0.0
    %2846 = vmatpush2.msra.mxu0 0.0
    %2847 = vmatprep.subr.mxu0 0.0
    %2848 = vmatpush2.msra.mxu0 0.0
    %2849 = vmatprep.subr.mxu0 0.0
    %2850 = vmatpush2.msra.mxu0 0.0
    %2851 = vmatprep.subr.mxu0 0.0
    %2852 = vmatpush2.msra.mxu0 0.0
    %2853 = vmatprep.subr.mxu0 0.0
    %2854 = vmatpush2.msra.mxu0 0.0
    %2855 = vmatprep.subr.mxu0 0.0
    %2856 = vmatpush2.msra.mxu0 0.0
    %2857 = vmatprep.subr.mxu0 0.0
    %2858 = vmatpush2.msra.mxu0 0.0
    %2859 = vmatprep.subr.mxu0 0.0
    %2860 = vmatpush2.msra.mxu0 0.0
    %2861 = vmatprep.subr.mxu0 0.0
    %2862 = vmatpush2.msra.mxu0 0.0
    %2863 = vmatprep.subr.mxu0 0.0
    %2864 = vmatpush2.msra.mxu0 0.0
    %2865 = vmatprep.mubr.f32.mxu0 0.0
    %v2866 = vand.u32 %v2637, 4294901760
    %2867 = vmatmul.mubr.f32.gmra.mxu0 %v2866
    %v2868 = vpop.f32.mrf.mxu0
    %v2869 = vadd.f32 %v2728, %v2868
    %v2870 = vpop.f32.mrf.mxu0
    %2871 = vmatprep.mubr.f32.mxu0 0.0
    %v2872 = vand.u32 %v2640, 4294901760
    %2873 = vmatmul.mubr.f32.gmra.mxu0 %v2872
    %v2874 = vpop.f32.mrf.mxu0
    %v2875 = vadd.f32 %v2738, %v2874
    %v2876 = vpop.f32.mrf.mxu0
    %2877 = vmatprep.mubr.f32.mxu0 0.0
    %v2878 = vand.u32 %v2643, 4294901760
    %2879 = vmatmul.mubr.f32.gmra.mxu0 %v2878
    %v2880 = vpop.f32.mrf.mxu0
    %v2881 = vadd.f32 %v2748, %v2880
    %v2882 = vpop.f32.mrf.mxu0
    %2883 = vmatprep.mubr.f32.mxu0 0.0
    %v2884 = vand.u32 %v2646, 4294901760
    %2885 = vmatmul.mubr.f32.gmra.mxu0 %v2884
    %v2886 = vpop.f32.mrf.mxu0
    %v2887 = vadd.f32 %v2758, %v2886
    %v2888 = vpop.f32.mrf.mxu0
    %2889 = vdwg.mxu0
    %2890 = vmatprep.subr.mxu0 0.0
    %2891 = vmatpush1.msra.mxu0 0.0
    %2892 = vmatprep.subr.mxu0 0.0
    %2893 = vmatpush1.msra.mxu0 0.0
    %2894 = vmatprep.subr.mxu0 0.0
    %2895 = vmatpush1.msra.mxu0 0.0
    %2896 = vmatprep.subr.mxu0 0.0
    %2897 = vmatpush1.msra.mxu0 0.0
    %2898 = vmatprep.subr.mxu0 0.0
    %2899 = vmatpush1.msra.mxu0 0.0
    %2900 = vmatprep.subr.mxu0 0.0
    %2901 = vmatpush1.msra.mxu0 0.0
    %2902 = vmatprep.subr.mxu0 0.0
    %2903 = vmatpush1.msra.mxu0 0.0
    %2904 = vmatprep.subr.mxu0 0.0
    %2905 = vmatpush1.msra.mxu0 0.0
    %2906 = vmatprep.subr.mxu0 0.0
    %v2907 = vand.u32 %v2627, 4294901760
    %v2908 = vsub.f32 %v2627, %v2907
    %2909 = vmatpush1.msra.mxu0 %v2908
    %2910 = vmatprep.subr.mxu0 0.0
    %v2911 = vand.u32 %v2626, 4294901760
    %v2912 = vsub.f32 %v2626, %v2911
    %2913 = vmatpush1.msra.mxu0 %v2912
    %2914 = vmatprep.subr.mxu0 0.0
    %v2915 = vand.u32 %v2625, 4294901760
    %v2916 = vsub.f32 %v2625, %v2915
    %2917 = vmatpush1.msra.mxu0 %v2916
    %2918 = vmatprep.subr.mxu0 0.0
    %v2919 = vand.u32 %v2624, 4294901760
    %v2920 = vsub.f32 %v2624, %v2919
    %2921 = vmatpush1.msra.mxu0 %v2920
    %2922 = vmatprep.subr.mxu0 0.0
    %v2923 = vand.u32 %v2623, 4294901760
    %v2924 = vsub.f32 %v2623, %v2923
    %2925 = vmatpush1.msra.mxu0 %v2924
    %2926 = vmatprep.subr.mxu0 0.0
    %v2927 = vand.u32 %v2622, 4294901760
    %v2928 = vsub.f32 %v2622, %v2927
    %2929 = vmatpush1.msra.mxu0 %v2928
    %2930 = vmatprep.subr.mxu0 0.0
    %v2931 = vand.u32 %v2621, 4294901760
    %v2932 = vsub.f32 %v2621, %v2931
    %2933 = vmatpush1.msra.mxu0 %v2932
    %2934 = vmatprep.subr.mxu0 0.0
    %v2935 = vand.u32 %v2620, 4294901760
    %v2936 = vsub.f32 %v2620, %v2935
    %2937 = vmatpush1.msra.mxu0 %v2936
    %2938 = vmatprep.subr.mxu0 0.0
    %2939 = vmatpush2.msra.mxu0 0.0
    %2940 = vmatprep.subr.mxu0 0.0
    %2941 = vmatpush2.msra.mxu0 0.0
    %2942 = vmatprep.subr.mxu0 0.0
    %2943 = vmatpush2.msra.mxu0 0.0
    %2944 = vmatprep.subr.mxu0 0.0
    %2945 = vmatpush2.msra.mxu0 0.0
    %2946 = vmatprep.subr.mxu0 0.0
    %2947 = vmatpush2.msra.mxu0 0.0
    %2948 = vmatprep.subr.mxu0 0.0
    %2949 = vmatpush2.msra.mxu0 0.0
    %2950 = vmatprep.subr.mxu0 0.0
    %2951 = vmatpush2.msra.mxu0 0.0
    %2952 = vmatprep.subr.mxu0 0.0
    %2953 = vmatpush2.msra.mxu0 0.0
    %2954 = vmatprep.subr.mxu0 0.0
    %2955 = vmatpush2.msra.mxu0 0.0
    %2956 = vmatprep.subr.mxu0 0.0
    %2957 = vmatpush2.msra.mxu0 0.0
    %2958 = vmatprep.subr.mxu0 0.0
    %2959 = vmatpush2.msra.mxu0 0.0
    %2960 = vmatprep.subr.mxu0 0.0
    %2961 = vmatpush2.msra.mxu0 0.0
    %2962 = vmatprep.subr.mxu0 0.0
    %2963 = vmatpush2.msra.mxu0 0.0
    %2964 = vmatprep.subr.mxu0 0.0
    %2965 = vmatpush2.msra.mxu0 0.0
    %2966 = vmatprep.subr.mxu0 0.0
    %2967 = vmatpush2.msra.mxu0 0.0
    %2968 = vmatprep.subr.mxu0 0.0
    %2969 = vmatpush2.msra.mxu0 0.0
    %2970 = vmatprep.mubr.f32.mxu0 0.0
    %v2971 = vand.u32 %v2637, 4294901760
    %v2972 = vsub.f32 %v2637, %v2971
    %2973 = vmatmul.mubr.f32.gmra.mxu0 %v2972
    %v2974 = vpop.f32.mrf.mxu0
    %v2975 = vadd.f32 %v2869, %v2974
    %v2976 = vpop.f32.mrf.mxu0
    %2977 = vmatprep.mubr.f32.mxu0 0.0
    %v2978 = vand.u32 %v2640, 4294901760
    %v2979 = vsub.f32 %v2640, %v2978
    %2980 = vmatmul.mubr.f32.gmra.mxu0 %v2979
    %v2981 = vpop.f32.mrf.mxu0
    %v2982 = vadd.f32 %v2875, %v2981
    %v2983 = vpop.f32.mrf.mxu0
    %2984 = vmatprep.mubr.f32.mxu0 0.0
    %v2985 = vand.u32 %v2643, 4294901760
    %v2986 = vsub.f32 %v2643, %v2985
    %2987 = vmatmul.mubr.f32.gmra.mxu0 %v2986
    %v2988 = vpop.f32.mrf.mxu0
    %v2989 = vadd.f32 %v2881, %v2988
    %v2990 = vpop.f32.mrf.mxu0
    %2991 = vmatprep.mubr.f32.mxu0 0.0
    %v2992 = vand.u32 %v2646, 4294901760
    %v2993 = vsub.f32 %v2646, %v2992
    %2994 = vmatmul.mubr.f32.gmra.mxu0 %v2993
    %v2995 = vpop.f32.mrf.mxu0
    %v2996 = vadd.f32 %v2887, %v2995
    %v2997 = vpop.f32.mrf.mxu0
    %2998 = vdwg.mxu0
    %2999 = vmatprep.subr.mxu0 0.0
    %3000 = vmatpush1.msra.mxu0 0.0
    %3001 = vmatprep.subr.mxu0 0.0
    %3002 = vmatpush1.msra.mxu0 0.0
    %3003 = vmatprep.subr.mxu0 0.0
    %3004 = vmatpush1.msra.mxu0 0.0
    %3005 = vmatprep.subr.mxu0 0.0
    %3006 = vmatpush1.msra.mxu0 0.0
    %3007 = vmatprep.subr.mxu0 0.0
    %3008 = vmatpush1.msra.mxu0 0.0
    %3009 = vmatprep.subr.mxu0 0.0
    %3010 = vmatpush1.msra.mxu0 0.0
    %3011 = vmatprep.subr.mxu0 0.0
    %3012 = vmatpush1.msra.mxu0 0.0
    %3013 = vmatprep.subr.mxu0 0.0
    %3014 = vmatpush1.msra.mxu0 0.0
    %3015 = vmatprep.subr.mxu0 0.0
    %v3016 = vand.u32 %v2627, 4294901760
    %3017 = vmatpush1.msra.mxu0 %v3016
    %3018 = vmatprep.subr.mxu0 0.0
    %v3019 = vand.u32 %v2626, 4294901760
    %3020 = vmatpush1.msra.mxu0 %v3019
    %3021 = vmatprep.subr.mxu0 0.0
    %v3022 = vand.u32 %v2625, 4294901760
    %3023 = vmatpush1.msra.mxu0 %v3022
    %3024 = vmatprep.subr.mxu0 0.0
    %v3025 = vand.u32 %v2624, 4294901760
    %3026 = vmatpush1.msra.mxu0 %v3025
    %3027 = vmatprep.subr.mxu0 0.0
    %v3028 = vand.u32 %v2623, 4294901760
    %3029 = vmatpush1.msra.mxu0 %v3028
    %3030 = vmatprep.subr.mxu0 0.0
    %v3031 = vand.u32 %v2622, 4294901760
    %3032 = vmatpush1.msra.mxu0 %v3031
    %3033 = vmatprep.subr.mxu0 0.0
    %v3034 = vand.u32 %v2621, 4294901760
    %3035 = vmatpush1.msra.mxu0 %v3034
    %3036 = vmatprep.subr.mxu0 0.0
    %v3037 = vand.u32 %v2620, 4294901760
    %3038 = vmatpush1.msra.mxu0 %v3037
    %3039 = vmatprep.subr.mxu0 0.0
    %3040 = vmatpush2.msra.mxu0 0.0
    %3041 = vmatprep.subr.mxu0 0.0
    %3042 = vmatpush2.msra.mxu0 0.0
    %3043 = vmatprep.subr.mxu0 0.0
    %3044 = vmatpush2.msra.mxu0 0.0
    %3045 = vmatprep.subr.mxu0 0.0
    %3046 = vmatpush2.msra.mxu0 0.0
    %3047 = vmatprep.subr.mxu0 0.0
    %3048 = vmatpush2.msra.mxu0 0.0
    %3049 = vmatprep.subr.mxu0 0.0
    %3050 = vmatpush2.msra.mxu0 0.0
    %3051 = vmatprep.subr.mxu0 0.0
    %3052 = vmatpush2.msra.mxu0 0.0
    %3053 = vmatprep.subr.mxu0 0.0
    %3054 = vmatpush2.msra.mxu0 0.0
    %3055 = vmatprep.subr.mxu0 0.0
    %3056 = vmatpush2.msra.mxu0 0.0
    %3057 = vmatprep.subr.mxu0 0.0
    %3058 = vmatpush2.msra.mxu0 0.0
    %3059 = vmatprep.subr.mxu0 0.0
    %3060 = vmatpush2.msra.mxu0 0.0
    %3061 = vmatprep.subr.mxu0 0.0
    %3062 = vmatpush2.msra.mxu0 0.0
    %3063 = vmatprep.subr.mxu0 0.0
    %3064 = vmatpush2.msra.mxu0 0.0
    %3065 = vmatprep.subr.mxu0 0.0
    %3066 = vmatpush2.msra.mxu0 0.0
    %3067 = vmatprep.subr.mxu0 0.0
    %3068 = vmatpush2.msra.mxu0 0.0
    %3069 = vmatprep.subr.mxu0 0.0
    %3070 = vmatpush2.msra.mxu0 0.0
    %3071 = vmatprep.mubr.f32.mxu0 0.0
    %v3072 = vand.u32 %v2637, 4294901760
    %v3073 = vsub.f32 %v2637, %v3072
    %v3074 = vand.u32 %v3073, 4294901760
    %3075 = vmatmul.mubr.f32.gmra.mxu0 %v3074
    %v3076 = vpop.f32.mrf.mxu0
    %v3077 = vadd.f32 %v2975, %v3076
    %v3078 = vpop.f32.mrf.mxu0
    %3079 = vmatprep.mubr.f32.mxu0 0.0
    %v3080 = vand.u32 %v2640, 4294901760
    %v3081 = vsub.f32 %v2640, %v3080
    %v3082 = vand.u32 %v3081, 4294901760
    %3083 = vmatmul.mubr.f32.gmra.mxu0 %v3082
    %v3084 = vpop.f32.mrf.mxu0
    %v3085 = vadd.f32 %v2982, %v3084
    %v3086 = vpop.f32.mrf.mxu0
    %3087 = vmatprep.mubr.f32.mxu0 0.0
    %v3088 = vand.u32 %v2643, 4294901760
    %v3089 = vsub.f32 %v2643, %v3088
    %v3090 = vand.u32 %v3089, 4294901760
    %3091 = vmatmul.mubr.f32.gmra.mxu0 %v3090
    %v3092 = vpop.f32.mrf.mxu0
    %v3093 = vadd.f32 %v2989, %v3092
    %v3094 = vpop.f32.mrf.mxu0
    %3095 = vmatprep.mubr.f32.mxu0 0.0
    %v3096 = vand.u32 %v2646, 4294901760
    %v3097 = vsub.f32 %v2646, %v3096
    %v3098 = vand.u32 %v3097, 4294901760
    %3099 = vmatmul.mubr.f32.gmra.mxu0 %v3098
    %v3100 = vpop.f32.mrf.mxu0
    %v3101 = vadd.f32 %v2996, %v3100
    %v3102 = vpop.f32.mrf.mxu0
    %3103 = vdwg.mxu0
    %3104 = vmatprep.subr.mxu0 0.0
    %3105 = vmatpush1.msra.mxu0 0.0
    %3106 = vmatprep.subr.mxu0 0.0
    %3107 = vmatpush1.msra.mxu0 0.0
    %3108 = vmatprep.subr.mxu0 0.0
    %3109 = vmatpush1.msra.mxu0 0.0
    %3110 = vmatprep.subr.mxu0 0.0
    %3111 = vmatpush1.msra.mxu0 0.0
    %3112 = vmatprep.subr.mxu0 0.0
    %3113 = vmatpush1.msra.mxu0 0.0
    %3114 = vmatprep.subr.mxu0 0.0
    %3115 = vmatpush1.msra.mxu0 0.0
    %3116 = vmatprep.subr.mxu0 0.0
    %3117 = vmatpush1.msra.mxu0 0.0
    %3118 = vmatprep.subr.mxu0 0.0
    %3119 = vmatpush1.msra.mxu0 0.0
    %3120 = vmatprep.subr.mxu0 0.0
    %v3121 = vand.u32 %v2627, 4294901760
    %v3122 = vsub.f32 %v2627, %v3121
    %v3123 = vand.u32 %v3122, 4294901760
    %3124 = vmatpush1.msra.mxu0 %v3123
    %3125 = vmatprep.subr.mxu0 0.0
    %v3126 = vand.u32 %v2626, 4294901760
    %v3127 = vsub.f32 %v2626, %v3126
    %v3128 = vand.u32 %v3127, 4294901760
    %3129 = vmatpush1.msra.mxu0 %v3128
    %3130 = vmatprep.subr.mxu0 0.0
    %v3131 = vand.u32 %v2625, 4294901760
    %v3132 = vsub.f32 %v2625, %v3131
    %v3133 = vand.u32 %v3132, 4294901760
    %3134 = vmatpush1.msra.mxu0 %v3133
    %3135 = vmatprep.subr.mxu0 0.0
    %v3136 = vand.u32 %v2624, 4294901760
    %v3137 = vsub.f32 %v2624, %v3136
    %v3138 = vand.u32 %v3137, 4294901760
    %3139 = vmatpush1.msra.mxu0 %v3138
    %3140 = vmatprep.subr.mxu0 0.0
    %v3141 = vand.u32 %v2623, 4294901760
    %v3142 = vsub.f32 %v2623, %v3141
    %v3143 = vand.u32 %v3142, 4294901760
    %3144 = vmatpush1.msra.mxu0 %v3143
    %3145 = vmatprep.subr.mxu0 0.0
    %v3146 = vand.u32 %v2622, 4294901760
    %v3147 = vsub.f32 %v2622, %v3146
    %v3148 = vand.u32 %v3147, 4294901760
    %3149 = vmatpush1.msra.mxu0 %v3148
    %3150 = vmatprep.subr.mxu0 0.0
    %v3151 = vand.u32 %v2621, 4294901760
    %v3152 = vsub.f32 %v2621, %v3151
    %v3153 = vand.u32 %v3152, 4294901760
    %3154 = vmatpush1.msra.mxu0 %v3153
    %3155 = vmatprep.subr.mxu0 0.0
    %v3156 = vand.u32 %v2620, 4294901760
    %v3157 = vsub.f32 %v2620, %v3156
    %v3158 = vand.u32 %v3157, 4294901760
    %3159 = vmatpush1.msra.mxu0 %v3158
    %3160 = vmatprep.subr.mxu0 0.0
    %3161 = vmatpush2.msra.mxu0 0.0
    %3162 = vmatprep.subr.mxu0 0.0
    %3163 = vmatpush2.msra.mxu0 0.0
    %3164 = vmatprep.subr.mxu0 0.0
    %3165 = vmatpush2.msra.mxu0 0.0
    %3166 = vmatprep.subr.mxu0 0.0
    %3167 = vmatpush2.msra.mxu0 0.0
    %3168 = vmatprep.subr.mxu0 0.0
    %3169 = vmatpush2.msra.mxu0 0.0
    %3170 = vmatprep.subr.mxu0 0.0
    %3171 = vmatpush2.msra.mxu0 0.0
    %3172 = vmatprep.subr.mxu0 0.0
    %3173 = vmatpush2.msra.mxu0 0.0
    %3174 = vmatprep.subr.mxu0 0.0
    %3175 = vmatpush2.msra.mxu0 0.0
    %3176 = vmatprep.subr.mxu0 0.0
    %3177 = vmatpush2.msra.mxu0 0.0
    %3178 = vmatprep.subr.mxu0 0.0
    %3179 = vmatpush2.msra.mxu0 0.0
    %3180 = vmatprep.subr.mxu0 0.0
    %3181 = vmatpush2.msra.mxu0 0.0
    %3182 = vmatprep.subr.mxu0 0.0
    %3183 = vmatpush2.msra.mxu0 0.0
    %3184 = vmatprep.subr.mxu0 0.0
    %3185 = vmatpush2.msra.mxu0 0.0
    %3186 = vmatprep.subr.mxu0 0.0
    %3187 = vmatpush2.msra.mxu0 0.0
    %3188 = vmatprep.subr.mxu0 0.0
    %3189 = vmatpush2.msra.mxu0 0.0
    %3190 = vmatprep.subr.mxu0 0.0
    %3191 = vmatpush2.msra.mxu0 0.0
    %3192 = vmatprep.mubr.f32.mxu0 0.0
    %v3193 = vand.u32 %v2637, 4294901760
    %3194 = vmatmul.mubr.f32.gmra.mxu0 %v3193
    %v3195 = vpop.f32.mrf.mxu0
    %v3196 = vadd.f32 %v3077, %v3195
    %v3197 = vpop.f32.mrf.mxu0
    %3198 = vmatprep.mubr.f32.mxu0 0.0
    %v3199 = vand.u32 %v2640, 4294901760
    %3200 = vmatmul.mubr.f32.gmra.mxu0 %v3199
    %v3201 = vpop.f32.mrf.mxu0
    %v3202 = vadd.f32 %v3085, %v3201
    %v3203 = vpop.f32.mrf.mxu0
    %3204 = vmatprep.mubr.f32.mxu0 0.0
    %v3205 = vand.u32 %v2643, 4294901760
    %3206 = vmatmul.mubr.f32.gmra.mxu0 %v3205
    %v3207 = vpop.f32.mrf.mxu0
    %v3208 = vadd.f32 %v3093, %v3207
    %v3209 = vpop.f32.mrf.mxu0
    %3210 = vmatprep.mubr.f32.mxu0 0.0
    %v3211 = vand.u32 %v2646, 4294901760
    %3212 = vmatmul.mubr.f32.gmra.mxu0 %v3211
    %v3213 = vpop.f32.mrf.mxu0
    %v3214 = vadd.f32 %v3101, %v3213
    %v3215 = vpop.f32.mrf.mxu0
    %3216 = vdwg.mxu0
    %3217 = vmatprep.subr.mxu0 0.0
    %3218 = vmatpush1.msra.mxu0 0.0
    %3219 = vmatprep.subr.mxu0 0.0
    %3220 = vmatpush1.msra.mxu0 0.0
    %3221 = vmatprep.subr.mxu0 0.0
    %3222 = vmatpush1.msra.mxu0 0.0
    %3223 = vmatprep.subr.mxu0 0.0
    %3224 = vmatpush1.msra.mxu0 0.0
    %3225 = vmatprep.subr.mxu0 0.0
    %3226 = vmatpush1.msra.mxu0 0.0
    %3227 = vmatprep.subr.mxu0 0.0
    %3228 = vmatpush1.msra.mxu0 0.0
    %3229 = vmatprep.subr.mxu0 0.0
    %3230 = vmatpush1.msra.mxu0 0.0
    %3231 = vmatprep.subr.mxu0 0.0
    %3232 = vmatpush1.msra.mxu0 0.0
    %3233 = vmatprep.subr.mxu0 0.0
    %v3234 = vand.u32 %v2627, 4294901760
    %3235 = vmatpush1.msra.mxu0 %v3234
    %3236 = vmatprep.subr.mxu0 0.0
    %v3237 = vand.u32 %v2626, 4294901760
    %3238 = vmatpush1.msra.mxu0 %v3237
    %3239 = vmatprep.subr.mxu0 0.0
    %v3240 = vand.u32 %v2625, 4294901760
    %3241 = vmatpush1.msra.mxu0 %v3240
    %3242 = vmatprep.subr.mxu0 0.0
    %v3243 = vand.u32 %v2624, 4294901760
    %3244 = vmatpush1.msra.mxu0 %v3243
    %3245 = vmatprep.subr.mxu0 0.0
    %v3246 = vand.u32 %v2623, 4294901760
    %3247 = vmatpush1.msra.mxu0 %v3246
    %3248 = vmatprep.subr.mxu0 0.0
    %v3249 = vand.u32 %v2622, 4294901760
    %3250 = vmatpush1.msra.mxu0 %v3249
    %3251 = vmatprep.subr.mxu0 0.0
    %v3252 = vand.u32 %v2621, 4294901760
    %3253 = vmatpush1.msra.mxu0 %v3252
    %3254 = vmatprep.subr.mxu0 0.0
    %v3255 = vand.u32 %v2620, 4294901760
    %3256 = vmatpush1.msra.mxu0 %v3255
    %3257 = vmatprep.subr.mxu0 0.0
    %3258 = vmatpush2.msra.mxu0 0.0
    %3259 = vmatprep.subr.mxu0 0.0
    %3260 = vmatpush2.msra.mxu0 0.0
    %3261 = vmatprep.subr.mxu0 0.0
    %3262 = vmatpush2.msra.mxu0 0.0
    %3263 = vmatprep.subr.mxu0 0.0
    %3264 = vmatpush2.msra.mxu0 0.0
    %3265 = vmatprep.subr.mxu0 0.0
    %3266 = vmatpush2.msra.mxu0 0.0
    %3267 = vmatprep.subr.mxu0 0.0
    %3268 = vmatpush2.msra.mxu0 0.0
    %3269 = vmatprep.subr.mxu0 0.0
    %3270 = vmatpush2.msra.mxu0 0.0
    %3271 = vmatprep.subr.mxu0 0.0
    %3272 = vmatpush2.msra.mxu0 0.0
    %3273 = vmatprep.subr.mxu0 0.0
    %3274 = vmatpush2.msra.mxu0 0.0
    %3275 = vmatprep.subr.mxu0 0.0
    %3276 = vmatpush2.msra.mxu0 0.0
    %3277 = vmatprep.subr.mxu0 0.0
    %3278 = vmatpush2.msra.mxu0 0.0
    %3279 = vmatprep.subr.mxu0 0.0
    %3280 = vmatpush2.msra.mxu0 0.0
    %3281 = vmatprep.subr.mxu0 0.0
    %3282 = vmatpush2.msra.mxu0 0.0
    %3283 = vmatprep.subr.mxu0 0.0
    %3284 = vmatpush2.msra.mxu0 0.0
    %3285 = vmatprep.subr.mxu0 0.0
    %3286 = vmatpush2.msra.mxu0 0.0
    %3287 = vmatprep.subr.mxu0 0.0
    %3288 = vmatpush2.msra.mxu0 0.0
    %3289 = vmatprep.mubr.f32.mxu0 0.0
    %v3290 = vand.u32 %v2637, 4294901760
    %3291 = vmatmul.mubr.f32.gmra.mxu0 %v3290
    %v3292 = vpop.f32.mrf.mxu0
    %v3293 = vadd.f32 %v3196, %v3292
    %v3294 = vpop.f32.mrf.mxu0
    %3295 = vmatprep.mubr.f32.mxu0 0.0
    %v3296 = vand.u32 %v2640, 4294901760
    %3297 = vmatmul.mubr.f32.gmra.mxu0 %v3296
    %v3298 = vpop.f32.mrf.mxu0
    %v3299 = vadd.f32 %v3202, %v3298
    %v3300 = vpop.f32.mrf.mxu0
    %3301 = vmatprep.mubr.f32.mxu0 0.0
    %v3302 = vand.u32 %v2643, 4294901760
    %3303 = vmatmul.mubr.f32.gmra.mxu0 %v3302
    %v3304 = vpop.f32.mrf.mxu0
    %v3305 = vadd.f32 %v3208, %v3304
    %v3306 = vpop.f32.mrf.mxu0
    %3307 = vmatprep.mubr.f32.mxu0 0.0
    %v3308 = vand.u32 %v2646, 4294901760
    %3309 = vmatmul.mubr.f32.gmra.mxu0 %v3308
    %v3310 = vpop.f32.mrf.mxu0
    %v3311 = vadd.f32 %v3214, %v3310
    %v3312 = vpop.f32.mrf.mxu0
    %3313 = vdwg.mxu0
    %v3314 = vld [vmem:[#allocation10] sm:$0x1]
    %v3315 = vld [vmem:[#allocation11] sm:$0x1]
    %v3316 = vsel %vm652, %v3293, 0.0
    %v3317 = vsel %vm652, %v3299, 0.0
    %v3318 = vadd.f32 %v3316, %v3317
    %v3319 = vsel %vm652, %v3305, 0.0
    %v3320 = vadd.f32 %v3318, %v3319
    %v3321 = vsel %vm652, %v3311, 0.0
    %v3322 = vadd.f32 %v3320, %v3321
    %v3323 = vrot.slane %v3322, 4
    %v3324 = vadd.f32 %v3322, %v3323
    %v3325 = vrot.slane %v3324, 2
    %v3326 = vadd.f32 %v3324, %v3325
    %v3327 = vrot.slane %v3326, 1
    %v3328 = vadd.f32 %v3326, %v3327
    %v3329 = vmul.f32 %v3293, %v3293
    %v3330 = vmul.f32 %v3299, %v3299
    %v3331 = vmul.f32 %v3305, %v3305
    %v3332 = vmul.f32 %v3311, %v3311
    %v3333 = vsel %vm652, %v3329, 0.0
    %v3334 = vsel %vm652, %v3330, 0.0
    %v3335 = vadd.f32 %v3333, %v3334
    %v3336 = vsel %vm652, %v3331, 0.0
    %v3337 = vadd.f32 %v3335, %v3336
    %v3338 = vsel %vm652, %v3332, 0.0
    %v3339 = vadd.f32 %v3337, %v3338
    %v3340 = vrot.slane %v3339, 4
    %v3341 = vadd.f32 %v3339, %v3340
    %v3342 = vrot.slane %v3341, 2
    %v3343 = vadd.f32 %v3341, %v3342
    %v3344 = vrot.slane %v3343, 1
    %v3345 = vadd.f32 %v3343, %v3344
    %v3346 = vsel %vm143, %v3328, 0.0
    %3347 = vadd.xlane.f32.xlu0 %v3346
    %v3348 = vpop.xlane.xlu0 %3347
    %v3349 = vsel %vm143, %v3345, 0.0
    %3350 = vadd.xlane.f32.xlu0 %v3349
    %v3351 = vpop.xlane.xlu0 %3350
    %v3352 = vmul.f32 %v3348, 0.001953125
    %v3353 = vmul.f32 %v3351, 0.001953125
    %v3354 = vmul.f32 %v3352, %v3352
    %v3355 = vsub.f32 %v3353, %v3354
    %v3356 = vadd.f32 %v3355, 1e-05
    %v3357 = vrsqrt.pop %v3356
    %v3358 = vmul.f32 %v3314, %v3357
    %v3359 = vmul.f32 %v3352, %v3358
    %v3360 = vsub.f32 %v3315, %v3359
    %3362 = vset.pattern.permute.xlu0 0
    %3363 = vperm.xlu0 %3362, %v3358
    %v3364 = vpop.permute.xlu0 %3363
    %v3366 = vlaneseq
    %v3367 = vshrl.u32 %v3366, 7
    %v3368 = vsub.s32 0, %v3367
    %v3369 = vrot.slane %v3364, %v3368
    %3371 = vset.pattern.permute.xlu0 0
    %3372 = vperm.xlu0 %3371, %v3360
    %v3373 = vpop.permute.xlu0 %3372
    %v3375 = vlaneseq
    %v3376 = vshrl.u32 %v3375, 7
    %v3377 = vsub.s32 0, %v3376
    %v3378 = vrot.slane %v3373, %v3377
    %3380 = vrot.lane.b32.xlu0 %v3328, 112
    %v3381 = vpop.permute.xlu0 %3380
    %v3383 = vsel %vm143, %v3381, 0.0
    %3384 = vadd.xlane.f32.xlu0 %v3383
    %v3385 = vpop.xlane.xlu0 %3384
    %3387 = vrot.lane.b32.xlu0 %v3345, 112
    %v3388 = vpop.permute.xlu0 %3387
    %v3390 = vsel %vm143, %v3388, 0.0
    %3391 = vadd.xlane.f32.xlu0 %v3390
    %v3392 = vpop.xlane.xlu0 %3391
    %v3393 = vmul.f32 %v3385, 0.001953125
    %v3394 = vmul.f32 %v3392, 0.001953125
    %v3395 = vmul.f32 %v3393, %v3393
    %v3396 = vsub.f32 %v3394, %v3395
    %v3397 = vadd.f32 %v3396, 1e-05
    %v3398 = vrsqrt.pop %v3397
    %v3399 = vmul.f32 %v3314, %v3398
    %v3400 = vmul.f32 %v3393, %v3399
    %v3401 = vsub.f32 %v3315, %v3400
    %3403 = vset.pattern.permute.xlu0 1
    %3404 = vperm.xlu0 %3403, %v3399
    %v3405 = vpop.permute.xlu0 %3404
    %v3407 = vlaneseq
    %v3408 = vshrl.u32 %v3407, 7
    %v3409 = vsub.s32 0, %v3408
    %v3410 = vrot.slane %v3405, %v3409
    %3412 = vset.pattern.permute.xlu0 1
    %3413 = vperm.xlu0 %3412, %v3401
    %v3414 = vpop.permute.xlu0 %3413
    %v3416 = vlaneseq
    %v3417 = vshrl.u32 %v3416, 7
    %v3418 = vsub.s32 0, %v3417
    %v3419 = vrot.slane %v3414, %v3418
    %v3420 = vsel %vm143, %v3369, %v3410
    %v3421 = vsel %vm143, %v3378, %v3419
    %v3422 = vlaneseq
    %v3423 = vshrl.u32 %v3422, 7
    %v3424 = vsub.s32 0, %v3423
    %v3425 = vrot.slane %v3420, %v3424
    %v3426 = vmul.f32 %v3293, %v3425
    %v3427 = vmul.f32 %v3299, %v3425
    %v3428 = vmul.f32 %v3305, %v3425
    %v3429 = vmul.f32 %v3311, %v3425
    %v3430 = vlaneseq
    %v3431 = vshrl.u32 %v3430, 7
    %v3432 = vsub.s32 0, %v3431
    %v3433 = vrot.slane %v3421, %v3432
    %v3434 = vadd.f32 %v3426, %v3433
    %v3435 = vadd.f32 %v3427, %v3433
    %v3436 = vadd.f32 %v3428, %v3433
    %v3437 = vadd.f32 %v3429, %v3433
    %v3438 = vmax.f32 %v3434, 0.0
    %v3439 = vmax.f32 %v3435, 0.0
    %v3440 = vmax.f32 %v3436, 0.0
    %v3441 = vmax.f32 %v3437, 0.0
    %v3442 = vld [vmem:[%s9] sm:$0xff]
    %v3443 = vld [vmem:[%s9 + $0x8] sm:$0x1]
    %v3444 = vld [vmem:[%s10] sm:$0x1]
    %v3445 = vrot.slane %v3438, 7
    %v3446 = vrot.slane %v3439, 7
    %v3447 = vrot.slane %v3440, 7
    %v3448 = vrot.slane %v3441, 7
    %v3449 = vsel %vm2327, %v3447, %v3448
    %v3450 = vsel %vm2327, %v3446, %v3447
    %v3451 = vsel %vm2327, %v3445, %v3446
    %v3452 = vsel %vm2327, %v3448, %v3445
    %v3453 = vmul.f32 %v2308, %v3452
    %v3454 = vmul.f32 %v2309, %v3451
    %v3455 = vmul.f32 %v2310, %v3450
    %v3456 = vmul.f32 %v2311, %v3449
    %v3457 = vrot.slane %v3438, 1
    %v3458 = vrot.slane %v3439, 1
    %v3459 = vrot.slane %v3440, 1
    %v3460 = vrot.slane %v3441, 1
    %v3461 = vsel %vm2340, %v3459, %v3460
    %v3462 = vsel %vm2340, %v3458, %v3459
    %v3463 = vsel %vm2340, %v3457, %v3458
    %v3464 = vsel %vm2340, %v3460, %v3457
    %v3465 = vmul.f32 %v2316, %v3463
    %v3466 = vmul.f32 %v2317, %v3462
    %v3467 = vmul.f32 %v2318, %v3461
    %v3468 = vmul.f32 %v2319, %v3464
    %v3469 = vlaneseq
    %v3470 = vshrl.u32 %v3469, 7
    %v3471 = vsub.s32 4, %v3470
    %v3472 = vrot.slane %v3442, %v3471
    %v3473 = vmul.f32 %v3472, %v3438
    %v3474 = vmul.f32 %v3472, %v3439
    %v3475 = vmul.f32 %v3472, %v3440
    %v3476 = vmul.f32 %v3472, %v3441
    %v3478 = vlaneseq
    %v3479 = vshrl.u32 %v3478, 7
    %v3480 = vsub.s32 0, %v3479
    %v3481 = vrot.slane %v3444, %v3480
    %v3483 = vadd.f32 %v3473, %v3481
    %v3484 = vadd.f32 %v3474, %v3481
    %v3485 = vadd.f32 %v3475, %v3481
    %v3486 = vadd.f32 %v3476, %v3481
    %vm3487 = vcmask 1047808
    %3488 = vrot.lane.b32.xlu0 %v3453, 32
    %v3489 = vpop.permute.xlu0 %3488
    %v3490 = vsel %vm3487, %v3489, %v3453
    %3491 = vrot.lane.b32.xlu0 %v3454, 32
    %v3492 = vpop.permute.xlu0 %3491
    %v3493 = vsel %vm3487, %v3492, %v3454
    %3494 = vrot.lane.b32.xlu0 %v3455, 32
    %v3495 = vpop.permute.xlu0 %3494
    %v3496 = vsel %vm3487, %v3495, %v3455
    %3497 = vrot.lane.b32.xlu0 %v3456, 32
    %v3498 = vpop.permute.xlu0 %3497
    %v3499 = vsel %vm3487, %v3498, %v3456
    %3500 = vrot.lane.b32.xlu0 %v3490, 32
    %v3501 = vpop.permute.xlu0 %3500
    %3502 = vrot.lane.b32.xlu0 %v3493, 32
    %v3503 = vpop.permute.xlu0 %3502
    %3504 = vrot.lane.b32.xlu0 %v3496, 32
    %v3505 = vpop.permute.xlu0 %3504
    %3506 = vrot.lane.b32.xlu0 %v3499, 32
    %v3507 = vpop.permute.xlu0 %3506
    %v3508 = vsel %vm3487, %v3501, %v3453
    %v3509 = vsel %vm3487, %v3503, %v3454
    %v3510 = vsel %vm3487, %v3505, %v3455
    %v3511 = vsel %vm3487, %v3507, %v3456
    %v3512 = vlaneseq
    %v3513 = vshrl.u32 %v3512, 7
    %v3514 = vsub.s32 0, %v3513
    %v3515 = vrot.slane %v3442, %v3514
    %3520 = vrot.lane.b32.xlu0 %v3508, 97
    %v3521 = vpop.permute.xlu0 %3520
    %3522 = vrot.lane.b32.xlu0 %v3509, 97
    %v3523 = vpop.permute.xlu0 %3522
    %3524 = vrot.lane.b32.xlu0 %v3510, 97
    %v3525 = vpop.permute.xlu0 %3524
    %3526 = vrot.lane.b32.xlu0 %v3511, 97
    %v3527 = vpop.permute.xlu0 %3526
    %v3532 = vmul.f32 %v3515, %v3521
    %v3533 = vmul.f32 %v3515, %v3523
    %v3534 = vmul.f32 %v3515, %v3525
    %v3535 = vmul.f32 %v3515, %v3527
    %v3536 = vadd.f32 %v3483, %v3532
    %v3537 = vadd.f32 %v3484, %v3533
    %v3538 = vadd.f32 %v3485, %v3534
    %v3539 = vadd.f32 %v3486, %v3535
    %v3540 = vlaneseq
    %v3541 = vshrl.u32 %v3540, 7
    %v3542 = vsub.s32 1, %v3541
    %v3543 = vrot.slane %v3442, %v3542
    %v3544 = vmul.f32 %v3543, %v3453
    %v3545 = vmul.f32 %v3543, %v3454
    %v3546 = vmul.f32 %v3543, %v3455
    %v3547 = vmul.f32 %v3543, %v3456
    %v3548 = vadd.f32 %v3536, %v3544
    %v3549 = vadd.f32 %v3537, %v3545
    %v3550 = vadd.f32 %v3538, %v3546
    %v3551 = vadd.f32 %v3539, %v3547
    %v3552 = vlaneseq
    %v3553 = vshrl.u32 %v3552, 7
    %v3554 = vsub.s32 2, %v3553
    %v3555 = vrot.slane %v3442, %v3554
    %3556 = vrot.lane.b32.xlu0 %v3508, 127
    %v3557 = vpop.permute.xlu0 %3556
    %3558 = vrot.lane.b32.xlu0 %v3509, 127
    %v3559 = vpop.permute.xlu0 %3558
    %3560 = vrot.lane.b32.xlu0 %v3510, 127
    %v3561 = vpop.permute.xlu0 %3560
    %3562 = vrot.lane.b32.xlu0 %v3511, 127
    %v3563 = vpop.permute.xlu0 %3562
    %v3568 = vmul.f32 %v3555, %v3557
    %v3569 = vmul.f32 %v3555, %v3559
    %v3570 = vmul.f32 %v3555, %v3561
    %v3571 = vmul.f32 %v3555, %v3563
    %v3572 = vadd.f32 %v3548, %v3568
    %v3573 = vadd.f32 %v3549, %v3569
    %v3574 = vadd.f32 %v3550, %v3570
    %v3575 = vadd.f32 %v3551, %v3571
    %3576 = vrot.lane.b32.xlu0 %v3438, 32
    %v3577 = vpop.permute.xlu0 %3576
    %v3578 = vsel %vm3487, %v3577, %v3438
    %3579 = vrot.lane.b32.xlu0 %v3439, 32
    %v3580 = vpop.permute.xlu0 %3579
    %v3581 = vsel %vm3487, %v3580, %v3439
    %3582 = vrot.lane.b32.xlu0 %v3440, 32
    %v3583 = vpop.permute.xlu0 %3582
    %v3584 = vsel %vm3487, %v3583, %v3440
    %3585 = vrot.lane.b32.xlu0 %v3441, 32
    %v3586 = vpop.permute.xlu0 %3585
    %v3587 = vsel %vm3487, %v3586, %v3441
    %3588 = vrot.lane.b32.xlu0 %v3578, 32
    %v3589 = vpop.permute.xlu0 %3588
    %3590 = vrot.lane.b32.xlu0 %v3581, 32
    %v3591 = vpop.permute.xlu0 %3590
    %3592 = vrot.lane.b32.xlu0 %v3584, 32
    %v3593 = vpop.permute.xlu0 %3592
    %3594 = vrot.lane.b32.xlu0 %v3587, 32
    %v3595 = vpop.permute.xlu0 %3594
    %v3596 = vsel %vm3487, %v3589, %v3438
    %v3597 = vsel %vm3487, %v3591, %v3439
    %v3598 = vsel %vm3487, %v3593, %v3440
    %v3599 = vsel %vm3487, %v3595, %v3441
    %v3600 = vlaneseq
    %v3601 = vshrl.u32 %v3600, 7
    %v3602 = vsub.s32 3, %v3601
    %v3603 = vrot.slane %v3442, %v3602
    %3608 = vrot.lane.b32.xlu0 %v3596, 97
    %v3609 = vpop.permute.xlu0 %3608
    %3610 = vrot.lane.b32.xlu0 %v3597, 97
    %v3611 = vpop.permute.xlu0 %3610
    %3612 = vrot.lane.b32.xlu0 %v3598, 97
    %v3613 = vpop.permute.xlu0 %3612
    %3614 = vrot.lane.b32.xlu0 %v3599, 97
    %v3615 = vpop.permute.xlu0 %3614
    %v3620 = vmul.f32 %v3603, %v3609
    %v3621 = vmul.f32 %v3603, %v3611
    %v3622 = vmul.f32 %v3603, %v3613
    %v3623 = vmul.f32 %v3603, %v3615
    %v3624 = vadd.f32 %v3572, %v3620
    %v3625 = vadd.f32 %v3573, %v3621
    %v3626 = vadd.f32 %v3574, %v3622
    %v3627 = vadd.f32 %v3575, %v3623
    %v3628 = vlaneseq
    %v3629 = vshrl.u32 %v3628, 7
    %v3630 = vsub.s32 5, %v3629
    %v3631 = vrot.slane %v3442, %v3630
    %3632 = vrot.lane.b32.xlu0 %v3596, 127
    %v3633 = vpop.permute.xlu0 %3632
    %3634 = vrot.lane.b32.xlu0 %v3597, 127
    %v3635 = vpop.permute.xlu0 %3634
    %3636 = vrot.lane.b32.xlu0 %v3598, 127
    %v3637 = vpop.permute.xlu0 %3636
    %3638 = vrot.lane.b32.xlu0 %v3599, 127
    %v3639 = vpop.permute.xlu0 %3638
    %v3644 = vmul.f32 %v3631, %v3633
    %v3645 = vmul.f32 %v3631, %v3635
    %v3646 = vmul.f32 %v3631, %v3637
    %v3647 = vmul.f32 %v3631, %v3639
    %v3648 = vadd.f32 %v3624, %v3644
    %v3649 = vadd.f32 %v3625, %v3645
    %v3650 = vadd.f32 %v3626, %v3646
    %v3651 = vadd.f32 %v3627, %v3647
    %3652 = vrot.lane.b32.xlu0 %v3465, 32
    %v3653 = vpop.permute.xlu0 %3652
    %v3654 = vsel %vm3487, %v3653, %v3465
    %3655 = vrot.lane.b32.xlu0 %v3466, 32
    %v3656 = vpop.permute.xlu0 %3655
    %v3657 = vsel %vm3487, %v3656, %v3466
    %3658 = vrot.lane.b32.xlu0 %v3467, 32
    %v3659 = vpop.permute.xlu0 %3658
    %v3660 = vsel %vm3487, %v3659, %v3467
    %3661 = vrot.lane.b32.xlu0 %v3468, 32
    %v3662 = vpop.permute.xlu0 %3661
    %v3663 = vsel %vm3487, %v3662, %v3468
    %3664 = vrot.lane.b32.xlu0 %v3654, 32
    %v3665 = vpop.permute.xlu0 %3664
    %3666 = vrot.lane.b32.xlu0 %v3657, 32
    %v3667 = vpop.permute.xlu0 %3666
    %3668 = vrot.lane.b32.xlu0 %v3660, 32
    %v3669 = vpop.permute.xlu0 %3668
    %3670 = vrot.lane.b32.xlu0 %v3663, 32
    %v3671 = vpop.permute.xlu0 %3670
    %v3672 = vsel %vm3487, %v3665, %v3465
    %v3673 = vsel %vm3487, %v3667, %v3466
    %v3674 = vsel %vm3487, %v3669, %v3467
    %v3675 = vsel %vm3487, %v3671, %v3468
    %v3676 = vlaneseq
    %v3677 = vshrl.u32 %v3676, 7
    %v3678 = vsub.s32 6, %v3677
    %v3679 = vrot.slane %v3442, %v3678
    %3684 = vrot.lane.b32.xlu0 %v3672, 97
    %v3685 = vpop.permute.xlu0 %3684
    %3686 = vrot.lane.b32.xlu0 %v3673, 97
    %v3687 = vpop.permute.xlu0 %3686
    %3688 = vrot.lane.b32.xlu0 %v3674, 97
    %v3689 = vpop.permute.xlu0 %3688
    %3690 = vrot.lane.b32.xlu0 %v3675, 97
    %v3691 = vpop.permute.xlu0 %3690
    %v3696 = vmul.f32 %v3679, %v3685
    %v3697 = vmul.f32 %v3679, %v3687
    %v3698 = vmul.f32 %v3679, %v3689
    %v3699 = vmul.f32 %v3679, %v3691
    %v3700 = vadd.f32 %v3648, %v3696
    %v3701 = vadd.f32 %v3649, %v3697
    %v3702 = vadd.f32 %v3650, %v3698
    %v3703 = vadd.f32 %v3651, %v3699
    %v3704 = vlaneseq
    %v3705 = vshrl.u32 %v3704, 7
    %v3706 = vsub.s32 7, %v3705
    %v3707 = vrot.slane %v3442, %v3706
    %v3708 = vmul.f32 %v3707, %v3465
    %v3709 = vmul.f32 %v3707, %v3466
    %v3710 = vmul.f32 %v3707, %v3467
    %v3711 = vmul.f32 %v3707, %v3468
    %v3712 = vadd.f32 %v3700, %v3708
    %v3713 = vadd.f32 %v3701, %v3709
    %v3714 = vadd.f32 %v3702, %v3710
    %v3715 = vadd.f32 %v3703, %v3711
    %v3716 = vlaneseq
    %v3717 = vshrl.u32 %v3716, 7
    %v3718 = vsub.s32 0, %v3717
    %v3719 = vrot.slane %v3443, %v3718
    %3720 = vrot.lane.b32.xlu0 %v3672, 127
    %v3721 = vpop.permute.xlu0 %3720
    %3722 = vrot.lane.b32.xlu0 %v3673, 127
    %v3723 = vpop.permute.xlu0 %3722
    %3724 = vrot.lane.b32.xlu0 %v3674, 127
    %v3725 = vpop.permute.xlu0 %3724
    %3726 = vrot.lane.b32.xlu0 %v3675, 127
    %v3727 = vpop.permute.xlu0 %3726
    %v3732 = vmul.f32 %v3719, %v3721
    %v3733 = vmul.f32 %v3719, %v3723
    %v3734 = vmul.f32 %v3719, %v3725
    %v3735 = vmul.f32 %v3719, %v3727
    %v3736 = vadd.f32 %v3712, %v3732
    %v3737 = vadd.f32 %v3713, %v3733
    %v3738 = vadd.f32 %v3714, %v3734
    %v3739 = vadd.f32 %v3715, %v3735
    %v3740 = vld [vmem:[%s11] sm:$0xff]
    %v3741 = vld [vmem:[%s11 + $0x8] sm:$0xff]
    %v3742 = vld [vmem:[%s11 + $0x10] sm:$0xff]
    %v3743 = vld [vmem:[%s11 + $0x18] sm:$0xff]
    %v3744 = vld [vmem:[%s12] sm:$0x1]
    %v3746 = vlaneseq
    %v3747 = vshrl.u32 %v3746, 7
    %v3748 = vsub.s32 0, %v3747
    %v3749 = vrot.slane %v3744, %v3748
    %v3752 = vsel %vm652, %v3736, 0
    %v3755 = vsel %vm652, %v3737, 0
    %v3758 = vsel %vm652, %v3738, 0
    %v3761 = vsel %vm652, %v3739, 0
    %3763 = vmatprep.subr.mxu0 0.0
    %3764 = vmatpush1.msra.mxu0 0.0
    %3765 = vmatprep.subr.mxu0 0.0
    %3766 = vmatpush1.msra.mxu0 0.0
    %3767 = vmatprep.subr.mxu0 0.0
    %3768 = vmatpush1.msra.mxu0 0.0
    %3769 = vmatprep.subr.mxu0 0.0
    %3770 = vmatpush1.msra.mxu0 0.0
    %3771 = vmatprep.subr.mxu0 0.0
    %3772 = vmatpush1.msra.mxu0 0.0
    %3773 = vmatprep.subr.mxu0 0.0
    %3774 = vmatpush1.msra.mxu0 0.0
    %3775 = vmatprep.subr.mxu0 0.0
    %3776 = vmatpush1.msra.mxu0 0.0
    %3777 = vmatprep.subr.mxu0 0.0
    %3778 = vmatpush1.msra.mxu0 0.0
    %3779 = vmatprep.subr.mxu0 0.0
    %3780 = vmatpush1.msra.mxu0 0.0
    %3781 = vmatprep.subr.mxu0 0.0
    %3782 = vmatpush1.msra.mxu0 0.0
    %3783 = vmatprep.subr.mxu0 0.0
    %3784 = vmatpush1.msra.mxu0 0.0
    %3785 = vmatprep.subr.mxu0 0.0
    %3786 = vmatpush1.msra.mxu0 0.0
    %3787 = vmatprep.subr.mxu0 0.0
    %v3788 = vand.u32 %v3743, 4294901760
    %3789 = vmatpush1.msra.mxu0 %v3788
    %3790 = vmatprep.subr.mxu0 0.0
    %v3791 = vand.u32 %v3742, 4294901760
    %3792 = vmatpush1.msra.mxu0 %v3791
    %3793 = vmatprep.subr.mxu0 0.0
    %v3794 = vand.u32 %v3741, 4294901760
    %3795 = vmatpush1.msra.mxu0 %v3794
    %3796 = vmatprep.subr.mxu0 0.0
    %v3797 = vand.u32 %v3740, 4294901760
    %3798 = vmatpush1.msra.mxu0 %v3797
    %3799 = vmatprep.subr.mxu0 0.0
    %3800 = vmatpush2.msra.mxu0 0.0
    %3801 = vmatprep.subr.mxu0 0.0
    %3802 = vmatpush2.msra.mxu0 0.0
    %3803 = vmatprep.subr.mxu0 0.0
    %3804 = vmatpush2.msra.mxu0 0.0
    %3805 = vmatprep.subr.mxu0 0.0
    %3806 = vmatpush2.msra.mxu0 0.0
    %3807 = vmatprep.subr.mxu0 0.0
    %3808 = vmatpush2.msra.mxu0 0.0
    %3809 = vmatprep.subr.mxu0 0.0
    %3810 = vmatpush2.msra.mxu0 0.0
    %3811 = vmatprep.subr.mxu0 0.0
    %3812 = vmatpush2.msra.mxu0 0.0
    %3813 = vmatprep.subr.mxu0 0.0
    %3814 = vmatpush2.msra.mxu0 0.0
    %3815 = vmatprep.subr.mxu0 0.0
    %3816 = vmatpush2.msra.mxu0 0.0
    %3817 = vmatprep.subr.mxu0 0.0
    %3818 = vmatpush2.msra.mxu0 0.0
    %3819 = vmatprep.subr.mxu0 0.0
    %3820 = vmatpush2.msra.mxu0 0.0
    %3821 = vmatprep.subr.mxu0 0.0
    %3822 = vmatpush2.msra.mxu0 0.0
    %3823 = vmatprep.subr.mxu0 0.0
    %3824 = vmatpush2.msra.mxu0 0.0
    %3825 = vmatprep.subr.mxu0 0.0
    %3826 = vmatpush2.msra.mxu0 0.0
    %3827 = vmatprep.subr.mxu0 0.0
    %3828 = vmatpush2.msra.mxu0 0.0
    %3829 = vmatprep.subr.mxu0 0.0
    %3830 = vmatpush2.msra.mxu0 0.0
    %3831 = vmatprep.mubr.f32.mxu0 0.0
    %v3832 = vand.u32 %v3752, 4294901760
    %v3833 = vsub.f32 %v3752, %v3832
    %v3834 = vand.u32 %v3833, 4294901760
    %v3835 = vsub.f32 %v3833, %v3834
    %v3836 = vand.u32 %v3835, 4294901760
    %3837 = vmatmul.mubr.f32.gmra.mxu0 %v3836
    %v3838 = vpop.f32.mrf.mxu0
    %v3839 = vadd.f32 %v3749, %v3838
    %v3840 = vpop.f32.mrf.mxu0
    %3841 = vmatprep.mubr.f32.mxu0 0.0
    %v3842 = vand.u32 %v3755, 4294901760
    %v3843 = vsub.f32 %v3755, %v3842
    %v3844 = vand.u32 %v3843, 4294901760
    %v3845 = vsub.f32 %v3843, %v3844
    %v3846 = vand.u32 %v3845, 4294901760
    %3847 = vmatmul.mubr.f32.gmra.mxu0 %v3846
    %v3848 = vpop.f32.mrf.mxu0
    %v3849 = vadd.f32 %v3749, %v3848
    %v3850 = vpop.f32.mrf.mxu0
    %3851 = vmatprep.mubr.f32.mxu0 0.0
    %v3852 = vand.u32 %v3758, 4294901760
    %v3853 = vsub.f32 %v3758, %v3852
    %v3854 = vand.u32 %v3853, 4294901760
    %v3855 = vsub.f32 %v3853, %v3854
    %v3856 = vand.u32 %v3855, 4294901760
    %3857 = vmatmul.mubr.f32.gmra.mxu0 %v3856
    %v3858 = vpop.f32.mrf.mxu0
    %v3859 = vadd.f32 %v3749, %v3858
    %v3860 = vpop.f32.mrf.mxu0
    %3861 = vmatprep.mubr.f32.mxu0 0.0
    %v3862 = vand.u32 %v3761, 4294901760
    %v3863 = vsub.f32 %v3761, %v3862
    %v3864 = vand.u32 %v3863, 4294901760
    %v3865 = vsub.f32 %v3863, %v3864
    %v3866 = vand.u32 %v3865, 4294901760
    %3867 = vmatmul.mubr.f32.gmra.mxu0 %v3866
    %v3868 = vpop.f32.mrf.mxu0
    %v3869 = vadd.f32 %v3749, %v3868
    %v3870 = vpop.f32.mrf.mxu0
    %3871 = vdwg.mxu0
    %3872 = vmatprep.subr.mxu0 0.0
    %3873 = vmatpush1.msra.mxu0 0.0
    %3874 = vmatprep.subr.mxu0 0.0
    %3875 = vmatpush1.msra.mxu0 0.0
    %3876 = vmatprep.subr.mxu0 0.0
    %3877 = vmatpush1.msra.mxu0 0.0
    %3878 = vmatprep.subr.mxu0 0.0
    %3879 = vmatpush1.msra.mxu0 0.0
    %3880 = vmatprep.subr.mxu0 0.0
    %3881 = vmatpush1.msra.mxu0 0.0
    %3882 = vmatprep.subr.mxu0 0.0
    %3883 = vmatpush1.msra.mxu0 0.0
    %3884 = vmatprep.subr.mxu0 0.0
    %3885 = vmatpush1.msra.mxu0 0.0
    %3886 = vmatprep.subr.mxu0 0.0
    %3887 = vmatpush1.msra.mxu0 0.0
    %3888 = vmatprep.subr.mxu0 0.0
    %3889 = vmatpush1.msra.mxu0 0.0
    %3890 = vmatprep.subr.mxu0 0.0
    %3891 = vmatpush1.msra.mxu0 0.0
    %3892 = vmatprep.subr.mxu0 0.0
    %3893 = vmatpush1.msra.mxu0 0.0
    %3894 = vmatprep.subr.mxu0 0.0
    %3895 = vmatpush1.msra.mxu0 0.0
    %3896 = vmatprep.subr.mxu0 0.0
    %v3897 = vand.u32 %v3743, 4294901760
    %v3898 = vsub.f32 %v3743, %v3897
    %v3899 = vand.u32 %v3898, 4294901760
    %v3900 = vsub.f32 %v3898, %v3899
    %v3901 = vand.u32 %v3900, 4294901760
    %3902 = vmatpush1.msra.mxu0 %v3901
    %3903 = vmatprep.subr.mxu0 0.0
    %v3904 = vand.u32 %v3742, 4294901760
    %v3905 = vsub.f32 %v3742, %v3904
    %v3906 = vand.u32 %v3905, 4294901760
    %v3907 = vsub.f32 %v3905, %v3906
    %v3908 = vand.u32 %v3907, 4294901760
    %3909 = vmatpush1.msra.mxu0 %v3908
    %3910 = vmatprep.subr.mxu0 0.0
    %v3911 = vand.u32 %v3741, 4294901760
    %v3912 = vsub.f32 %v3741, %v3911
    %v3913 = vand.u32 %v3912, 4294901760
    %v3914 = vsub.f32 %v3912, %v3913
    %v3915 = vand.u32 %v3914, 4294901760
    %3916 = vmatpush1.msra.mxu0 %v3915
    %3917 = vmatprep.subr.mxu0 0.0
    %v3918 = vand.u32 %v3740, 4294901760
    %v3919 = vsub.f32 %v3740, %v3918
    %v3920 = vand.u32 %v3919, 4294901760
    %v3921 = vsub.f32 %v3919, %v3920
    %v3922 = vand.u32 %v3921, 4294901760
    %3923 = vmatpush1.msra.mxu0 %v3922
    %3924 = vmatprep.subr.mxu0 0.0
    %3925 = vmatpush2.msra.mxu0 0.0
    %3926 = vmatprep.subr.mxu0 0.0
    %3927 = vmatpush2.msra.mxu0 0.0
    %3928 = vmatprep.subr.mxu0 0.0
    %3929 = vmatpush2.msra.mxu0 0.0
    %3930 = vmatprep.subr.mxu0 0.0
    %3931 = vmatpush2.msra.mxu0 0.0
    %3932 = vmatprep.subr.mxu0 0.0
    %3933 = vmatpush2.msra.mxu0 0.0
    %3934 = vmatprep.subr.mxu0 0.0
    %3935 = vmatpush2.msra.mxu0 0.0
    %3936 = vmatprep.subr.mxu0 0.0
    %3937 = vmatpush2.msra.mxu0 0.0
    %3938 = vmatprep.subr.mxu0 0.0
    %3939 = vmatpush2.msra.mxu0 0.0
    %3940 = vmatprep.subr.mxu0 0.0
    %3941 = vmatpush2.msra.mxu0 0.0
    %3942 = vmatprep.subr.mxu0 0.0
    %3943 = vmatpush2.msra.mxu0 0.0
    %3944 = vmatprep.subr.mxu0 0.0
    %3945 = vmatpush2.msra.mxu0 0.0
    %3946 = vmatprep.subr.mxu0 0.0
    %3947 = vmatpush2.msra.mxu0 0.0
    %3948 = vmatprep.subr.mxu0 0.0
    %3949 = vmatpush2.msra.mxu0 0.0
    %3950 = vmatprep.subr.mxu0 0.0
    %3951 = vmatpush2.msra.mxu0 0.0
    %3952 = vmatprep.subr.mxu0 0.0
    %3953 = vmatpush2.msra.mxu0 0.0
    %3954 = vmatprep.subr.mxu0 0.0
    %3955 = vmatpush2.msra.mxu0 0.0
    %3956 = vmatprep.mubr.f32.mxu0 0.0
    %v3957 = vand.u32 %v3752, 4294901760
    %3958 = vmatmul.mubr.f32.gmra.mxu0 %v3957
    %v3959 = vpop.f32.mrf.mxu0
    %v3960 = vadd.f32 %v3839, %v3959
    %v3961 = vpop.f32.mrf.mxu0
    %3962 = vmatprep.mubr.f32.mxu0 0.0
    %v3963 = vand.u32 %v3755, 4294901760
    %3964 = vmatmul.mubr.f32.gmra.mxu0 %v3963
    %v3965 = vpop.f32.mrf.mxu0
    %v3966 = vadd.f32 %v3849, %v3965
    %v3967 = vpop.f32.mrf.mxu0
    %3968 = vmatprep.mubr.f32.mxu0 0.0
    %v3969 = vand.u32 %v3758, 4294901760
    %3970 = vmatmul.mubr.f32.gmra.mxu0 %v3969
    %v3971 = vpop.f32.mrf.mxu0
    %v3972 = vadd.f32 %v3859, %v3971
    %v3973 = vpop.f32.mrf.mxu0
    %3974 = vmatprep.mubr.f32.mxu0 0.0
    %v3975 = vand.u32 %v3761, 4294901760
    %3976 = vmatmul.mubr.f32.gmra.mxu0 %v3975
    %v3977 = vpop.f32.mrf.mxu0
    %v3978 = vadd.f32 %v3869, %v3977
    %v3979 = vpop.f32.mrf.mxu0
    %3980 = vdwg.mxu0
    %3981 = vmatprep.subr.mxu0 0.0
    %3982 = vmatpush1.msra.mxu0 0.0
    %3983 = vmatprep.subr.mxu0 0.0
    %3984 = vmatpush1.msra.mxu0 0.0
    %3985 = vmatprep.subr.mxu0 0.0
    %3986 = vmatpush1.msra.mxu0 0.0
    %3987 = vmatprep.subr.mxu0 0.0
    %3988 = vmatpush1.msra.mxu0 0.0
    %3989 = vmatprep.subr.mxu0 0.0
    %3990 = vmatpush1.msra.mxu0 0.0
    %3991 = vmatprep.subr.mxu0 0.0
    %3992 = vmatpush1.msra.mxu0 0.0
    %3993 = vmatprep.subr.mxu0 0.0
    %3994 = vmatpush1.msra.mxu0 0.0
    %3995 = vmatprep.subr.mxu0 0.0
    %3996 = vmatpush1.msra.mxu0 0.0
    %3997 = vmatprep.subr.mxu0 0.0
    %3998 = vmatpush1.msra.mxu0 0.0
    %3999 = vmatprep.subr.mxu0 0.0
    %4000 = vmatpush1.msra.mxu0 0.0
    %4001 = vmatprep.subr.mxu0 0.0
    %4002 = vmatpush1.msra.mxu0 0.0
    %4003 = vmatprep.subr.mxu0 0.0
    %4004 = vmatpush1.msra.mxu0 0.0
    %4005 = vmatprep.subr.mxu0 0.0
    %v4006 = vand.u32 %v3743, 4294901760
    %v4007 = vsub.f32 %v3743, %v4006
    %4008 = vmatpush1.msra.mxu0 %v4007
    %4009 = vmatprep.subr.mxu0 0.0
    %v4010 = vand.u32 %v3742, 4294901760
    %v4011 = vsub.f32 %v3742, %v4010
    %4012 = vmatpush1.msra.mxu0 %v4011
    %4013 = vmatprep.subr.mxu0 0.0
    %v4014 = vand.u32 %v3741, 4294901760
    %v4015 = vsub.f32 %v3741, %v4014
    %4016 = vmatpush1.msra.mxu0 %v4015
    %4017 = vmatprep.subr.mxu0 0.0
    %v4018 = vand.u32 %v3740, 4294901760
    %v4019 = vsub.f32 %v3740, %v4018
    %4020 = vmatpush1.msra.mxu0 %v4019
    %4021 = vmatprep.subr.mxu0 0.0
    %4022 = vmatpush2.msra.mxu0 0.0
    %4023 = vmatprep.subr.mxu0 0.0
    %4024 = vmatpush2.msra.mxu0 0.0
    %4025 = vmatprep.subr.mxu0 0.0
    %4026 = vmatpush2.msra.mxu0 0.0
    %4027 = vmatprep.subr.mxu0 0.0
    %4028 = vmatpush2.msra.mxu0 0.0
    %4029 = vmatprep.subr.mxu0 0.0
    %4030 = vmatpush2.msra.mxu0 0.0
    %4031 = vmatprep.subr.mxu0 0.0
    %4032 = vmatpush2.msra.mxu0 0.0
    %4033 = vmatprep.subr.mxu0 0.0
    %4034 = vmatpush2.msra.mxu0 0.0
    %4035 = vmatprep.subr.mxu0 0.0
    %4036 = vmatpush2.msra.mxu0 0.0
    %4037 = vmatprep.subr.mxu0 0.0
    %4038 = vmatpush2.msra.mxu0 0.0
    %4039 = vmatprep.subr.mxu0 0.0
    %4040 = vmatpush2.msra.mxu0 0.0
    %4041 = vmatprep.subr.mxu0 0.0
    %4042 = vmatpush2.msra.mxu0 0.0
    %4043 = vmatprep.subr.mxu0 0.0
    %4044 = vmatpush2.msra.mxu0 0.0
    %4045 = vmatprep.subr.mxu0 0.0
    %4046 = vmatpush2.msra.mxu0 0.0
    %4047 = vmatprep.subr.mxu0 0.0
    %4048 = vmatpush2.msra.mxu0 0.0
    %4049 = vmatprep.subr.mxu0 0.0
    %4050 = vmatpush2.msra.mxu0 0.0
    %4051 = vmatprep.subr.mxu0 0.0
    %4052 = vmatpush2.msra.mxu0 0.0
    %4053 = vmatprep.mubr.f32.mxu0 0.0
    %v4054 = vand.u32 %v3752, 4294901760
    %v4055 = vsub.f32 %v3752, %v4054
    %4056 = vmatmul.mubr.f32.gmra.mxu0 %v4055
    %v4057 = vpop.f32.mrf.mxu0
    %v4058 = vadd.f32 %v3960, %v4057
    %v4059 = vpop.f32.mrf.mxu0
    %4060 = vmatprep.mubr.f32.mxu0 0.0
    %v4061 = vand.u32 %v3755, 4294901760
    %v4062 = vsub.f32 %v3755, %v4061
    %4063 = vmatmul.mubr.f32.gmra.mxu0 %v4062
    %v4064 = vpop.f32.mrf.mxu0
    %v4065 = vadd.f32 %v3966, %v4064
    %v4066 = vpop.f32.mrf.mxu0
    %4067 = vmatprep.mubr.f32.mxu0 0.0
    %v4068 = vand.u32 %v3758, 4294901760
    %v4069 = vsub.f32 %v3758, %v4068
    %4070 = vmatmul.mubr.f32.gmra.mxu0 %v4069
    %v4071 = vpop.f32.mrf.mxu0
    %v4072 = vadd.f32 %v3972, %v4071
    %v4073 = vpop.f32.mrf.mxu0
    %4074 = vmatprep.mubr.f32.mxu0 0.0
    %v4075 = vand.u32 %v3761, 4294901760
    %v4076 = vsub.f32 %v3761, %v4075
    %4077 = vmatmul.mubr.f32.gmra.mxu0 %v4076
    %v4078 = vpop.f32.mrf.mxu0
    %v4079 = vadd.f32 %v3978, %v4078
    %v4080 = vpop.f32.mrf.mxu0
    %4081 = vdwg.mxu0
    %4082 = vmatprep.subr.mxu0 0.0
    %4083 = vmatpush1.msra.mxu0 0.0
    %4084 = vmatprep.subr.mxu0 0.0
    %4085 = vmatpush1.msra.mxu0 0.0
    %4086 = vmatprep.subr.mxu0 0.0
    %4087 = vmatpush1.msra.mxu0 0.0
    %4088 = vmatprep.subr.mxu0 0.0
    %4089 = vmatpush1.msra.mxu0 0.0
    %4090 = vmatprep.subr.mxu0 0.0
    %4091 = vmatpush1.msra.mxu0 0.0
    %4092 = vmatprep.subr.mxu0 0.0
    %4093 = vmatpush1.msra.mxu0 0.0
    %4094 = vmatprep.subr.mxu0 0.0
    %4095 = vmatpush1.msra.mxu0 0.0
    %4096 = vmatprep.subr.mxu0 0.0
    %4097 = vmatpush1.msra.mxu0 0.0
    %4098 = vmatprep.subr.mxu0 0.0
    %4099 = vmatpush1.msra.mxu0 0.0
    %4100 = vmatprep.subr.mxu0 0.0
    %4101 = vmatpush1.msra.mxu0 0.0
    %4102 = vmatprep.subr.mxu0 0.0
    %4103 = vmatpush1.msra.mxu0 0.0
    %4104 = vmatprep.subr.mxu0 0.0
    %4105 = vmatpush1.msra.mxu0 0.0
    %4106 = vmatprep.subr.mxu0 0.0
    %v4107 = vand.u32 %v3743, 4294901760
    %4108 = vmatpush1.msra.mxu0 %v4107
    %4109 = vmatprep.subr.mxu0 0.0
    %v4110 = vand.u32 %v3742, 4294901760
    %4111 = vmatpush1.msra.mxu0 %v4110
    %4112 = vmatprep.subr.mxu0 0.0
    %v4113 = vand.u32 %v3741, 4294901760
    %4114 = vmatpush1.msra.mxu0 %v4113
    %4115 = vmatprep.subr.mxu0 0.0
    %v4116 = vand.u32 %v3740, 4294901760
    %4117 = vmatpush1.msra.mxu0 %v4116
    %4118 = vmatprep.subr.mxu0 0.0
    %4119 = vmatpush2.msra.mxu0 0.0
    %4120 = vmatprep.subr.mxu0 0.0
    %4121 = vmatpush2.msra.mxu0 0.0
    %4122 = vmatprep.subr.mxu0 0.0
    %4123 = vmatpush2.msra.mxu0 0.0
    %4124 = vmatprep.subr.mxu0 0.0
    %4125 = vmatpush2.msra.mxu0 0.0
    %4126 = vmatprep.subr.mxu0 0.0
    %4127 = vmatpush2.msra.mxu0 0.0
    %4128 = vmatprep.subr.mxu0 0.0
    %4129 = vmatpush2.msra.mxu0 0.0
    %4130 = vmatprep.subr.mxu0 0.0
    %4131 = vmatpush2.msra.mxu0 0.0
    %4132 = vmatprep.subr.mxu0 0.0
    %4133 = vmatpush2.msra.mxu0 0.0
    %4134 = vmatprep.subr.mxu0 0.0
    %4135 = vmatpush2.msra.mxu0 0.0
    %4136 = vmatprep.subr.mxu0 0.0
    %4137 = vmatpush2.msra.mxu0 0.0
    %4138 = vmatprep.subr.mxu0 0.0
    %4139 = vmatpush2.msra.mxu0 0.0
    %4140 = vmatprep.subr.mxu0 0.0
    %4141 = vmatpush2.msra.mxu0 0.0
    %4142 = vmatprep.subr.mxu0 0.0
    %4143 = vmatpush2.msra.mxu0 0.0
    %4144 = vmatprep.subr.mxu0 0.0
    %4145 = vmatpush2.msra.mxu0 0.0
    %4146 = vmatprep.subr.mxu0 0.0
    %4147 = vmatpush2.msra.mxu0 0.0
    %4148 = vmatprep.subr.mxu0 0.0
    %4149 = vmatpush2.msra.mxu0 0.0
    %4150 = vmatprep.mubr.f32.mxu0 0.0
    %v4151 = vand.u32 %v3752, 4294901760
    %v4152 = vsub.f32 %v3752, %v4151
    %v4153 = vand.u32 %v4152, 4294901760
    %4154 = vmatmul.mubr.f32.gmra.mxu0 %v4153
    %v4155 = vpop.f32.mrf.mxu0
    %v4156 = vadd.f32 %v4058, %v4155
    %v4157 = vpop.f32.mrf.mxu0
    %4158 = vmatprep.mubr.f32.mxu0 0.0
    %v4159 = vand.u32 %v3755, 4294901760
    %v4160 = vsub.f32 %v3755, %v4159
    %v4161 = vand.u32 %v4160, 4294901760
    %4162 = vmatmul.mubr.f32.gmra.mxu0 %v4161
    %v4163 = vpop.f32.mrf.mxu0
    %v4164 = vadd.f32 %v4065, %v4163
    %v4165 = vpop.f32.mrf.mxu0
    %4166 = vmatprep.mubr.f32.mxu0 0.0
    %v4167 = vand.u32 %v3758, 4294901760
    %v4168 = vsub.f32 %v3758, %v4167
    %v4169 = vand.u32 %v4168, 4294901760
    %4170 = vmatmul.mubr.f32.gmra.mxu0 %v4169
    %v4171 = vpop.f32.mrf.mxu0
    %v4172 = vadd.f32 %v4072, %v4171
    %v4173 = vpop.f32.mrf.mxu0
    %4174 = vmatprep.mubr.f32.mxu0 0.0
    %v4175 = vand.u32 %v3761, 4294901760
    %v4176 = vsub.f32 %v3761, %v4175
    %v4177 = vand.u32 %v4176, 4294901760
    %4178 = vmatmul.mubr.f32.gmra.mxu0 %v4177
    %v4179 = vpop.f32.mrf.mxu0
    %v4180 = vadd.f32 %v4079, %v4179
    %v4181 = vpop.f32.mrf.mxu0
    %4182 = vdwg.mxu0
    %4183 = vmatprep.subr.mxu0 0.0
    %4184 = vmatpush1.msra.mxu0 0.0
    %4185 = vmatprep.subr.mxu0 0.0
    %4186 = vmatpush1.msra.mxu0 0.0
    %4187 = vmatprep.subr.mxu0 0.0
    %4188 = vmatpush1.msra.mxu0 0.0
    %4189 = vmatprep.subr.mxu0 0.0
    %4190 = vmatpush1.msra.mxu0 0.0
    %4191 = vmatprep.subr.mxu0 0.0
    %4192 = vmatpush1.msra.mxu0 0.0
    %4193 = vmatprep.subr.mxu0 0.0
    %4194 = vmatpush1.msra.mxu0 0.0
    %4195 = vmatprep.subr.mxu0 0.0
    %4196 = vmatpush1.msra.mxu0 0.0
    %4197 = vmatprep.subr.mxu0 0.0
    %4198 = vmatpush1.msra.mxu0 0.0
    %4199 = vmatprep.subr.mxu0 0.0
    %4200 = vmatpush1.msra.mxu0 0.0
    %4201 = vmatprep.subr.mxu0 0.0
    %4202 = vmatpush1.msra.mxu0 0.0
    %4203 = vmatprep.subr.mxu0 0.0
    %4204 = vmatpush1.msra.mxu0 0.0
    %4205 = vmatprep.subr.mxu0 0.0
    %4206 = vmatpush1.msra.mxu0 0.0
    %4207 = vmatprep.subr.mxu0 0.0
    %v4208 = vand.u32 %v3743, 4294901760
    %v4209 = vsub.f32 %v3743, %v4208
    %v4210 = vand.u32 %v4209, 4294901760
    %4211 = vmatpush1.msra.mxu0 %v4210
    %4212 = vmatprep.subr.mxu0 0.0
    %v4213 = vand.u32 %v3742, 4294901760
    %v4214 = vsub.f32 %v3742, %v4213
    %v4215 = vand.u32 %v4214, 4294901760
    %4216 = vmatpush1.msra.mxu0 %v4215
    %4217 = vmatprep.subr.mxu0 0.0
    %v4218 = vand.u32 %v3741, 4294901760
    %v4219 = vsub.f32 %v3741, %v4218
    %v4220 = vand.u32 %v4219, 4294901760
    %4221 = vmatpush1.msra.mxu0 %v4220
    %4222 = vmatprep.subr.mxu0 0.0
    %v4223 = vand.u32 %v3740, 4294901760
    %v4224 = vsub.f32 %v3740, %v4223
    %v4225 = vand.u32 %v4224, 4294901760
    %4226 = vmatpush1.msra.mxu0 %v4225
    %4227 = vmatprep.subr.mxu0 0.0
    %4228 = vmatpush2.msra.mxu0 0.0
    %4229 = vmatprep.subr.mxu0 0.0
    %4230 = vmatpush2.msra.mxu0 0.0
    %4231 = vmatprep.subr.mxu0 0.0
    %4232 = vmatpush2.msra.mxu0 0.0
    %4233 = vmatprep.subr.mxu0 0.0
    %4234 = vmatpush2.msra.mxu0 0.0
    %4235 = vmatprep.subr.mxu0 0.0
    %4236 = vmatpush2.msra.mxu0 0.0
    %4237 = vmatprep.subr.mxu0 0.0
    %4238 = vmatpush2.msra.mxu0 0.0
    %4239 = vmatprep.subr.mxu0 0.0
    %4240 = vmatpush2.msra.mxu0 0.0
    %4241 = vmatprep.subr.mxu0 0.0
    %4242 = vmatpush2.msra.mxu0 0.0
    %4243 = vmatprep.subr.mxu0 0.0
    %4244 = vmatpush2.msra.mxu0 0.0
    %4245 = vmatprep.subr.mxu0 0.0
    %4246 = vmatpush2.msra.mxu0 0.0
    %4247 = vmatprep.subr.mxu0 0.0
    %4248 = vmatpush2.msra.mxu0 0.0
    %4249 = vmatprep.subr.mxu0 0.0
    %4250 = vmatpush2.msra.mxu0 0.0
    %4251 = vmatprep.subr.mxu0 0.0
    %4252 = vmatpush2.msra.mxu0 0.0
    %4253 = vmatprep.subr.mxu0 0.0
    %4254 = vmatpush2.msra.mxu0 0.0
    %4255 = vmatprep.subr.mxu0 0.0
    %4256 = vmatpush2.msra.mxu0 0.0
    %4257 = vmatprep.subr.mxu0 0.0
    %4258 = vmatpush2.msra.mxu0 0.0
    %4259 = vmatprep.mubr.f32.mxu0 0.0
    %v4260 = vand.u32 %v3752, 4294901760
    %4261 = vmatmul.mubr.f32.gmra.mxu0 %v4260
    %v4262 = vpop.f32.mrf.mxu0
    %v4263 = vadd.f32 %v4156, %v4262
    %v4264 = vpop.f32.mrf.mxu0
    %4265 = vmatprep.mubr.f32.mxu0 0.0
    %v4266 = vand.u32 %v3755, 4294901760
    %4267 = vmatmul.mubr.f32.gmra.mxu0 %v4266
    %v4268 = vpop.f32.mrf.mxu0
    %v4269 = vadd.f32 %v4164, %v4268
    %v4270 = vpop.f32.mrf.mxu0
    %4271 = vmatprep.mubr.f32.mxu0 0.0
    %v4272 = vand.u32 %v3758, 4294901760
    %4273 = vmatmul.mubr.f32.gmra.mxu0 %v4272
    %v4274 = vpop.f32.mrf.mxu0
    %v4275 = vadd.f32 %v4172, %v4274
    %v4276 = vpop.f32.mrf.mxu0
    %4277 = vmatprep.mubr.f32.mxu0 0.0
    %v4278 = vand.u32 %v3761, 4294901760
    %4279 = vmatmul.mubr.f32.gmra.mxu0 %v4278
    %v4280 = vpop.f32.mrf.mxu0
    %v4281 = vadd.f32 %v4180, %v4280
    %v4282 = vpop.f32.mrf.mxu0
    %4283 = vdwg.mxu0
    %4284 = vmatprep.subr.mxu0 0.0
    %4285 = vmatpush1.msra.mxu0 0.0
    %4286 = vmatprep.subr.mxu0 0.0
    %4287 = vmatpush1.msra.mxu0 0.0
    %4288 = vmatprep.subr.mxu0 0.0
    %4289 = vmatpush1.msra.mxu0 0.0
    %4290 = vmatprep.subr.mxu0 0.0
    %4291 = vmatpush1.msra.mxu0 0.0
    %4292 = vmatprep.subr.mxu0 0.0
    %4293 = vmatpush1.msra.mxu0 0.0
    %4294 = vmatprep.subr.mxu0 0.0
    %4295 = vmatpush1.msra.mxu0 0.0
    %4296 = vmatprep.subr.mxu0 0.0
    %4297 = vmatpush1.msra.mxu0 0.0
    %4298 = vmatprep.subr.mxu0 0.0
    %4299 = vmatpush1.msra.mxu0 0.0
    %4300 = vmatprep.subr.mxu0 0.0
    %4301 = vmatpush1.msra.mxu0 0.0
    %4302 = vmatprep.subr.mxu0 0.0
    %4303 = vmatpush1.msra.mxu0 0.0
    %4304 = vmatprep.subr.mxu0 0.0
    %4305 = vmatpush1.msra.mxu0 0.0
    %4306 = vmatprep.subr.mxu0 0.0
    %4307 = vmatpush1.msra.mxu0 0.0
    %4308 = vmatprep.subr.mxu0 0.0
    %v4309 = vand.u32 %v3743, 4294901760
    %4310 = vmatpush1.msra.mxu0 %v4309
    %4311 = vmatprep.subr.mxu0 0.0
    %v4312 = vand.u32 %v3742, 4294901760
    %4313 = vmatpush1.msra.mxu0 %v4312
    %4314 = vmatprep.subr.mxu0 0.0
    %v4315 = vand.u32 %v3741, 4294901760
    %4316 = vmatpush1.msra.mxu0 %v4315
    %4317 = vmatprep.subr.mxu0 0.0
    %v4318 = vand.u32 %v3740, 4294901760
    %4319 = vmatpush1.msra.mxu0 %v4318
    %4320 = vmatprep.subr.mxu0 0.0
    %4321 = vmatpush2.msra.mxu0 0.0
    %4322 = vmatprep.subr.mxu0 0.0
    %4323 = vmatpush2.msra.mxu0 0.0
    %4324 = vmatprep.subr.mxu0 0.0
    %4325 = vmatpush2.msra.mxu0 0.0
    %4326 = vmatprep.subr.mxu0 0.0
    %4327 = vmatpush2.msra.mxu0 0.0
    %4328 = vmatprep.subr.mxu0 0.0
    %4329 = vmatpush2.msra.mxu0 0.0
    %4330 = vmatprep.subr.mxu0 0.0
    %4331 = vmatpush2.msra.mxu0 0.0
    %4332 = vmatprep.subr.mxu0 0.0
    %4333 = vmatpush2.msra.mxu0 0.0
    %4334 = vmatprep.subr.mxu0 0.0
    %4335 = vmatpush2.msra.mxu0 0.0
    %4336 = vmatprep.subr.mxu0 0.0
    %4337 = vmatpush2.msra.mxu0 0.0
    %4338 = vmatprep.subr.mxu0 0.0
    %4339 = vmatpush2.msra.mxu0 0.0
    %4340 = vmatprep.subr.mxu0 0.0
    %4341 = vmatpush2.msra.mxu0 0.0
    %4342 = vmatprep.subr.mxu0 0.0
    %4343 = vmatpush2.msra.mxu0 0.0
    %4344 = vmatprep.subr.mxu0 0.0
    %4345 = vmatpush2.msra.mxu0 0.0
    %4346 = vmatprep.subr.mxu0 0.0
    %4347 = vmatpush2.msra.mxu0 0.0
    %4348 = vmatprep.subr.mxu0 0.0
    %4349 = vmatpush2.msra.mxu0 0.0
    %4350 = vmatprep.subr.mxu0 0.0
    %4351 = vmatpush2.msra.mxu0 0.0
    %4352 = vmatprep.mubr.f32.mxu0 0.0
    %v4353 = vand.u32 %v3752, 4294901760
    %4354 = vmatmul.mubr.f32.gmra.mxu0 %v4353
    %v4355 = vpop.f32.mrf.mxu0
    %v4356 = vadd.f32 %v4263, %v4355
    %v4357 = vpop.f32.mrf.mxu0
    %4358 = vmatprep.mubr.f32.mxu0 0.0
    %v4359 = vand.u32 %v3755, 4294901760
    %4360 = vmatmul.mubr.f32.gmra.mxu0 %v4359
    %v4361 = vpop.f32.mrf.mxu0
    %v4362 = vadd.f32 %v4269, %v4361
    %v4363 = vpop.f32.mrf.mxu0
    %4364 = vmatprep.mubr.f32.mxu0 0.0
    %v4365 = vand.u32 %v3758, 4294901760
    %4366 = vmatmul.mubr.f32.gmra.mxu0 %v4365
    %v4367 = vpop.f32.mrf.mxu0
    %v4368 = vadd.f32 %v4275, %v4367
    %v4369 = vpop.f32.mrf.mxu0
    %4370 = vmatprep.mubr.f32.mxu0 0.0
    %v4371 = vand.u32 %v3761, 4294901760
    %4372 = vmatmul.mubr.f32.gmra.mxu0 %v4371
    %v4373 = vpop.f32.mrf.mxu0
    %v4374 = vadd.f32 %v4281, %v4373
    %v4375 = vpop.f32.mrf.mxu0
    %4376 = vdwg.mxu0
    %v4377 = vld [vmem:[%s13] sm:$0x1]
    %v4378 = vld [vmem:[%s14] sm:$0x1]
    %v4379 = vadd.f32 %v4356, %v4362
    %v4380 = vadd.f32 %v4379, %v4368
    %v4381 = vadd.f32 %v4380, %v4374
    %v4382 = vrot.slane %v4381, 4
    %v4383 = vadd.f32 %v4381, %v4382
    %v4384 = vrot.slane %v4383, 2
    %v4385 = vadd.f32 %v4383, %v4384
    %v4386 = vrot.slane %v4385, 1
    %v4387 = vadd.f32 %v4385, %v4386
    %v4388 = vmul.f32 %v4356, %v4356
    %v4389 = vmul.f32 %v4362, %v4362
    %v4390 = vmul.f32 %v4368, %v4368
    %v4391 = vmul.f32 %v4374, %v4374
    %v4392 = vadd.f32 %v4388, %v4389
    %v4393 = vadd.f32 %v4392, %v4390
    %v4394 = vadd.f32 %v4393, %v4391
    %v4395 = vrot.slane %v4394, 4
    %v4396 = vadd.f32 %v4394, %v4395
    %v4397 = vrot.slane %v4396, 2
    %v4398 = vadd.f32 %v4396, %v4397
    %v4399 = vrot.slane %v4398, 1
    %v4400 = vadd.f32 %v4398, %v4399
    %v4401 = vsel %vm143, %v4387, 0.0
    %4402 = vadd.xlane.f32.xlu0 %v4401
    %v4403 = vpop.xlane.xlu0 %4402
    %v4404 = vsel %vm143, %v4400, 0.0
    %4405 = vadd.xlane.f32.xlu0 %v4404
    %v4406 = vpop.xlane.xlu0 %4405
    %v4407 = vmul.f32 %v4403, 0.001953125
    %v4408 = vmul.f32 %v4406, 0.001953125
    %v4409 = vmul.f32 %v4407, %v4407
    %v4410 = vsub.f32 %v4408, %v4409
    %v4411 = vadd.f32 %v4410, 1e-05
    %v4412 = vrsqrt.pop %v4411
    %v4413 = vmul.f32 %v4377, %v4412
    %v4414 = vmul.f32 %v4407, %v4413
    %v4415 = vsub.f32 %v4378, %v4414
    %4417 = vset.pattern.permute.xlu0 0
    %4418 = vperm.xlu0 %4417, %v4413
    %v4419 = vpop.permute.xlu0 %4418
    %v4421 = vlaneseq
    %v4422 = vshrl.u32 %v4421, 7
    %v4423 = vsub.s32 0, %v4422
    %v4424 = vrot.slane %v4419, %v4423
    %4426 = vset.pattern.permute.xlu0 0
    %4427 = vperm.xlu0 %4426, %v4415
    %v4428 = vpop.permute.xlu0 %4427
    %v4430 = vlaneseq
    %v4431 = vshrl.u32 %v4430, 7
    %v4432 = vsub.s32 0, %v4431
    %v4433 = vrot.slane %v4428, %v4432
    %4435 = vrot.lane.b32.xlu0 %v4387, 112
    %v4436 = vpop.permute.xlu0 %4435
    %v4438 = vsel %vm143, %v4436, 0.0
    %4439 = vadd.xlane.f32.xlu0 %v4438
    %v4440 = vpop.xlane.xlu0 %4439
    %4442 = vrot.lane.b32.xlu0 %v4400, 112
    %v4443 = vpop.permute.xlu0 %4442
    %v4445 = vsel %vm143, %v4443, 0.0
    %4446 = vadd.xlane.f32.xlu0 %v4445
    %v4447 = vpop.xlane.xlu0 %4446
    %v4448 = vmul.f32 %v4440, 0.001953125
    %v4449 = vmul.f32 %v4447, 0.001953125
    %v4450 = vmul.f32 %v4448, %v4448
    %v4451 = vsub.f32 %v4449, %v4450
    %v4452 = vadd.f32 %v4451, 1e-05
    %v4453 = vrsqrt.pop %v4452
    %v4454 = vmul.f32 %v4377, %v4453
    %v4455 = vmul.f32 %v4448, %v4454
    %v4456 = vsub.f32 %v4378, %v4455
    %4458 = vset.pattern.permute.xlu0 1
    %4459 = vperm.xlu0 %4458, %v4454
    %v4460 = vpop.permute.xlu0 %4459
    %v4462 = vlaneseq
    %v4463 = vshrl.u32 %v4462, 7
    %v4464 = vsub.s32 0, %v4463
    %v4465 = vrot.slane %v4460, %v4464
    %4467 = vset.pattern.permute.xlu0 1
    %4468 = vperm.xlu0 %4467, %v4456
    %v4469 = vpop.permute.xlu0 %4468
    %v4471 = vlaneseq
    %v4472 = vshrl.u32 %v4471, 7
    %v4473 = vsub.s32 0, %v4472
    %v4474 = vrot.slane %v4469, %v4473
    %4475 = vrot.lane.b32.xlu0 %v4387, 96
    %v4476 = vpop.permute.xlu0 %4475
    %v4478 = vsel %vm143, %v4476, 0.0
    %4479 = vadd.xlane.f32.xlu0 %v4478
    %v4480 = vpop.xlane.xlu0 %4479
    %4481 = vrot.lane.b32.xlu0 %v4400, 96
    %v4482 = vpop.permute.xlu0 %4481
    %v4484 = vsel %vm143, %v4482, 0.0
    %4485 = vadd.xlane.f32.xlu0 %v4484
    %v4486 = vpop.xlane.xlu0 %4485
    %v4487 = vmul.f32 %v4480, 0.001953125
    %v4488 = vmul.f32 %v4486, 0.001953125
    %v4489 = vmul.f32 %v4487, %v4487
    %v4490 = vsub.f32 %v4488, %v4489
    %v4491 = vadd.f32 %v4490, 1e-05
    %v4492 = vrsqrt.pop %v4491
    %v4493 = vmul.f32 %v4377, %v4492
    %v4494 = vmul.f32 %v4487, %v4493
    %v4495 = vsub.f32 %v4378, %v4494
    %4497 = vset.pattern.permute.xlu0 2
    %4498 = vperm.xlu0 %4497, %v4493
    %v4499 = vpop.permute.xlu0 %4498
    %v4501 = vlaneseq
    %v4502 = vshrl.u32 %v4501, 7
    %v4503 = vsub.s32 0, %v4502
    %v4504 = vrot.slane %v4499, %v4503
    %4506 = vset.pattern.permute.xlu0 2
    %4507 = vperm.xlu0 %4506, %v4495
    %v4508 = vpop.permute.xlu0 %4507
    %v4510 = vlaneseq
    %v4511 = vshrl.u32 %v4510, 7
    %v4512 = vsub.s32 0, %v4511
    %v4513 = vrot.slane %v4508, %v4512
    %4514 = vrot.lane.b32.xlu0 %v4387, 80
    %v4515 = vpop.permute.xlu0 %4514
    %v4517 = vsel %vm143, %v4515, 0.0
    %4518 = vadd.xlane.f32.xlu0 %v4517
    %v4519 = vpop.xlane.xlu0 %4518
    %4520 = vrot.lane.b32.xlu0 %v4400, 80
    %v4521 = vpop.permute.xlu0 %4520
    %v4523 = vsel %vm143, %v4521, 0.0
    %4524 = vadd.xlane.f32.xlu0 %v4523
    %v4525 = vpop.xlane.xlu0 %4524
    %v4526 = vmul.f32 %v4519, 0.001953125
    %v4527 = vmul.f32 %v4525, 0.001953125
    %v4528 = vmul.f32 %v4526, %v4526
    %v4529 = vsub.f32 %v4527, %v4528
    %v4530 = vadd.f32 %v4529, 1e-05
    %v4531 = vrsqrt.pop %v4530
    %v4532 = vmul.f32 %v4377, %v4531
    %v4533 = vmul.f32 %v4526, %v4532
    %v4534 = vsub.f32 %v4378, %v4533
    %4536 = vset.pattern.permute.xlu0 3
    %4537 = vperm.xlu0 %4536, %v4532
    %v4538 = vpop.permute.xlu0 %4537
    %v4540 = vlaneseq
    %v4541 = vshrl.u32 %v4540, 7
    %v4542 = vsub.s32 0, %v4541
    %v4543 = vrot.slane %v4538, %v4542
    %4545 = vset.pattern.permute.xlu0 3
    %4546 = vperm.xlu0 %4545, %v4534
    %v4547 = vpop.permute.xlu0 %4546
    %v4549 = vlaneseq
    %v4550 = vshrl.u32 %v4549, 7
    %v4551 = vsub.s32 0, %v4550
    %v4552 = vrot.slane %v4547, %v4551
    %4553 = vrot.lane.b32.xlu0 %v4387, 64
    %v4554 = vpop.permute.xlu0 %4553
    %v4556 = vsel %vm143, %v4554, 0.0
    %4557 = vadd.xlane.f32.xlu0 %v4556
    %v4558 = vpop.xlane.xlu0 %4557
    %4559 = vrot.lane.b32.xlu0 %v4400, 64
    %v4560 = vpop.permute.xlu0 %4559
    %v4562 = vsel %vm143, %v4560, 0.0
    %4563 = vadd.xlane.f32.xlu0 %v4562
    %v4564 = vpop.xlane.xlu0 %4563
    %v4565 = vmul.f32 %v4558, 0.001953125
    %v4566 = vmul.f32 %v4564, 0.001953125
    %v4567 = vmul.f32 %v4565, %v4565
    %v4568 = vsub.f32 %v4566, %v4567
    %v4569 = vadd.f32 %v4568, 1e-05
    %v4570 = vrsqrt.pop %v4569
    %v4571 = vmul.f32 %v4377, %v4570
    %v4572 = vmul.f32 %v4565, %v4571
    %v4573 = vsub.f32 %v4378, %v4572
    %4575 = vset.pattern.permute.xlu0 4
    %4576 = vperm.xlu0 %4575, %v4571
    %v4577 = vpop.permute.xlu0 %4576
    %v4579 = vlaneseq
    %v4580 = vshrl.u32 %v4579, 7
    %v4581 = vsub.s32 0, %v4580
    %v4582 = vrot.slane %v4577, %v4581
    %4584 = vset.pattern.permute.xlu0 4
    %4585 = vperm.xlu0 %4584, %v4573
    %v4586 = vpop.permute.xlu0 %4585
    %v4588 = vlaneseq
    %v4589 = vshrl.u32 %v4588, 7
    %v4590 = vsub.s32 0, %v4589
    %v4591 = vrot.slane %v4586, %v4590
    %4592 = vrot.lane.b32.xlu0 %v4387, 48
    %v4593 = vpop.permute.xlu0 %4592
    %v4595 = vsel %vm143, %v4593, 0.0
    %4596 = vadd.xlane.f32.xlu0 %v4595
    %v4597 = vpop.xlane.xlu0 %4596
    %4598 = vrot.lane.b32.xlu0 %v4400, 48
    %v4599 = vpop.permute.xlu0 %4598
    %v4601 = vsel %vm143, %v4599, 0.0
    %4602 = vadd.xlane.f32.xlu0 %v4601
    %v4603 = vpop.xlane.xlu0 %4602
    %v4604 = vmul.f32 %v4597, 0.001953125
    %v4605 = vmul.f32 %v4603, 0.001953125
    %v4606 = vmul.f32 %v4604, %v4604
    %v4607 = vsub.f32 %v4605, %v4606
    %v4608 = vadd.f32 %v4607, 1e-05
    %v4609 = vrsqrt.pop %v4608
    %v4610 = vmul.f32 %v4377, %v4609
    %v4611 = vmul.f32 %v4604, %v4610
    %v4612 = vsub.f32 %v4378, %v4611
    %4614 = vset.pattern.permute.xlu0 5
    %4615 = vperm.xlu0 %4614, %v4610
    %v4616 = vpop.permute.xlu0 %4615
    %v4618 = vlaneseq
    %v4619 = vshrl.u32 %v4618, 7
    %v4620 = vsub.s32 0, %v4619
    %v4621 = vrot.slane %v4616, %v4620
    %4623 = vset.pattern.permute.xlu0 5
    %4624 = vperm.xlu0 %4623, %v4612
    %v4625 = vpop.permute.xlu0 %4624
    %v4627 = vlaneseq
    %v4628 = vshrl.u32 %v4627, 7
    %v4629 = vsub.s32 0, %v4628
    %v4630 = vrot.slane %v4625, %v4629
    %4631 = vrot.lane.b32.xlu0 %v4387, 32
    %v4632 = vpop.permute.xlu0 %4631
    %v4634 = vsel %vm143, %v4632, 0.0
    %4635 = vadd.xlane.f32.xlu0 %v4634
    %v4636 = vpop.xlane.xlu0 %4635
    %4637 = vrot.lane.b32.xlu0 %v4400, 32
    %v4638 = vpop.permute.xlu0 %4637
    %v4640 = vsel %vm143, %v4638, 0.0
    %4641 = vadd.xlane.f32.xlu0 %v4640
    %v4642 = vpop.xlane.xlu0 %4641
    %v4643 = vmul.f32 %v4636, 0.001953125
    %v4644 = vmul.f32 %v4642, 0.001953125
    %v4645 = vmul.f32 %v4643, %v4643
    %v4646 = vsub.f32 %v4644, %v4645
    %v4647 = vadd.f32 %v4646, 1e-05
    %v4648 = vrsqrt.pop %v4647
    %v4649 = vmul.f32 %v4377, %v4648
    %v4650 = vmul.f32 %v4643, %v4649
    %v4651 = vsub.f32 %v4378, %v4650
    %4653 = vset.pattern.permute.xlu0 6
    %4654 = vperm.xlu0 %4653, %v4649
    %v4655 = vpop.permute.xlu0 %4654
    %v4657 = vlaneseq
    %v4658 = vshrl.u32 %v4657, 7
    %v4659 = vsub.s32 0, %v4658
    %v4660 = vrot.slane %v4655, %v4659
    %4662 = vset.pattern.permute.xlu0 6
    %4663 = vperm.xlu0 %4662, %v4651
    %v4664 = vpop.permute.xlu0 %4663
    %v4666 = vlaneseq
    %v4667 = vshrl.u32 %v4666, 7
    %v4668 = vsub.s32 0, %v4667
    %v4669 = vrot.slane %v4664, %v4668
    %4670 = vrot.lane.b32.xlu0 %v4387, 16
    %v4671 = vpop.permute.xlu0 %4670
    %v4673 = vsel %vm143, %v4671, 0.0
    %4674 = vadd.xlane.f32.xlu0 %v4673
    %v4675 = vpop.xlane.xlu0 %4674
    %4676 = vrot.lane.b32.xlu0 %v4400, 16
    %v4677 = vpop.permute.xlu0 %4676
    %v4679 = vsel %vm143, %v4677, 0.0
    %4680 = vadd.xlane.f32.xlu0 %v4679
    %v4681 = vpop.xlane.xlu0 %4680
    %v4682 = vmul.f32 %v4675, 0.001953125
    %v4683 = vmul.f32 %v4681, 0.001953125
    %v4684 = vmul.f32 %v4682, %v4682
    %v4685 = vsub.f32 %v4683, %v4684
    %v4686 = vadd.f32 %v4685, 1e-05
    %v4687 = vrsqrt.pop %v4686
    %v4688 = vmul.f32 %v4377, %v4687
    %v4689 = vmul.f32 %v4682, %v4688
    %v4690 = vsub.f32 %v4378, %v4689
    %4692 = vset.pattern.permute.xlu0 7
    %4693 = vperm.xlu0 %4692, %v4688
    %v4694 = vpop.permute.xlu0 %4693
    %v4696 = vlaneseq
    %v4697 = vshrl.u32 %v4696, 7
    %v4698 = vsub.s32 0, %v4697
    %v4699 = vrot.slane %v4694, %v4698
    %4701 = vset.pattern.permute.xlu0 7
    %4702 = vperm.xlu0 %4701, %v4690
    %v4703 = vpop.permute.xlu0 %4702
    %v4705 = vlaneseq
    %v4706 = vshrl.u32 %v4705, 7
    %v4707 = vsub.s32 0, %v4706
    %v4708 = vrot.slane %v4703, %v4707
    %v4709 = vsel %vm143, %v4424, %v4465
    %v4710 = vsel %vm652, %v4709, %v4504
    %vm4711 = vcmask 392192
    %v4712 = vsel %vm4711, %v4710, %v4543
    %v4713 = vsel %vm2635, %v4712, %v4582
    %vm4714 = vcmask 654336
    %v4715 = vsel %vm4714, %v4713, %v4621
    %vm4716 = vcmask 785408
    %v4717 = vsel %vm4716, %v4715, %v4660
    %vm4718 = vcmask 916480
    %v4719 = vsel %vm4718, %v4717, %v4699
    %v4720 = vsel %vm143, %v4433, %v4474
    %v4721 = vsel %vm652, %v4720, %v4513
    %v4722 = vsel %vm4711, %v4721, %v4552
    %v4723 = vsel %vm2635, %v4722, %v4591
    %v4724 = vsel %vm4714, %v4723, %v4630
    %v4725 = vsel %vm4716, %v4724, %v4669
    %v4726 = vsel %vm4718, %v4725, %v4708
    %v4727 = vlaneseq
    %v4728 = vshrl.u32 %v4727, 7
    %v4729 = vsub.s32 0, %v4728
    %v4730 = vrot.slane %v4719, %v4729
    %v4731 = vmul.f32 %v4356, %v4730
    %v4732 = vmul.f32 %v4362, %v4730
    %v4733 = vmul.f32 %v4368, %v4730
    %v4734 = vmul.f32 %v4374, %v4730
    %v4735 = vlaneseq
    %v4736 = vshrl.u32 %v4735, 7
    %v4737 = vsub.s32 0, %v4736
    %v4738 = vrot.slane %v4726, %v4737
    %v4739 = vadd.f32 %v4731, %v4738
    %v4740 = vadd.f32 %v4732, %v4738
    %v4741 = vadd.f32 %v4733, %v4738
    %v4742 = vadd.f32 %v4734, %v4738
    %v4743 = vmax.f32 %v4739, 0.0
    %v4744 = vmax.f32 %v4740, 0.0
    %v4745 = vmax.f32 %v4741, 0.0
    %v4746 = vmax.f32 %v4742, 0.0
    %4747 = vst [vmem:[#allocation13] sm:$0xff] %v4743
    %4748 = vst [vmem:[#allocation13 + $0x8] sm:$0xff] %v4744
    %4749 = vst [vmem:[#allocation13 + $0x10] sm:$0xff] %v4745
    %4750 = vst [vmem:[#allocation13 + $0x18] sm:$0xff] %v4746
    // Predicated region
    $region86: #{tpu_custom_call.1} parent=1 // pred_check
      _
    $region87: #{tpu_custom_call.1} parent=1 // pred_check_branch
      %4752 = sbr.rel (0) target = $region89
    $region88: #{tpu_custom_call.1} parent=1 // pred_region
      %s4754 = ssub.s32 512, 512
      %4755 = vsyncadd [#allocation4], %s4754
      %s4756 = sshll.u32 [#allocation13], 4
      %s4757 = int_to_ptr.vmem [resolvable:$true] %s4756
      %4762 = dma.vmem_to_hbm [thread:$0]  %s4757, 512, %s15, [#allocation4], 128, 128, 8
    $region89: #{tpu_custom_call.1} parent=1 // pred_fallthru
      _
    // Predicated region
    $region90: #{tpu_custom_call.1} parent=1 // pred_check
      _
    $region91: #{tpu_custom_call.1} parent=1 // pred_check_branch
      %4764 = sbr.rel (0) target = $region93
    $region92: #{tpu_custom_call.1} parent=1 // pred_region
      %4765 = dma.done [#allocation4], 512
    $region93: #{tpu_custom_call.1} parent=1 // pred_fallthru
      _
    %4766 = vsyncpa [#allocation3], 1
    %4767 = vsyncpa [#allocation6], 1
    %4768 = vsyncpa [#allocation9], 1
    %4769 = vsyncpa [#allocation12], 1
    %4770 = vsyncpa [#allocation4], 1

</llo_original>
